<compile_context>
chip_gen: v6e
topology: v6e:2x2x1
jax: 0.10.0
libtpu: 0.0.40
codegen_flags: <defaults>
</compile_context>

<pallas_src>
import functools
import math

import jax
import jax.numpy as jnp
from jax.experimental import pallas as pl
from jax.experimental.pallas import tpu as pltpu

LN_EPS = 1e-5  # PyTorch nn.LayerNorm default eps


def _layer_norm(x, gamma, beta):
    mean = jnp.mean(x, axis=-1, keepdims=True)
    var = jnp.mean((x - mean) ** 2, axis=-1, keepdims=True)
    return (x - mean) * jax.lax.rsqrt(var + LN_EPS) * gamma + beta


def transformer_layer_kernel(
    x_ref,
    g1_ref, b1_ref,              # LayerNorm before attention (f32)
    wqkv_ref,                    # (D, 3*inner) bf16, Linear weight pre-transposed, no bias
    wo_ref, bo_ref,              # attention output projection (inner, D) bf16, (1, D) f32
    g2_ref, b2_ref,              # LayerNorm before MLP (f32)
    w1_ref, bb1_ref,             # MLP up-proj   (D, 2D) bf16, (1, 2D) f32
    w2_ref, bb2_ref,             # MLP down-proj (2D, D) bf16, (1, D)  f32
    o_ref,
    *scratch,                    # (k_s, v_s) VMEM scratch when use_flash, else empty
    block_b, seq_len, nhead, dim_head, project_out, use_flash, key_tile,
):
    N = seq_len
    inner = nhead * dim_head
    rows = block_b * N
    scale = dim_head ** (-0.5)

    x = x_ref[...].astype(jnp.float32).reshape(rows, x_ref.shape[-1])   # (R, D)

    # ---- PreNorm + multi-head self-attention --------------------------------
    xn = _layer_norm(x, g1_ref[0], b1_ref[0])
    qkv = jnp.dot(xn.astype(wqkv_ref.dtype), wqkv_ref[...],
                  preferred_element_type=jnp.float32)                    # (R, 3*inner)

    def to_heads(t2d):                       # (R, inner) -> (G, N, dh), one relayout
        t = t2d.reshape(block_b, N, nhead, dim_head)
        t = jnp.transpose(t, (0, 2, 1, 3))
        return t.reshape(block_b * nhead, N, dim_head)

    # Fold 1/sqrt(dh) into q (G*N*dh mults) instead of scaling the (G,N,N) scores.
    q = to_heads(qkv[:, 0 * inner:1 * inner] * scale).astype(jnp.bfloat16)
    k = to_heads(qkv[:, 1 * inner:2 * inner]).astype(jnp.bfloat16)
    v = to_heads(qkv[:, 2 * inner:3 * inner]).astype(jnp.bfloat16)
    G = block_b * nhead

    if use_flash:
        # Key-tiled online softmax: live score block is (G, N, key_tile) f32.
        k_s, v_s = scratch
        k_s[...] = k
        v_s[...] = v
        nk = N // key_tile

        m0 = jnp.full((G, N, 1), -1e30, jnp.float32)
        l0 = jnp.zeros((G, N, 1), jnp.float32)
        a0 = jnp.zeros((G, N, dim_head), jnp.float32)

        def body(i, carry):
            m, l, acc = carry
            start = pl.multiple_of(i * key_tile, key_tile)
            kc = k_s[:, pl.ds(start, key_tile), :]
            vc = v_s[:, pl.ds(start, key_tile), :]
            s = jnp.einsum('gnd,gkd->gnk', q, kc,
                           preferred_element_type=jnp.float32)
            m_new = jnp.maximum(m, jnp.max(s, axis=-1, keepdims=True))
            p = jnp.exp(s - m_new)
            alpha = jnp.exp(m - m_new)
            l_new = alpha * l + jnp.sum(p, axis=-1, keepdims=True)
            acc_new = alpha * acc + jnp.einsum(
                'gnk,gkd->gnd', p.astype(jnp.bfloat16), vc,
                preferred_element_type=jnp.float32)
            return m_new, l_new, acc_new

        _, l, acc = jax.lax.fori_loop(0, nk, body, (m0, l0, a0))
        ctx = acc * pl.reciprocal(l, approx=True)                        # (G, N, dh)
    else:
        s = jnp.einsum('gnd,gmd->gnm', q, k,
                       preferred_element_type=jnp.float32)               # (G, N, N)
        p = jnp.exp(s - jnp.max(s, axis=-1, keepdims=True))
        attn = p * pl.reciprocal(jnp.sum(p, axis=-1, keepdims=True), approx=True)
        ctx = jnp.einsum('gnm,gmd->gnd', attn.astype(jnp.bfloat16), v,
                         preferred_element_type=jnp.float32)

    ctx2d = jnp.transpose(ctx.reshape(block_b, nhead, N, dim_head),
                          (0, 2, 1, 3)).reshape(rows, inner)

    if project_out:
        attn_out = jnp.dot(ctx2d.astype(wo_ref.dtype), wo_ref[...],
                           preferred_element_type=jnp.float32) + bo_ref[0]
    else:
        attn_out = ctx2d                                   # to_out == nn.Identity()
    x = x + attn_out                                       # residual

    # ---- PreNorm + feed-forward (exact-erf GELU, matches nn.GELU() default) --
    xn2 = _layer_norm(x, g2_ref[0], b2_ref[0])
    h1 = jnp.dot(xn2.astype(w1_ref.dtype), w1_ref[...],
                 preferred_element_type=jnp.float32) + bb1_ref[0]
    h1 = 0.5 * h1 * (1.0 + jax.lax.erf(h1 * (1.0 / math.sqrt(2.0))))
    h2 = jnp.dot(h1.astype(w2_ref.dtype), w2_ref[...],
                 preferred_element_type=jnp.float32) + bb2_ref[0]

    o_ref[...] = (x + h2).reshape(o_ref.shape).astype(o_ref.dtype)       # residual


def _physical_vmem_bytes():
    try:
        return int(pltpu.get_tpu_info().vmem_capacity_bytes)
    except Exception:
        return 64 * 1024 * 1024        # conservative: v7x per-core VMEM


def _pick_block_b(B, N, nhead, flash):
    """Largest divisor of B giving >=~512 rows/step without oversized score blocks."""
    best = 1
    for d in range(1, B + 1):
        if B % d:
            continue
        if d * N > max(512, N):
            continue
        if (not flash) and d > 1 and d * nhead * N * N * 4 > (8 << 20):
            continue
        best = d
    return best


def _vmem_limit(*, block_b, N, D, inner, mlp_dim, nhead, dim_head, flash,
                key_tile, single_buffer_weights):
    wbuf = 1 if single_buffer_weights else 2
    weight_bytes = 2 * (D * 3 * inner + inner * D + D * mlp_dim + mlp_dim * D)   # bf16
    param_bytes = 4 * (6 * D + mlp_dim)                                          # f32 LN/bias
    io_bytes = 2 * 2 * 4 * block_b * N * D                 # x + out blocks, double-buffered
    G = block_b * nhead
    score_cols = key_tile if flash else N
    interm = 4 * block_b * N * (4 * D + 4 * inner + 2 * mlp_dim)                 # f32 acts
    interm += 4 * G * N * (dim_head + 2) + 2 * 4 * G * N * score_cols            # acc/m/l + s/p
    interm += 3 * 2 * G * N * dim_head                                           # bf16 q/k/v
    scratch = (2 * 2 * G * N * dim_head) if flash else 0
    need = wbuf * (weight_bytes + param_bytes) + io_bytes + interm + scratch
    limit = int(1.5 * need) + (8 << 20)
    phys = _physical_vmem_bytes()
    return max(32 << 20, min(limit, int(0.9 * phys)))


def transformer_layer(x, p, *, nhead, dim_head, project_out):
    B, N, D = x.shape
    inner = nhead * dim_head
    mlp_dim = p["w1"].shape[1]

    def run(single_buffer_weights, flash):
        key_tile = (256 if N % 256 == 0 else 128) if flash else 0
        block_b = _pick_block_b(B, N, nhead, flash)
        grid_b = B // block_b

        kernel = functools.partial(
            transformer_layer_kernel,
            block_b=block_b, seq_len=N, nhead=nhead, dim_head=dim_head,
            project_out=project_out, use_flash=flash, key_tile=key_tile)

        if single_buffer_weights:
            # Weight / param blocks have a constant index_map -> single-buffer them.
            def const_spec(shape):
                return pl.BlockSpec(shape, lambda b: (0,) * len(shape),
                                    pipeline_mode=pl.Buffered(1))
        else:
            def const_spec(shape):
                return pl.BlockSpec(shape, lambda b: (0,) * len(shape))

        in_specs = [
            pl.BlockSpec((block_b, N, D), lambda b: (b, 0, 0)),          # x
            const_spec(p["g1"].shape), const_spec(p["b1"].shape),
            const_spec(p["wqkv"].shape),
            const_spec(p["wo"].shape), const_spec(p["bo"].shape),
            const_spec(p["g2"].shape), const_spec(p["b2"].shape),
            const_spec(p["w1"].shape), const_spec(p["bb1"].shape),
            const_spec(p["w2"].shape), const_spec(p["bb2"].shape),
        ]
        out_specs = pl.BlockSpec((block_b, N, D), lambda b: (b, 0, 0))

        scratch_shapes = []
        if flash:
            G = block_b * nhead
            scratch_shapes = [pltpu.VMEM((G, N, dim_head), jnp.bfloat16),
                              pltpu.VMEM((G, N, dim_head), jnp.bfloat16)]

        vmem_limit = _vmem_limit(
            block_b=block_b, N=N, D=D, inner=inner, mlp_dim=mlp_dim, nhead=nhead,
            dim_head=dim_head, flash=flash, key_tile=key_tile,
            single_buffer_weights=single_buffer_weights)

        return pl.pallas_call(
            kernel,
            out_shape=jax.ShapeDtypeStruct((B, N, D), x.dtype),
            grid=(grid_b,),
            in_specs=in_specs,
            out_specs=out_specs,
            scratch_shapes=scratch_shapes,
            compiler_params=pltpu.CompilerParams(
                dimension_semantics=("parallel",),
                vmem_limit_bytes=vmem_limit),
        )(
            x,
            p["g1"], p["b1"],
            p["wqkv"],
            p["wo"], p["bo"],
            p["g2"], p["b2"],
            p["w1"], p["bb1"],
            p["w2"], p["bb2"],
        )

    want_flash = (N >= 512) and (N % 128 == 0)
    single_buffer_ok = hasattr(pl, "Buffered")
    attempts = []
    for fl in ([True, False] if want_flash else [False]):
        if single_buffer_ok:
            attempts.append((True, fl))
        attempts.append((False, fl))

    last_err = None
    for sb, fl in attempts:
        try:
            return run(sb, fl)
        except Exception as err:   # portability fallback across JAX/Mosaic versions
            last_err = err
    raise last_err


def transformer_forward(x, layer_params, *, nhead):
    D = x.shape[-1]
    dim_head = D // nhead
    # Matches the PyTorch module: project_out is False only when nhead == 1 and
    # dim_head == embed_dim (then Attention.to_out == nn.Identity()).
    project_out = not (nhead == 1 and dim_head == D)
    for p in layer_params:
        x = transformer_layer(x, p, nhead=nhead, dim_head=dim_head,
                              project_out=project_out)
    return x


def transformer_reference(x, layer_params, *, nhead):
    """Pure-JAX f32 reference (same params; matmul weights cast bf16 -> f32)."""
    B, N, D = x.shape
    dim_head = D // nhead
    inner = dim_head * nhead
    project_out = not (nhead == 1 and dim_head == D)

    def ln(t, g, b):
        mu = jnp.mean(t, axis=-1, keepdims=True)
        var = jnp.mean((t - mu) ** 2, axis=-1, keepdims=True)
        return (t - mu) / jnp.sqrt(var + LN_EPS) * g + b

    for p in layer_params:
        xn = ln(x, p["g1"][0], p["b1"][0])
        qkv = xn @ p["wqkv"].astype(jnp.float32)
        q, k, v = jnp.split(qkv, 3, axis=-1)

        def heads(t):
            return t.reshape(B, N, nhead, dim_head).transpose(0, 2, 1, 3)

        q, k, v = heads(q), heads(k), heads(v)
        dots = jnp.einsum('bhnd,bhmd->bhnm', q, k) * (dim_head ** -0.5)
        attn = jax.nn.softmax(dots, axis=-1)
        ctx = jnp.einsum('bhnm,bhmd->bhnd', attn, v)
        ctx = ctx.transpose(0, 2, 1, 3).reshape(B, N, inner)
        if project_out:
            x = x + ctx @ p["wo"].astype(jnp.float32) + p["bo"][0]
        else:
            x = x + ctx

        xn2 = ln(x, p["g2"][0], p["b2"][0])
        h1 = xn2 @ p["w1"].astype(jnp.float32) + p["bb1"][0]
        h1 = 0.5 * h1 * (1.0 + jax.lax.erf(h1 / jnp.sqrt(2.0)))
        x = x + h1 @ p["w2"].astype(jnp.float32) + p["bb2"][0]
    return x


def init_params(key, num_layers, embed_dim, nhead):
    """Deterministic synthetic parameters.

    Linear weights are stored pre-transposed (in_features, out_features) and in
    bfloat16 (streamed from HBM, f32 accumulation on the MXU). LayerNorm params
    and biases stay f32.
    """
    D = embed_dim
    dim_head = D // nhead
    inner = dim_head * nhead
    mlp_dim = D * 2
    layers = []
    for l in range(num_layers):
        ks = jax.random.split(jax.random.fold_in(key, l), 6)
        s = 0.05
        layers.append({
            "g1": jnp.ones((1, D), jnp.float32),
            "b1": jnp.zeros((1, D), jnp.float32),
            "g2": jnp.ones((1, D), jnp.float32),
            "b2": jnp.zeros((1, D), jnp.float32),
            "wqkv": (s * jax.random.normal(ks[0], (D, 3 * inner), jnp.float32)
                     ).astype(jnp.bfloat16),
            "wo":   (s * jax.random.normal(ks[1], (inner, D), jnp.float32)
                     ).astype(jnp.bfloat16),
            "bo":   s * jax.random.normal(ks[2], (1, D), jnp.float32),
            "w1":  (s * jax.random.normal(ks[3], (D, mlp_dim), jnp.float32)
                    ).astype(jnp.bfloat16),
            "bb1": s * jax.random.normal(ks[4], (1, mlp_dim), jnp.float32),
            "w2":  (s * jax.random.normal(ks[5], (mlp_dim, D), jnp.float32)
                    ).astype(jnp.bfloat16),
            "bb2": jnp.zeros((1, D), jnp.float32),
        })
    return layers


if __name__ == "__main__":
    key = jax.random.PRNGKey(0)

    # --- small config (dense-attention path) --------------------------------
    B, N, D, nhead, num_layers = 2, 8, 32, 4, 2
    kx, kp = jax.random.split(key)
    x = jax.random.normal(kx, (B, N, D), jnp.float32)
    params = init_params(kp, num_layers, D, nhead)

    out = jax.block_until_ready(transformer_forward(x, params, nhead=nhead))
    assert out.shape == (B, N, D)
    ref = jax.block_until_ready(transformer_reference(x, params, nhead=nhead))
    assert jnp.allclose(out, ref, atol=2e-2, rtol=2e-2), "small-config mismatch"

    # --- longer sequence to exercise the key-tiled online-softmax path ------
    B2, N2, D2, nhead2 = 2, 512, 64, 4
    kx2, kp2 = jax.random.split(jax.random.fold_in(key, 1))
    x2 = jax.random.normal(kx2, (B2, N2, D2), jnp.float32)
    params2 = init_params(kp2, 1, D2, nhead2)

    out2 = jax.block_until_ready(transformer_forward(x2, params2, nhead=nhead2))
    ref2 = jax.block_until_ready(transformer_reference(x2, params2, nhead=nhead2))
    assert jnp.allclose(out2, ref2, atol=3e-2, rtol=3e-2), "long-seq mismatch"

    print("KERNEL_OK")
</pallas_src>

<mosaic_0001>
module attributes {stable_mosaic.version = 11 : i64} {
  func.func @transformer_layer_kernel(%arg0: i32, %arg1: memref<2x8x32xf32, #tpu.memory_space<vmem>>, %arg2: memref<1x32xf32, #tpu.memory_space<vmem>>, %arg3: memref<1x32xf32, #tpu.memory_space<vmem>>, %arg4: memref<32x96xbf16, #tpu.memory_space<vmem>>, %arg5: memref<32x32xbf16, #tpu.memory_space<vmem>>, %arg6: memref<1x32xf32, #tpu.memory_space<vmem>>, %arg7: memref<1x32xf32, #tpu.memory_space<vmem>>, %arg8: memref<1x32xf32, #tpu.memory_space<vmem>>, %arg9: memref<32x64xbf16, #tpu.memory_space<vmem>>, %arg10: memref<1x64xf32, #tpu.memory_space<vmem>>, %arg11: memref<64x32xbf16, #tpu.memory_space<vmem>>, %arg12: memref<1x32xf32, #tpu.memory_space<vmem>>, %arg13: memref<2x8x32xf32, #tpu.memory_space<vmem>>) attributes {dimension_semantics = [#tpu.dimension_semantics<parallel>], iteration_bounds = array<i64: 1>, scalar_prefetch = 0 : i64, scratch_operands = 0 : i64, tpu.core_type = #tpu.core_type<tc>, window_params = [{transform_indices = @transform_0, window_bounds = array<i64: 2, 8, 32>}, {pipeline_mode = #tpu.pipeline_mode<synchronous>, transform_indices = @transform_1, window_bounds = array<i64: 1, 32>}, {pipeline_mode = #tpu.pipeline_mode<synchronous>, transform_indices = @transform_2, window_bounds = array<i64: 1, 32>}, {pipeline_mode = #tpu.pipeline_mode<synchronous>, transform_indices = @transform_3, window_bounds = array<i64: 32, 96>}, {pipeline_mode = #tpu.pipeline_mode<synchronous>, transform_indices = @transform_4, window_bounds = array<i64: 32, 32>}, {pipeline_mode = #tpu.pipeline_mode<synchronous>, transform_indices = @transform_5, window_bounds = array<i64: 1, 32>}, {pipeline_mode = #tpu.pipeline_mode<synchronous>, transform_indices = @transform_6, window_bounds = array<i64: 1, 32>}, {pipeline_mode = #tpu.pipeline_mode<synchronous>, transform_indices = @transform_7, window_bounds = array<i64: 1, 32>}, {pipeline_mode = #tpu.pipeline_mode<synchronous>, transform_indices = @transform_8, window_bounds = array<i64: 32, 64>}, {pipeline_mode = #tpu.pipeline_mode<synchronous>, transform_indices = @transform_9, window_bounds = array<i64: 1, 64>}, {pipeline_mode = #tpu.pipeline_mode<synchronous>, transform_indices = @transform_10, window_bounds = array<i64: 64, 32>}, {pipeline_mode = #tpu.pipeline_mode<synchronous>, transform_indices = @transform_11, window_bounds = array<i64: 1, 32>}, {transform_indices = @transform_12, window_bounds = array<i64: 2, 8, 32>}]} {
    %c0 = arith.constant 0 : index
    %c0_0 = arith.constant 0 : index
    %c0_1 = arith.constant 0 : index
    %0 = vector.load %arg1[%c0, %c0_0, %c0_1] : memref<2x8x32xf32, #tpu.memory_space<vmem>>, vector<2x8x32xf32>
    %1 = vector.shape_cast %0 : vector<2x8x32xf32> to vector<16x32xf32>
    %c0_2 = arith.constant 0 : index
    %c0_3 = arith.constant 0 : index
    %2 = vector.load %arg2[%c0_2, %c0_3] : memref<1x32xf32, #tpu.memory_space<vmem>>, vector<1x32xf32>
    %3 = vector.shape_cast %2 : vector<1x32xf32> to vector<32xf32>
    %c0_4 = arith.constant 0 : index
    %c0_5 = arith.constant 0 : index
    %4 = vector.load %arg3[%c0_4, %c0_5] : memref<1x32xf32, #tpu.memory_space<vmem>>, vector<1x32xf32>
    %5 = vector.shape_cast %4 : vector<1x32xf32> to vector<32xf32>
    %cst = arith.constant dense<0.000000e+00> : vector<16xf32>
    %6 = vector.multi_reduction <add>, %1, %cst [1] : vector<16x32xf32> to vector<16xf32>
    %7 = vector.shape_cast %6 : vector<16xf32> to vector<16x1xf32>
    %cst_6 = arith.constant 3.200000e+01 : f32
    %8 = vector.broadcast %cst_6 : f32 to vector<16x1xf32>
    %9 = arith.divf %7, %8 : vector<16x1xf32>
    %10 = vector.broadcast %9 : vector<16x1xf32> to vector<16x32xf32>
    %11 = arith.subf %1, %10 : vector<16x32xf32>
    %12 = arith.mulf %11, %11 : vector<16x32xf32>
    %cst_7 = arith.constant dense<0.000000e+00> : vector<16xf32>
    %13 = vector.multi_reduction <add>, %12, %cst_7 [1] : vector<16x32xf32> to vector<16xf32>
    %14 = vector.shape_cast %13 : vector<16xf32> to vector<16x1xf32>
    %cst_8 = arith.constant 3.200000e+01 : f32
    %15 = vector.broadcast %cst_8 : f32 to vector<16x1xf32>
    %16 = arith.divf %14, %15 : vector<16x1xf32>
    %17 = vector.broadcast %9 : vector<16x1xf32> to vector<16x32xf32>
    %18 = arith.subf %1, %17 : vector<16x32xf32>
    %cst_9 = arith.constant 9.99999974E-6 : f32
    %19 = vector.broadcast %cst_9 : f32 to vector<16x1xf32>
    %20 = arith.addf %16, %19 : vector<16x1xf32>
    %21 = math.rsqrt %20 : vector<16x1xf32>
    %22 = vector.broadcast %21 : vector<16x1xf32> to vector<16x32xf32>
    %23 = arith.mulf %18, %22 : vector<16x32xf32>
    %24 = vector.shape_cast %3 : vector<32xf32> to vector<1x32xf32>
    %25 = vector.broadcast %24 : vector<1x32xf32> to vector<16x32xf32>
    %26 = arith.mulf %23, %25 : vector<16x32xf32>
    %27 = vector.shape_cast %5 : vector<32xf32> to vector<1x32xf32>
    %28 = vector.broadcast %27 : vector<1x32xf32> to vector<16x32xf32>
    %29 = arith.addf %26, %28 : vector<16x32xf32>
    %30 = arith.truncf %29 : vector<16x32xf32> to vector<16x32xbf16>
    %c0_10 = arith.constant 0 : index
    %c0_11 = arith.constant 0 : index
    %31 = vector.load %arg4[%c0_10, %c0_11] : memref<32x96xbf16, #tpu.memory_space<vmem>>, vector<32x96xbf16>
    %cst_12 = arith.constant dense<0.000000e+00> : vector<16x96xf32>
    %32 = tpu.matmul %30, %31, %cst_12 {dimension_numbers = #tpu.dot_dimension_numbers<[1], [0], [0], [1], [0, 0, 1, 1], [], []>} : vector<16x32xbf16>, vector<32x96xbf16>, vector<16x96xf32> -> vector<16x96xf32>
    %33 = vector.extract_strided_slice %32 {offsets = [0, 0], sizes = [16, 32], strides = [1, 1]} : vector<16x96xf32> to vector<16x32xf32>
    %cst_13 = arith.constant 0.353553385 : f32
    %34 = vector.broadcast %cst_13 : f32 to vector<16x32xf32>
    %35 = arith.mulf %33, %34 : vector<16x32xf32>
    %36 = vector.shape_cast %35 : vector<16x32xf32> to vector<2x8x4x8xf32>
    %37 = tpu.transpose %36, [0, 2, 1, 3] : vector<2x8x4x8xf32> -> vector<2x4x8x8xf32>
    %38 = vector.shape_cast %37 : vector<2x4x8x8xf32> to vector<8x8x8xf32>
    %39 = arith.truncf %38 : vector<8x8x8xf32> to vector<8x8x8xbf16>
    %40 = vector.extract_strided_slice %32 {offsets = [0, 32], sizes = [16, 32], strides = [1, 1]} : vector<16x96xf32> to vector<16x32xf32>
    %41 = vector.shape_cast %40 : vector<16x32xf32> to vector<2x8x4x8xf32>
    %42 = tpu.transpose %41, [0, 2, 1, 3] : vector<2x8x4x8xf32> -> vector<2x4x8x8xf32>
    %43 = vector.shape_cast %42 : vector<2x4x8x8xf32> to vector<8x8x8xf32>
    %44 = arith.truncf %43 : vector<8x8x8xf32> to vector<8x8x8xbf16>
    %45 = vector.extract_strided_slice %32 {offsets = [0, 64], sizes = [16, 32], strides = [1, 1]} : vector<16x96xf32> to vector<16x32xf32>
    %46 = vector.shape_cast %45 : vector<16x32xf32> to vector<2x8x4x8xf32>
    %47 = tpu.transpose %46, [0, 2, 1, 3] : vector<2x8x4x8xf32> -> vector<2x4x8x8xf32>
    %48 = vector.shape_cast %47 : vector<2x4x8x8xf32> to vector<8x8x8xf32>
    %49 = arith.truncf %48 : vector<8x8x8xf32> to vector<8x8x8xbf16>
    "tpu.trace_start"() <{level = 10 : i32, message = "gnd,gmd->gnm"}> : () -> ()
    %cst_14 = arith.constant dense<0.000000e+00> : vector<8x8x8xf32>
    %50 = tpu.matmul %39, %44, %cst_14 {dimension_numbers = #tpu.dot_dimension_numbers<[2], [2], [1], [1], [0, 0, 0, 1, 1, 1], [0], [0]>} : vector<8x8x8xbf16>, vector<8x8x8xbf16>, vector<8x8x8xf32> -> vector<8x8x8xf32>
    "tpu.trace_stop"() : () -> ()
    %cst_15 = arith.constant dense<0xFF800000> : vector<8x8xf32>
    %51 = vector.multi_reduction <maximumf>, %50, %cst_15 [2] : vector<8x8x8xf32> to vector<8x8xf32>
    %52 = vector.shape_cast %51 : vector<8x8xf32> to vector<8x8x1xf32>
    %53 = vector.broadcast %52 : vector<8x8x1xf32> to vector<8x8x8xf32>
    %54 = arith.subf %50, %53 : vector<8x8x8xf32>
    %55 = math.exp %54 : vector<8x8x8xf32>
    %cst_16 = arith.constant dense<0.000000e+00> : vector<8x8xf32>
    %56 = vector.multi_reduction <add>, %55, %cst_16 [2] : vector<8x8x8xf32> to vector<8x8xf32>
    %57 = vector.shape_cast %56 : vector<8x8xf32> to vector<8x8x1xf32>
    %58 = tpu.reciprocal %57 {approx = true} : vector<8x8x1xf32> -> vector<8x8x1xf32>
    %59 = vector.broadcast %58 : vector<8x8x1xf32> to vector<8x8x8xf32>
    %60 = arith.mulf %55, %59 : vector<8x8x8xf32>
    %61 = arith.truncf %60 : vector<8x8x8xf32> to vector<8x8x8xbf16>
    "tpu.trace_start"() <{level = 10 : i32, message = "gnm,gmd->gnd"}> : () -> ()
    %cst_17 = arith.constant dense<0.000000e+00> : vector<8x8x8xf32>
    %62 = tpu.matmul %61, %49, %cst_17 {dimension_numbers = #tpu.dot_dimension_numbers<[2], [1], [1], [2], [0, 0, 0, 1, 1, 2], [0], [0]>} : vector<8x8x8xbf16>, vector<8x8x8xbf16>, vector<8x8x8xf32> -> vector<8x8x8xf32>
    "tpu.trace_stop"() : () -> ()
    %63 = vector.shape_cast %62 : vector<8x8x8xf32> to vector<2x4x8x8xf32>
    %64 = tpu.transpose %63, [0, 2, 1, 3] : vector<2x4x8x8xf32> -> vector<2x8x4x8xf32>
    %65 = vector.shape_cast %64 : vector<2x8x4x8xf32> to vector<16x32xf32>
    %66 = arith.truncf %65 : vector<16x32xf32> to vector<16x32xbf16>
    %c0_18 = arith.constant 0 : index
    %c0_19 = arith.constant 0 : index
    %67 = vector.load %arg5[%c0_18, %c0_19] : memref<32x32xbf16, #tpu.memory_space<vmem>>, vector<32x32xbf16>
    %cst_20 = arith.constant dense<0.000000e+00> : vector<16x32xf32>
    %68 = tpu.matmul %66, %67, %cst_20 {dimension_numbers = #tpu.dot_dimension_numbers<[1], [0], [0], [1], [0, 0, 1, 1], [], []>} : vector<16x32xbf16>, vector<32x32xbf16>, vector<16x32xf32> -> vector<16x32xf32>
    %c0_21 = arith.constant 0 : index
    %c0_22 = arith.constant 0 : index
    %69 = vector.load %arg6[%c0_21, %c0_22] : memref<1x32xf32, #tpu.memory_space<vmem>>, vector<1x32xf32>
    %70 = vector.shape_cast %69 : vector<1x32xf32> to vector<32xf32>
    %71 = vector.shape_cast %70 : vector<32xf32> to vector<1x32xf32>
    %72 = vector.broadcast %71 : vector<1x32xf32> to vector<16x32xf32>
    %73 = arith.addf %68, %72 : vector<16x32xf32>
    %74 = arith.addf %1, %73 : vector<16x32xf32>
    %c0_23 = arith.constant 0 : index
    %c0_24 = arith.constant 0 : index
    %75 = vector.load %arg7[%c0_23, %c0_24] : memref<1x32xf32, #tpu.memory_space<vmem>>, vector<1x32xf32>
    %76 = vector.shape_cast %75 : vector<1x32xf32> to vector<32xf32>
    %c0_25 = arith.constant 0 : index
    %c0_26 = arith.constant 0 : index
    %77 = vector.load %arg8[%c0_25, %c0_26] : memref<1x32xf32, #tpu.memory_space<vmem>>, vector<1x32xf32>
    %78 = vector.shape_cast %77 : vector<1x32xf32> to vector<32xf32>
    %cst_27 = arith.constant dense<0.000000e+00> : vector<16xf32>
    %79 = vector.multi_reduction <add>, %74, %cst_27 [1] : vector<16x32xf32> to vector<16xf32>
    %80 = vector.shape_cast %79 : vector<16xf32> to vector<16x1xf32>
    %cst_28 = arith.constant 3.200000e+01 : f32
    %81 = vector.broadcast %cst_28 : f32 to vector<16x1xf32>
    %82 = arith.divf %80, %81 : vector<16x1xf32>
    %83 = vector.broadcast %82 : vector<16x1xf32> to vector<16x32xf32>
    %84 = arith.subf %74, %83 : vector<16x32xf32>
    %85 = arith.mulf %84, %84 : vector<16x32xf32>
    %cst_29 = arith.constant dense<0.000000e+00> : vector<16xf32>
    %86 = vector.multi_reduction <add>, %85, %cst_29 [1] : vector<16x32xf32> to vector<16xf32>
    %87 = vector.shape_cast %86 : vector<16xf32> to vector<16x1xf32>
    %cst_30 = arith.constant 3.200000e+01 : f32
    %88 = vector.broadcast %cst_30 : f32 to vector<16x1xf32>
    %89 = arith.divf %87, %88 : vector<16x1xf32>
    %90 = vector.broadcast %82 : vector<16x1xf32> to vector<16x32xf32>
    %91 = arith.subf %74, %90 : vector<16x32xf32>
    %cst_31 = arith.constant 9.99999974E-6 : f32
    %92 = vector.broadcast %cst_31 : f32 to vector<16x1xf32>
    %93 = arith.addf %89, %92 : vector<16x1xf32>
    %94 = math.rsqrt %93 : vector<16x1xf32>
    %95 = vector.broadcast %94 : vector<16x1xf32> to vector<16x32xf32>
    %96 = arith.mulf %91, %95 : vector<16x32xf32>
    %97 = vector.shape_cast %76 : vector<32xf32> to vector<1x32xf32>
    %98 = vector.broadcast %97 : vector<1x32xf32> to vector<16x32xf32>
    %99 = arith.mulf %96, %98 : vector<16x32xf32>
    %100 = vector.shape_cast %78 : vector<32xf32> to vector<1x32xf32>
    %101 = vector.broadcast %100 : vector<1x32xf32> to vector<16x32xf32>
    %102 = arith.addf %99, %101 : vector<16x32xf32>
    %103 = arith.truncf %102 : vector<16x32xf32> to vector<16x32xbf16>
    %c0_32 = arith.constant 0 : index
    %c0_33 = arith.constant 0 : index
    %104 = vector.load %arg9[%c0_32, %c0_33] : memref<32x64xbf16, #tpu.memory_space<vmem>>, vector<32x64xbf16>
    %cst_34 = arith.constant dense<0.000000e+00> : vector<16x64xf32>
    %105 = tpu.matmul %103, %104, %cst_34 {dimension_numbers = #tpu.dot_dimension_numbers<[1], [0], [0], [1], [0, 0, 1, 1], [], []>} : vector<16x32xbf16>, vector<32x64xbf16>, vector<16x64xf32> -> vector<16x64xf32>
    %c0_35 = arith.constant 0 : index
    %c0_36 = arith.constant 0 : index
    %106 = vector.load %arg10[%c0_35, %c0_36] : memref<1x64xf32, #tpu.memory_space<vmem>>, vector<1x64xf32>
    %107 = vector.shape_cast %106 : vector<1x64xf32> to vector<64xf32>
    %108 = vector.shape_cast %107 : vector<64xf32> to vector<1x64xf32>
    %109 = vector.broadcast %108 : vector<1x64xf32> to vector<16x64xf32>
    %110 = arith.addf %105, %109 : vector<16x64xf32>
    %cst_37 = arith.constant 5.000000e-01 : f32
    %111 = vector.broadcast %cst_37 : f32 to vector<16x64xf32>
    %112 = arith.mulf %111, %110 : vector<16x64xf32>
    %cst_38 = arith.constant 0.707106769 : f32
    %113 = vector.broadcast %cst_38 : f32 to vector<16x64xf32>
    %114 = arith.mulf %110, %113 : vector<16x64xf32>
    %115 = math.erf %114 : vector<16x64xf32>
    %cst_39 = arith.constant 1.000000e+00 : f32
    %116 = vector.broadcast %cst_39 : f32 to vector<16x64xf32>
    %117 = arith.addf %116, %115 : vector<16x64xf32>
    %118 = arith.mulf %112, %117 : vector<16x64xf32>
    %119 = arith.truncf %118 : vector<16x64xf32> to vector<16x64xbf16>
    %c0_40 = arith.constant 0 : index
    %c0_41 = arith.constant 0 : index
    %120 = vector.load %arg11[%c0_40, %c0_41] : memref<64x32xbf16, #tpu.memory_space<vmem>>, vector<64x32xbf16>
    %cst_42 = arith.constant dense<0.000000e+00> : vector<16x32xf32>
    %121 = tpu.matmul %119, %120, %cst_42 {dimension_numbers = #tpu.dot_dimension_numbers<[1], [0], [0], [1], [0, 0, 1, 1], [], []>} : vector<16x64xbf16>, vector<64x32xbf16>, vector<16x32xf32> -> vector<16x32xf32>
    %c0_43 = arith.constant 0 : index
    %c0_44 = arith.constant 0 : index
    %122 = vector.load %arg12[%c0_43, %c0_44] : memref<1x32xf32, #tpu.memory_space<vmem>>, vector<1x32xf32>
    %123 = vector.shape_cast %122 : vector<1x32xf32> to vector<32xf32>
    %124 = vector.shape_cast %123 : vector<32xf32> to vector<1x32xf32>
    %125 = vector.broadcast %124 : vector<1x32xf32> to vector<16x32xf32>
    %126 = arith.addf %121, %125 : vector<16x32xf32>
    %127 = arith.addf %74, %126 : vector<16x32xf32>
    %128 = vector.shape_cast %127 : vector<16x32xf32> to vector<2x8x32xf32>
    %c0_45 = arith.constant 0 : index
    %c0_46 = arith.constant 0 : index
    %c0_47 = arith.constant 0 : index
    %129 = vector.load %arg13[%c0_45, %c0_46, %c0_47] : memref<2x8x32xf32, #tpu.memory_space<vmem>>, vector<2x8x32xf32>
    tpu.vector_store %arg13[%c0_45, %c0_46, %c0_47], %128 {strides = array<i32>} : memref<2x8x32xf32, #tpu.memory_space<vmem>>, vector<2x8x32xf32>,
    return
  }
  func.func @transform_0(%arg0: i32) -> (i32, i32, i32) {
    %c0_i32 = arith.constant 0 : i32
    %c0_i32_0 = arith.constant 0 : i32
    %c0_i32_1 = arith.constant 0 : i32
    return %arg0, %c0_i32, %c0_i32_0 : i32, i32, i32
  }
  func.func @transform_1(%arg0: i32) -> (i32, i32) {
    %c0_i32 = arith.constant 0 : i32
    %c0_i32_0 = arith.constant 0 : i32
    %c0_i32_1 = arith.constant 0 : i32
    return %c0_i32, %c0_i32_0 : i32, i32
  }
  func.func @transform_2(%arg0: i32) -> (i32, i32) {
    %c0_i32 = arith.constant 0 : i32
    %c0_i32_0 = arith.constant 0 : i32
    %c0_i32_1 = arith.constant 0 : i32
    return %c0_i32, %c0_i32_0 : i32, i32
  }
  func.func @transform_3(%arg0: i32) -> (i32, i32) {
    %c0_i32 = arith.constant 0 : i32
    %c0_i32_0 = arith.constant 0 : i32
    %c0_i32_1 = arith.constant 0 : i32
    return %c0_i32, %c0_i32_0 : i32, i32
  }
  func.func @transform_4(%arg0: i32) -> (i32, i32) {
    %c0_i32 = arith.constant 0 : i32
    %c0_i32_0 = arith.constant 0 : i32
    %c0_i32_1 = arith.constant 0 : i32
    return %c0_i32, %c0_i32_0 : i32, i32
  }
  func.func @transform_5(%arg0: i32) -> (i32, i32) {
    %c0_i32 = arith.constant 0 : i32
    %c0_i32_0 = arith.constant 0 : i32
    %c0_i32_1 = arith.constant 0 : i32
    return %c0_i32, %c0_i32_0 : i32, i32
  }
  func.func @transform_6(%arg0: i32) -> (i32, i32) {
    %c0_i32 = arith.constant 0 : i32
    %c0_i32_0 = arith.constant 0 : i32
    %c0_i32_1 = arith.constant 0 : i32
    return %c0_i32, %c0_i32_0 : i32, i32
  }
  func.func @transform_7(%arg0: i32) -> (i32, i32) {
    %c0_i32 = arith.constant 0 : i32
    %c0_i32_0 = arith.constant 0 : i32
    %c0_i32_1 = arith.constant 0 : i32
    return %c0_i32, %c0_i32_0 : i32, i32
  }
  func.func @transform_8(%arg0: i32) -> (i32, i32) {
    %c0_i32 = arith.constant 0 : i32
    %c0_i32_0 = arith.constant 0 : i32
    %c0_i32_1 = arith.constant 0 : i32
    return %c0_i32, %c0_i32_0 : i32, i32
  }
  func.func @transform_9(%arg0: i32) -> (i32, i32) {
    %c0_i32 = arith.constant 0 : i32
    %c0_i32_0 = arith.constant 0 : i32
    %c0_i32_1 = arith.constant 0 : i32
    return %c0_i32, %c0_i32_0 : i32, i32
  }
  func.func @transform_10(%arg0: i32) -> (i32, i32) {
    %c0_i32 = arith.constant 0 : i32
    %c0_i32_0 = arith.constant 0 : i32
    %c0_i32_1 = arith.constant 0 : i32
    return %c0_i32, %c0_i32_0 : i32, i32
  }
  func.func @transform_11(%arg0: i32) -> (i32, i32) {
    %c0_i32 = arith.constant 0 : i32
    %c0_i32_0 = arith.constant 0 : i32
    %c0_i32_1 = arith.constant 0 : i32
    return %c0_i32, %c0_i32_0 : i32, i32
  }
  func.func @transform_12(%arg0: i32) -> (i32, i32, i32) {
    %c0_i32 = arith.constant 0 : i32
    %c0_i32_0 = arith.constant 0 : i32
    %c0_i32_1 = arith.constant 0 : i32
    return %arg0, %c0_i32, %c0_i32_0 : i32, i32, i32
  }
}

module attributes {stable_mosaic.version = 11 : i64} {
  func.func @transformer_layer_kernel(%arg0: i32, %arg1: memref<2x8x32xf32, #tpu.memory_space<vmem>>, %arg2: memref<1x32xf32, #tpu.memory_space<vmem>>, %arg3: memref<1x32xf32, #tpu.memory_space<vmem>>, %arg4: memref<32x96xbf16, #tpu.memory_space<vmem>>, %arg5: memref<32x32xbf16, #tpu.memory_space<vmem>>, %arg6: memref<1x32xf32, #tpu.memory_space<vmem>>, %arg7: memref<1x32xf32, #tpu.memory_space<vmem>>, %arg8: memref<1x32xf32, #tpu.memory_space<vmem>>, %arg9: memref<32x64xbf16, #tpu.memory_space<vmem>>, %arg10: memref<1x64xf32, #tpu.memory_space<vmem>>, %arg11: memref<64x32xbf16, #tpu.memory_space<vmem>>, %arg12: memref<1x32xf32, #tpu.memory_space<vmem>>, %arg13: memref<2x8x32xf32, #tpu.memory_space<vmem>>) attributes {dimension_semantics = [#tpu.dimension_semantics<parallel>], iteration_bounds = array<i64: 1>, scalar_prefetch = 0 : i64, scratch_operands = 0 : i64, tpu.core_type = #tpu.core_type<tc>, window_params = [{transform_indices = @transform_0, window_bounds = array<i64: 2, 8, 32>}, {pipeline_mode = #tpu.pipeline_mode<synchronous>, transform_indices = @transform_1, window_bounds = array<i64: 1, 32>}, {pipeline_mode = #tpu.pipeline_mode<synchronous>, transform_indices = @transform_2, window_bounds = array<i64: 1, 32>}, {pipeline_mode = #tpu.pipeline_mode<synchronous>, transform_indices = @transform_3, window_bounds = array<i64: 32, 96>}, {pipeline_mode = #tpu.pipeline_mode<synchronous>, transform_indices = @transform_4, window_bounds = array<i64: 32, 32>}, {pipeline_mode = #tpu.pipeline_mode<synchronous>, transform_indices = @transform_5, window_bounds = array<i64: 1, 32>}, {pipeline_mode = #tpu.pipeline_mode<synchronous>, transform_indices = @transform_6, window_bounds = array<i64: 1, 32>}, {pipeline_mode = #tpu.pipeline_mode<synchronous>, transform_indices = @transform_7, window_bounds = array<i64: 1, 32>}, {pipeline_mode = #tpu.pipeline_mode<synchronous>, transform_indices = @transform_8, window_bounds = array<i64: 32, 64>}, {pipeline_mode = #tpu.pipeline_mode<synchronous>, transform_indices = @transform_9, window_bounds = array<i64: 1, 64>}, {pipeline_mode = #tpu.pipeline_mode<synchronous>, transform_indices = @transform_10, window_bounds = array<i64: 64, 32>}, {pipeline_mode = #tpu.pipeline_mode<synchronous>, transform_indices = @transform_11, window_bounds = array<i64: 1, 32>}, {transform_indices = @transform_12, window_bounds = array<i64: 2, 8, 32>}]} {
    %c0 = arith.constant 0 : index
    %c0_0 = arith.constant 0 : index
    %c0_1 = arith.constant 0 : index
    %0 = vector.load %arg1[%c0, %c0_0, %c0_1] : memref<2x8x32xf32, #tpu.memory_space<vmem>>, vector<2x8x32xf32>
    %1 = vector.shape_cast %0 : vector<2x8x32xf32> to vector<16x32xf32>
    %c0_2 = arith.constant 0 : index
    %c0_3 = arith.constant 0 : index
    %2 = vector.load %arg2[%c0_2, %c0_3] : memref<1x32xf32, #tpu.memory_space<vmem>>, vector<1x32xf32>
    %3 = vector.shape_cast %2 : vector<1x32xf32> to vector<32xf32>
    %c0_4 = arith.constant 0 : index
    %c0_5 = arith.constant 0 : index
    %4 = vector.load %arg3[%c0_4, %c0_5] : memref<1x32xf32, #tpu.memory_space<vmem>>, vector<1x32xf32>
    %5 = vector.shape_cast %4 : vector<1x32xf32> to vector<32xf32>
    %cst = arith.constant dense<0.000000e+00> : vector<16xf32>
    %6 = vector.multi_reduction <add>, %1, %cst [1] : vector<16x32xf32> to vector<16xf32>
    %7 = vector.shape_cast %6 : vector<16xf32> to vector<16x1xf32>
    %cst_6 = arith.constant 3.200000e+01 : f32
    %8 = vector.broadcast %cst_6 : f32 to vector<16x1xf32>
    %9 = arith.divf %7, %8 : vector<16x1xf32>
    %10 = vector.broadcast %9 : vector<16x1xf32> to vector<16x32xf32>
    %11 = arith.subf %1, %10 : vector<16x32xf32>
    %12 = arith.mulf %11, %11 : vector<16x32xf32>
    %cst_7 = arith.constant dense<0.000000e+00> : vector<16xf32>
    %13 = vector.multi_reduction <add>, %12, %cst_7 [1] : vector<16x32xf32> to vector<16xf32>
    %14 = vector.shape_cast %13 : vector<16xf32> to vector<16x1xf32>
    %cst_8 = arith.constant 3.200000e+01 : f32
    %15 = vector.broadcast %cst_8 : f32 to vector<16x1xf32>
    %16 = arith.divf %14, %15 : vector<16x1xf32>
    %17 = vector.broadcast %9 : vector<16x1xf32> to vector<16x32xf32>
    %18 = arith.subf %1, %17 : vector<16x32xf32>
    %cst_9 = arith.constant 9.99999974E-6 : f32
    %19 = vector.broadcast %cst_9 : f32 to vector<16x1xf32>
    %20 = arith.addf %16, %19 : vector<16x1xf32>
    %21 = math.rsqrt %20 : vector<16x1xf32>
    %22 = vector.broadcast %21 : vector<16x1xf32> to vector<16x32xf32>
    %23 = arith.mulf %18, %22 : vector<16x32xf32>
    %24 = vector.shape_cast %3 : vector<32xf32> to vector<1x32xf32>
    %25 = vector.broadcast %24 : vector<1x32xf32> to vector<16x32xf32>
    %26 = arith.mulf %23, %25 : vector<16x32xf32>
    %27 = vector.shape_cast %5 : vector<32xf32> to vector<1x32xf32>
    %28 = vector.broadcast %27 : vector<1x32xf32> to vector<16x32xf32>
    %29 = arith.addf %26, %28 : vector<16x32xf32>
    %30 = arith.truncf %29 : vector<16x32xf32> to vector<16x32xbf16>
    %c0_10 = arith.constant 0 : index
    %c0_11 = arith.constant 0 : index
    %31 = vector.load %arg4[%c0_10, %c0_11] : memref<32x96xbf16, #tpu.memory_space<vmem>>, vector<32x96xbf16>
    %cst_12 = arith.constant dense<0.000000e+00> : vector<16x96xf32>
    %32 = tpu.matmul %30, %31, %cst_12 {dimension_numbers = #tpu.dot_dimension_numbers<[1], [0], [0], [1], [0, 0, 1, 1], [], []>} : vector<16x32xbf16>, vector<32x96xbf16>, vector<16x96xf32> -> vector<16x96xf32>
    %33 = vector.extract_strided_slice %32 {offsets = [0, 0], sizes = [16, 32], strides = [1, 1]} : vector<16x96xf32> to vector<16x32xf32>
    %cst_13 = arith.constant 0.353553385 : f32
    %34 = vector.broadcast %cst_13 : f32 to vector<16x32xf32>
    %35 = arith.mulf %33, %34 : vector<16x32xf32>
    %36 = vector.shape_cast %35 : vector<16x32xf32> to vector<2x8x4x8xf32>
    %37 = tpu.transpose %36, [0, 2, 1, 3] : vector<2x8x4x8xf32> -> vector<2x4x8x8xf32>
    %38 = vector.shape_cast %37 : vector<2x4x8x8xf32> to vector<8x8x8xf32>
    %39 = arith.truncf %38 : vector<8x8x8xf32> to vector<8x8x8xbf16>
    %40 = vector.extract_strided_slice %32 {offsets = [0, 32], sizes = [16, 32], strides = [1, 1]} : vector<16x96xf32> to vector<16x32xf32>
    %41 = vector.shape_cast %40 : vector<16x32xf32> to vector<2x8x4x8xf32>
    %42 = tpu.transpose %41, [0, 2, 1, 3] : vector<2x8x4x8xf32> -> vector<2x4x8x8xf32>
    %43 = vector.shape_cast %42 : vector<2x4x8x8xf32> to vector<8x8x8xf32>
    %44 = arith.truncf %43 : vector<8x8x8xf32> to vector<8x8x8xbf16>
    %45 = vector.extract_strided_slice %32 {offsets = [0, 64], sizes = [16, 32], strides = [1, 1]} : vector<16x96xf32> to vector<16x32xf32>
    %46 = vector.shape_cast %45 : vector<16x32xf32> to vector<2x8x4x8xf32>
    %47 = tpu.transpose %46, [0, 2, 1, 3] : vector<2x8x4x8xf32> -> vector<2x4x8x8xf32>
    %48 = vector.shape_cast %47 : vector<2x4x8x8xf32> to vector<8x8x8xf32>
    %49 = arith.truncf %48 : vector<8x8x8xf32> to vector<8x8x8xbf16>
    "tpu.trace_start"() <{level = 10 : i32, message = "gnd,gmd->gnm"}> : () -> ()
    %cst_14 = arith.constant dense<0.000000e+00> : vector<8x8x8xf32>
    %50 = tpu.matmul %39, %44, %cst_14 {dimension_numbers = #tpu.dot_dimension_numbers<[2], [2], [1], [1], [0, 0, 0, 1, 1, 1], [0], [0]>} : vector<8x8x8xbf16>, vector<8x8x8xbf16>, vector<8x8x8xf32> -> vector<8x8x8xf32>
    "tpu.trace_stop"() : () -> ()
    %cst_15 = arith.constant dense<0xFF800000> : vector<8x8xf32>
    %51 = vector.multi_reduction <maximumf>, %50, %cst_15 [2] : vector<8x8x8xf32> to vector<8x8xf32>
    %52 = vector.shape_cast %51 : vector<8x8xf32> to vector<8x8x1xf32>
    %53 = vector.broadcast %52 : vector<8x8x1xf32> to vector<8x8x8xf32>
    %54 = arith.subf %50, %53 : vector<8x8x8xf32>
    %55 = math.exp %54 : vector<8x8x8xf32>
    %cst_16 = arith.constant dense<0.000000e+00> : vector<8x8xf32>
    %56 = vector.multi_reduction <add>, %55, %cst_16 [2] : vector<8x8x8xf32> to vector<8x8xf32>
    %57 = vector.shape_cast %56 : vector<8x8xf32> to vector<8x8x1xf32>
    %58 = tpu.reciprocal %57 {approx = true} : vector<8x8x1xf32> -> vector<8x8x1xf32>
    %59 = vector.broadcast %58 : vector<8x8x1xf32> to vector<8x8x8xf32>
    %60 = arith.mulf %55, %59 : vector<8x8x8xf32>
    %61 = arith.truncf %60 : vector<8x8x8xf32> to vector<8x8x8xbf16>
    "tpu.trace_start"() <{level = 10 : i32, message = "gnm,gmd->gnd"}> : () -> ()
    %cst_17 = arith.constant dense<0.000000e+00> : vector<8x8x8xf32>
    %62 = tpu.matmul %61, %49, %cst_17 {dimension_numbers = #tpu.dot_dimension_numbers<[2], [1], [1], [2], [0, 0, 0, 1, 1, 2], [0], [0]>} : vector<8x8x8xbf16>, vector<8x8x8xbf16>, vector<8x8x8xf32> -> vector<8x8x8xf32>
    "tpu.trace_stop"() : () -> ()
    %63 = vector.shape_cast %62 : vector<8x8x8xf32> to vector<2x4x8x8xf32>
    %64 = tpu.transpose %63, [0, 2, 1, 3] : vector<2x4x8x8xf32> -> vector<2x8x4x8xf32>
    %65 = vector.shape_cast %64 : vector<2x8x4x8xf32> to vector<16x32xf32>
    %66 = arith.truncf %65 : vector<16x32xf32> to vector<16x32xbf16>
    %c0_18 = arith.constant 0 : index
    %c0_19 = arith.constant 0 : index
    %67 = vector.load %arg5[%c0_18, %c0_19] : memref<32x32xbf16, #tpu.memory_space<vmem>>, vector<32x32xbf16>
    %cst_20 = arith.constant dense<0.000000e+00> : vector<16x32xf32>
    %68 = tpu.matmul %66, %67, %cst_20 {dimension_numbers = #tpu.dot_dimension_numbers<[1], [0], [0], [1], [0, 0, 1, 1], [], []>} : vector<16x32xbf16>, vector<32x32xbf16>, vector<16x32xf32> -> vector<16x32xf32>
    %c0_21 = arith.constant 0 : index
    %c0_22 = arith.constant 0 : index
    %69 = vector.load %arg6[%c0_21, %c0_22] : memref<1x32xf32, #tpu.memory_space<vmem>>, vector<1x32xf32>
    %70 = vector.shape_cast %69 : vector<1x32xf32> to vector<32xf32>
    %71 = vector.shape_cast %70 : vector<32xf32> to vector<1x32xf32>
    %72 = vector.broadcast %71 : vector<1x32xf32> to vector<16x32xf32>
    %73 = arith.addf %68, %72 : vector<16x32xf32>
    %74 = arith.addf %1, %73 : vector<16x32xf32>
    %c0_23 = arith.constant 0 : index
    %c0_24 = arith.constant 0 : index
    %75 = vector.load %arg7[%c0_23, %c0_24] : memref<1x32xf32, #tpu.memory_space<vmem>>, vector<1x32xf32>
    %76 = vector.shape_cast %75 : vector<1x32xf32> to vector<32xf32>
    %c0_25 = arith.constant 0 : index
    %c0_26 = arith.constant 0 : index
    %77 = vector.load %arg8[%c0_25, %c0_26] : memref<1x32xf32, #tpu.memory_space<vmem>>, vector<1x32xf32>
    %78 = vector.shape_cast %77 : vector<1x32xf32> to vector<32xf32>
    %cst_27 = arith.constant dense<0.000000e+00> : vector<16xf32>
    %79 = vector.multi_reduction <add>, %74, %cst_27 [1] : vector<16x32xf32> to vector<16xf32>
    %80 = vector.shape_cast %79 : vector<16xf32> to vector<16x1xf32>
    %cst_28 = arith.constant 3.200000e+01 : f32
    %81 = vector.broadcast %cst_28 : f32 to vector<16x1xf32>
    %82 = arith.divf %80, %81 : vector<16x1xf32>
    %83 = vector.broadcast %82 : vector<16x1xf32> to vector<16x32xf32>
    %84 = arith.subf %74, %83 : vector<16x32xf32>
    %85 = arith.mulf %84, %84 : vector<16x32xf32>
    %cst_29 = arith.constant dense<0.000000e+00> : vector<16xf32>
    %86 = vector.multi_reduction <add>, %85, %cst_29 [1] : vector<16x32xf32> to vector<16xf32>
    %87 = vector.shape_cast %86 : vector<16xf32> to vector<16x1xf32>
    %cst_30 = arith.constant 3.200000e+01 : f32
    %88 = vector.broadcast %cst_30 : f32 to vector<16x1xf32>
    %89 = arith.divf %87, %88 : vector<16x1xf32>
    %90 = vector.broadcast %82 : vector<16x1xf32> to vector<16x32xf32>
    %91 = arith.subf %74, %90 : vector<16x32xf32>
    %cst_31 = arith.constant 9.99999974E-6 : f32
    %92 = vector.broadcast %cst_31 : f32 to vector<16x1xf32>
    %93 = arith.addf %89, %92 : vector<16x1xf32>
    %94 = math.rsqrt %93 : vector<16x1xf32>
    %95 = vector.broadcast %94 : vector<16x1xf32> to vector<16x32xf32>
    %96 = arith.mulf %91, %95 : vector<16x32xf32>
    %97 = vector.shape_cast %76 : vector<32xf32> to vector<1x32xf32>
    %98 = vector.broadcast %97 : vector<1x32xf32> to vector<16x32xf32>
    %99 = arith.mulf %96, %98 : vector<16x32xf32>
    %100 = vector.shape_cast %78 : vector<32xf32> to vector<1x32xf32>
    %101 = vector.broadcast %100 : vector<1x32xf32> to vector<16x32xf32>
    %102 = arith.addf %99, %101 : vector<16x32xf32>
    %103 = arith.truncf %102 : vector<16x32xf32> to vector<16x32xbf16>
    %c0_32 = arith.constant 0 : index
    %c0_33 = arith.constant 0 : index
    %104 = vector.load %arg9[%c0_32, %c0_33] : memref<32x64xbf16, #tpu.memory_space<vmem>>, vector<32x64xbf16>
    %cst_34 = arith.constant dense<0.000000e+00> : vector<16x64xf32>
    %105 = tpu.matmul %103, %104, %cst_34 {dimension_numbers = #tpu.dot_dimension_numbers<[1], [0], [0], [1], [0, 0, 1, 1], [], []>} : vector<16x32xbf16>, vector<32x64xbf16>, vector<16x64xf32> -> vector<16x64xf32>
    %c0_35 = arith.constant 0 : index
    %c0_36 = arith.constant 0 : index
    %106 = vector.load %arg10[%c0_35, %c0_36] : memref<1x64xf32, #tpu.memory_space<vmem>>, vector<1x64xf32>
    %107 = vector.shape_cast %106 : vector<1x64xf32> to vector<64xf32>
    %108 = vector.shape_cast %107 : vector<64xf32> to vector<1x64xf32>
    %109 = vector.broadcast %108 : vector<1x64xf32> to vector<16x64xf32>
    %110 = arith.addf %105, %109 : vector<16x64xf32>
    %cst_37 = arith.constant 5.000000e-01 : f32
    %111 = vector.broadcast %cst_37 : f32 to vector<16x64xf32>
    %112 = arith.mulf %111, %110 : vector<16x64xf32>
    %cst_38 = arith.constant 0.707106769 : f32
    %113 = vector.broadcast %cst_38 : f32 to vector<16x64xf32>
    %114 = arith.mulf %110, %113 : vector<16x64xf32>
    %115 = math.erf %114 : vector<16x64xf32>
    %cst_39 = arith.constant 1.000000e+00 : f32
    %116 = vector.broadcast %cst_39 : f32 to vector<16x64xf32>
    %117 = arith.addf %116, %115 : vector<16x64xf32>
    %118 = arith.mulf %112, %117 : vector<16x64xf32>
    %119 = arith.truncf %118 : vector<16x64xf32> to vector<16x64xbf16>
    %c0_40 = arith.constant 0 : index
    %c0_41 = arith.constant 0 : index
    %120 = vector.load %arg11[%c0_40, %c0_41] : memref<64x32xbf16, #tpu.memory_space<vmem>>, vector<64x32xbf16>
    %cst_42 = arith.constant dense<0.000000e+00> : vector<16x32xf32>
    %121 = tpu.matmul %119, %120, %cst_42 {dimension_numbers = #tpu.dot_dimension_numbers<[1], [0], [0], [1], [0, 0, 1, 1], [], []>} : vector<16x64xbf16>, vector<64x32xbf16>, vector<16x32xf32> -> vector<16x32xf32>
    %c0_43 = arith.constant 0 : index
    %c0_44 = arith.constant 0 : index
    %122 = vector.load %arg12[%c0_43, %c0_44] : memref<1x32xf32, #tpu.memory_space<vmem>>, vector<1x32xf32>
    %123 = vector.shape_cast %122 : vector<1x32xf32> to vector<32xf32>
    %124 = vector.shape_cast %123 : vector<32xf32> to vector<1x32xf32>
    %125 = vector.broadcast %124 : vector<1x32xf32> to vector<16x32xf32>
    %126 = arith.addf %121, %125 : vector<16x32xf32>
    %127 = arith.addf %74, %126 : vector<16x32xf32>
    %128 = vector.shape_cast %127 : vector<16x32xf32> to vector<2x8x32xf32>
    %c0_45 = arith.constant 0 : index
    %c0_46 = arith.constant 0 : index
    %c0_47 = arith.constant 0 : index
    %129 = vector.load %arg13[%c0_45, %c0_46, %c0_47] : memref<2x8x32xf32, #tpu.memory_space<vmem>>, vector<2x8x32xf32>
    tpu.vector_store %arg13[%c0_45, %c0_46, %c0_47], %128 {strides = array<i32>} : memref<2x8x32xf32, #tpu.memory_space<vmem>>, vector<2x8x32xf32>,
    return
  }
  func.func @transform_0(%arg0: i32) -> (i32, i32, i32) {
    %c0_i32 = arith.constant 0 : i32
    %c0_i32_0 = arith.constant 0 : i32
    %c0_i32_1 = arith.constant 0 : i32
    return %arg0, %c0_i32, %c0_i32_0 : i32, i32, i32
  }
  func.func @transform_1(%arg0: i32) -> (i32, i32) {
    %c0_i32 = arith.constant 0 : i32
    %c0_i32_0 = arith.constant 0 : i32
    %c0_i32_1 = arith.constant 0 : i32
    return %c0_i32, %c0_i32_0 : i32, i32
  }
  func.func @transform_2(%arg0: i32) -> (i32, i32) {
    %c0_i32 = arith.constant 0 : i32
    %c0_i32_0 = arith.constant 0 : i32
    %c0_i32_1 = arith.constant 0 : i32
    return %c0_i32, %c0_i32_0 : i32, i32
  }
  func.func @transform_3(%arg0: i32) -> (i32, i32) {
    %c0_i32 = arith.constant 0 : i32
    %c0_i32_0 = arith.constant 0 : i32
    %c0_i32_1 = arith.constant 0 : i32
    return %c0_i32, %c0_i32_0 : i32, i32
  }
  func.func @transform_4(%arg0: i32) -> (i32, i32) {
    %c0_i32 = arith.constant 0 : i32
    %c0_i32_0 = arith.constant 0 : i32
    %c0_i32_1 = arith.constant 0 : i32
    return %c0_i32, %c0_i32_0 : i32, i32
  }
  func.func @transform_5(%arg0: i32) -> (i32, i32) {
    %c0_i32 = arith.constant 0 : i32
    %c0_i32_0 = arith.constant 0 : i32
    %c0_i32_1 = arith.constant 0 : i32
    return %c0_i32, %c0_i32_0 : i32, i32
  }
  func.func @transform_6(%arg0: i32) -> (i32, i32) {
    %c0_i32 = arith.constant 0 : i32
    %c0_i32_0 = arith.constant 0 : i32
    %c0_i32_1 = arith.constant 0 : i32
    return %c0_i32, %c0_i32_0 : i32, i32
  }
  func.func @transform_7(%arg0: i32) -> (i32, i32) {
    %c0_i32 = arith.constant 0 : i32
    %c0_i32_0 = arith.constant 0 : i32
    %c0_i32_1 = arith.constant 0 : i32
    return %c0_i32, %c0_i32_0 : i32, i32
  }
  func.func @transform_8(%arg0: i32) -> (i32, i32) {
    %c0_i32 = arith.constant 0 : i32
    %c0_i32_0 = arith.constant 0 : i32
    %c0_i32_1 = arith.constant 0 : i32
    return %c0_i32, %c0_i32_0 : i32, i32
  }
  func.func @transform_9(%arg0: i32) -> (i32, i32) {
    %c0_i32 = arith.constant 0 : i32
    %c0_i32_0 = arith.constant 0 : i32
    %c0_i32_1 = arith.constant 0 : i32
    return %c0_i32, %c0_i32_0 : i32, i32
  }
  func.func @transform_10(%arg0: i32) -> (i32, i32) {
    %c0_i32 = arith.constant 0 : i32
    %c0_i32_0 = arith.constant 0 : i32
    %c0_i32_1 = arith.constant 0 : i32
    return %c0_i32, %c0_i32_0 : i32, i32
  }
  func.func @transform_11(%arg0: i32) -> (i32, i32) {
    %c0_i32 = arith.constant 0 : i32
    %c0_i32_0 = arith.constant 0 : i32
    %c0_i32_1 = arith.constant 0 : i32
    return %c0_i32, %c0_i32_0 : i32, i32
  }
  func.func @transform_12(%arg0: i32) -> (i32, i32, i32) {
    %c0_i32 = arith.constant 0 : i32
    %c0_i32_0 = arith.constant 0 : i32
    %c0_i32_1 = arith.constant 0 : i32
    return %arg0, %c0_i32, %c0_i32_0 : i32, i32, i32
  }
}

</mosaic_0001>

<llo_original>
// kernel: tpu_custom_call.1
$region0: #{tpu_custom_call.1}
  #allocation0 [shape = 'u32[]', space=smem, size = 0x4, offset = 0x4, fixed_abs, tag = 'smem constant byte address 0x4 - core index']
  #allocation1 [shape = 'u32[144,128]{1,0:T(1,128)}', space=vmem, size = 0x12000, scoped, tag = 'internal scratch']
  %s0 = inlined_call_operand.vmem [shape: f32[2,8,32], index: 0, kind: input, shape index: {}]
  %s1 = inlined_call_operand.vmem [shape: f32[1,32], index: 1, kind: input, shape index: {}]
  %s2 = inlined_call_operand.vmem [shape: f32[1,32], index: 2, kind: input, shape index: {}]
  %s3 = inlined_call_operand.vmem [shape: bf16[32,96], index: 3, kind: input, shape index: {}]
  %s4 = inlined_call_operand.vmem [shape: bf16[32,32], index: 4, kind: input, shape index: {}]
  %s5 = inlined_call_operand.hbm [shape: f32[1,32], index: 5, kind: input, shape index: {}]
  %s6 = inlined_call_operand.hbm [shape: f32[1,32], index: 6, kind: input, shape index: {}]
  %s7 = inlined_call_operand.hbm [shape: f32[1,32], index: 7, kind: input, shape index: {}]
  %s8 = inlined_call_operand.hbm [shape: bf16[32,64], index: 8, kind: input, shape index: {}]
  %s9 = inlined_call_operand.hbm [shape: f32[1,64], index: 9, kind: input, shape index: {}]
  %s10 = inlined_call_operand.vmem [shape: bf16[64,32], index: 10, kind: input, shape index: {}]
  %s11 = inlined_call_operand.vmem [shape: f32[1,32], index: 11, kind: input, shape index: {}]
  %s12 = inlined_call_operand.hbm [shape: f32[2,8,32], index: 12, kind: output, shape index: {}]
  %s13 = sld [smem:[#allocation0]]
  $region78: #{tpu_custom_call.1} parent=0
    _
  %s15 = ssub.s32 1, %s13
  %s16 = scalar_select 0, %s15, %s13
  $region1: #{tpu_custom_call.1} parent=0
    #allocation2 [shape = 'u8[512]{0}', space=vmem, size = 0x400, scoped, tag = 'input window, operand 5, single buffered']
    #allocation3 [shape = 's32[1]{0}', space=sflag, size = 0x4, scoped, tag = 'scoped memory for tpu_custom_call.1']
    #allocation4 [shape = 's32[1]{0}', space=sflag, size = 0x4, scoped, tag = 'scoped memory for tpu_custom_call.1']
    #allocation5 [shape = 'u8[512]{0}', space=vmem, size = 0x400, scoped, tag = 'input window, operand 6, single buffered']
    #allocation6 [shape = 's32[1]{0}', space=sflag, size = 0x4, scoped, tag = 'scoped memory for tpu_custom_call.1']
    #allocation7 [shape = 'u8[512]{0}', space=vmem, size = 0x400, scoped, tag = 'input window, operand 7, single buffered']
    #allocation8 [shape = 'u8[8192]{0}', space=vmem, size = 0x2000, scoped, tag = 'input window, operand 8, single buffered']
    #allocation9 [shape = 's32[1]{0}', space=sflag, size = 0x4, scoped, tag = 'scoped memory for tpu_custom_call.1']
    #allocation10 [shape = 'u8[512]{0}', space=vmem, size = 0x400, scoped, tag = 'input window, operand 9, single buffered']
    #allocation11 [shape = 'u8[8192]{0}', space=vmem, size = 0x2000, scoped, tag = 'output window, operand 0, single buffered']
    %17 = vsyncpa [#allocation3], 0
    %18 = vsyncpa [#allocation6], 0
    %19 = vsyncpa [#allocation9], 0
    %20 = vsyncpa [#allocation4], 0
    // Predicated region
    $region2: #{tpu_custom_call.1} parent=1 // pred_check
      _
    $region3: #{tpu_custom_call.1} parent=1 // pred_check_branch
      %22 = sbr.rel (0) target = $region5
    $region4: #{tpu_custom_call.1} parent=1 // pred_region
      _
    $region5: #{tpu_custom_call.1} parent=1 // pred_fallthru
      _
    // Predicated region
    $region6: #{tpu_custom_call.1} parent=1 // pred_check
      _
    $region7: #{tpu_custom_call.1} parent=1 // pred_check_branch
      %24 = sbr.rel (0) target = $region9
    $region8: #{tpu_custom_call.1} parent=1 // pred_region
      _
    $region9: #{tpu_custom_call.1} parent=1 // pred_fallthru
      _
    // Predicated region
    $region10: #{tpu_custom_call.1} parent=1 // pred_check
      _
    $region11: #{tpu_custom_call.1} parent=1 // pred_check_branch
      %26 = sbr.rel (0) target = $region13
    $region12: #{tpu_custom_call.1} parent=1 // pred_region
      _
    $region13: #{tpu_custom_call.1} parent=1 // pred_fallthru
      _
    // Predicated region
    $region14: #{tpu_custom_call.1} parent=1 // pred_check
      _
    $region15: #{tpu_custom_call.1} parent=1 // pred_check_branch
      %28 = sbr.rel (0) target = $region17
    $region16: #{tpu_custom_call.1} parent=1 // pred_region
      _
    $region17: #{tpu_custom_call.1} parent=1 // pred_fallthru
      _
    // Predicated region
    $region18: #{tpu_custom_call.1} parent=1 // pred_check
      _
    $region19: #{tpu_custom_call.1} parent=1 // pred_check_branch
      %30 = sbr.rel (0) target = $region21
    $region20: #{tpu_custom_call.1} parent=1 // pred_region
      _
    $region21: #{tpu_custom_call.1} parent=1 // pred_fallthru
      _
    // Predicated region
    $region22: #{tpu_custom_call.1} parent=1 // pred_check
      _
    $region23: #{tpu_custom_call.1} parent=1 // pred_check_branch
      %32 = sbr.rel (0) target = $region25
    $region24: #{tpu_custom_call.1} parent=1 // pred_region
      %s34 = ssub.s32 16, 16
      %35 = vsyncadd [#allocation3], %s34
      %s37 = sshll.u32 [#allocation2], 4
      %s38 = int_to_ptr.vmem [resolvable:$true] %s37
      %40 = dma.hbm_to_vmem [thread:$0]  %s5, 16, %s38, [#allocation3]
    $region25: #{tpu_custom_call.1} parent=1 // pred_fallthru
      _
    // Predicated region
    $region26: #{tpu_custom_call.1} parent=1 // pred_check
      _
    $region27: #{tpu_custom_call.1} parent=1 // pred_check_branch
      %42 = sbr.rel (0) target = $region29
    $region28: #{tpu_custom_call.1} parent=1 // pred_region
      %s44 = ssub.s32 16, 16
      %45 = vsyncadd [#allocation6], %s44
      %s47 = sshll.u32 [#allocation5], 4
      %s48 = int_to_ptr.vmem [resolvable:$true] %s47
      %50 = dma.hbm_to_vmem [thread:$0]  %s6, 16, %s48, [#allocation6]
    $region29: #{tpu_custom_call.1} parent=1 // pred_fallthru
      _
    // Predicated region
    $region30: #{tpu_custom_call.1} parent=1 // pred_check
      _
    $region31: #{tpu_custom_call.1} parent=1 // pred_check_branch
      %52 = sbr.rel (0) target = $region33
    $region32: #{tpu_custom_call.1} parent=1 // pred_region
      %s54 = ssub.s32 16, 16
      %55 = vsyncadd [#allocation6], %s54
      %s57 = sshll.u32 [#allocation7], 4
      %s58 = int_to_ptr.vmem [resolvable:$true] %s57
      %60 = dma.hbm_to_vmem [thread:$0]  %s7, 16, %s58, [#allocation6]
    $region33: #{tpu_custom_call.1} parent=1 // pred_fallthru
      _
    // Predicated region
    $region34: #{tpu_custom_call.1} parent=1 // pred_check
      _
    $region35: #{tpu_custom_call.1} parent=1 // pred_check_branch
      %62 = sbr.rel (0) target = $region37
    $region36: #{tpu_custom_call.1} parent=1 // pred_region
      %s64 = ssub.s32 256, 256
      %65 = vsyncadd [#allocation9], %s64
      %s66 = sshll.u32 [#allocation8], 4
      %s67 = int_to_ptr.vmem [resolvable:$true] %s66
      %72 = dma.hbm_to_vmem [thread:$0]  %s8, 256, %s67, [#allocation9], 64, 64, 4
    $region37: #{tpu_custom_call.1} parent=1 // pred_fallthru
      _
    // Predicated region
    $region38: #{tpu_custom_call.1} parent=1 // pred_check
      _
    $region39: #{tpu_custom_call.1} parent=1 // pred_check_branch
      %74 = sbr.rel (0) target = $region41
    $region40: #{tpu_custom_call.1} parent=1 // pred_region
      %s76 = ssub.s32 16, 16
      %77 = vsyncadd [#allocation9], %s76
      %s79 = sshll.u32 [#allocation10], 4
      %s80 = int_to_ptr.vmem [resolvable:$true] %s79
      %82 = dma.hbm_to_vmem [thread:$0]  %s9, 16, %s80, [#allocation9]
    $region41: #{tpu_custom_call.1} parent=1 // pred_fallthru
      _
    // Predicated region
    $region42: #{tpu_custom_call.1} parent=1 // pred_check
      _
    $region43: #{tpu_custom_call.1} parent=1 // pred_check_branch
      %84 = sbr.rel (0) target = $region45
    $region44: #{tpu_custom_call.1} parent=1 // pred_region
      _
    $region45: #{tpu_custom_call.1} parent=1 // pred_fallthru
      _
    // Predicated region
    $region46: #{tpu_custom_call.1} parent=1 // pred_check
      _
    $region47: #{tpu_custom_call.1} parent=1 // pred_check_branch
      %86 = sbr.rel (0) target = $region49
    $region48: #{tpu_custom_call.1} parent=1 // pred_region
      _
    $region49: #{tpu_custom_call.1} parent=1 // pred_fallthru
      _
    // Predicated region
    $region50: #{tpu_custom_call.1} parent=1 // pred_check
      _
    $region51: #{tpu_custom_call.1} parent=1 // pred_check_branch
      %88 = sbr.rel (0) target = $region53
    $region52: #{tpu_custom_call.1} parent=1 // pred_region
      %89 = dma.done [#allocation3], 16
    $region53: #{tpu_custom_call.1} parent=1 // pred_fallthru
      _
    // Predicated region
    $region54: #{tpu_custom_call.1} parent=1 // pred_check
      _
    $region55: #{tpu_custom_call.1} parent=1 // pred_check_branch
      %91 = sbr.rel (0) target = $region57
    $region56: #{tpu_custom_call.1} parent=1 // pred_region
      %92 = dma.done [#allocation6], 16
    $region57: #{tpu_custom_call.1} parent=1 // pred_fallthru
      _
    // Predicated region
    $region58: #{tpu_custom_call.1} parent=1 // pred_check
      _
    $region59: #{tpu_custom_call.1} parent=1 // pred_check_branch
      %94 = sbr.rel (0) target = $region61
    $region60: #{tpu_custom_call.1} parent=1 // pred_region
      %95 = dma.done [#allocation6], 16
    $region61: #{tpu_custom_call.1} parent=1 // pred_fallthru
      _
    // Predicated region
    $region62: #{tpu_custom_call.1} parent=1 // pred_check
      _
    $region63: #{tpu_custom_call.1} parent=1 // pred_check_branch
      %97 = sbr.rel (0) target = $region65
    $region64: #{tpu_custom_call.1} parent=1 // pred_region
      %98 = dma.done [#allocation9], 256
    $region65: #{tpu_custom_call.1} parent=1 // pred_fallthru
      _
    // Predicated region
    $region66: #{tpu_custom_call.1} parent=1 // pred_check
      _
    $region67: #{tpu_custom_call.1} parent=1 // pred_check_branch
      %100 = sbr.rel (0) target = $region69
    $region68: #{tpu_custom_call.1} parent=1 // pred_region
      %101 = dma.done [#allocation9], 16
    $region69: #{tpu_custom_call.1} parent=1 // pred_fallthru
      _
    %v103 = vld [vmem:[%s0] sm:$0xff]
    %v104 = vld [vmem:[%s0 + $0x8] sm:$0xff]
    %v105 = vld [vmem:[%s1] sm:$0x1]
    %v106 = vld [vmem:[%s2] sm:$0x1]
    %vm107 = vcmask 261120
    %v108 = vsel %vm107, %v103, 0.0
    %109 = vadd.xlane.f32.xlu0 %v108
    %v110 = vpop.xlane.xlu0 %109
    %v111 = vsel %vm107, %v104, 0.0
    %112 = vadd.xlane.f32.xlu0 %v111
    %v113 = vpop.xlane.xlu0 %112
    %v114 = vrcp.pop 32.0
    %v115 = vmul.f32 %v110, %v114
    %v116 = vmul.f32 %v113, %v114
    %v117 = vsub.f32 %v103, %v115
    %v118 = vsub.f32 %v104, %v116
    %v119 = vmul.f32 %v117, %v117
    %v120 = vmul.f32 %v118, %v118
    %v121 = vsel %vm107, %v119, 0.0
    %122 = vadd.xlane.f32.xlu0 %v121
    %v123 = vpop.xlane.xlu0 %122
    %v124 = vsel %vm107, %v120, 0.0
    %125 = vadd.xlane.f32.xlu0 %v124
    %v126 = vpop.xlane.xlu0 %125
    %v127 = vmul.f32 %v123, %v114
    %v128 = vmul.f32 %v126, %v114
    %v129 = vadd.f32 %v127, 1e-05
    %v130 = vadd.f32 %v128, 1e-05
    %v131 = vrsqrt.pop %v129
    %v132 = vrsqrt.pop %v130
    %v133 = vmul.f32 %v117, %v131
    %v134 = vmul.f32 %v118, %v132
    %v136 = vlaneseq
    %v137 = vshrl.u32 %v136, 7
    %v138 = vsub.s32 0, %v137
    %v139 = vrot.slane %v105, %v138
    %v141 = vmul.f32 %v133, %v139
    %v142 = vmul.f32 %v134, %v139
    %v144 = vlaneseq
    %v145 = vshrl.u32 %v144, 7
    %v146 = vsub.s32 0, %v145
    %v147 = vrot.slane %v106, %v146
    %v149 = vadd.f32 %v141, %v147
    %v150 = vadd.f32 %v142, %v147
    %v151 = vpack.c.bf16 %v150, %v149
    %v152 = vld [vmem:[%s3] sm:$0xf]
    %v153 = vld [vmem:[%s3 + $0x4] sm:$0xf]
    %v154 = vld [vmem:[%s3 + $0x8] sm:$0xf]
    %v155 = vld [vmem:[%s3 + $0xc] sm:$0xf]
    %v160 = vunpack.c.l.b16 %v152
    %v161 = vunpack.c.l.b16 %v153
    %v162 = vunpack.c.l.b16 %v154
    %v163 = vunpack.c.l.b16 %v155
    %v164 = vpack.c.b16 %v161, %v160
    %v165 = vpack.c.b16 %v163, %v162
    %v169 = vsel %vm107, %v151, 0
    %171 = vmatprep.subr.bf16.mxu0 0
    %172 = vmatpush1.bf16.msra.mxu0 0
    %173 = vmatprep.subr.bf16.mxu0 0
    %174 = vmatpush1.bf16.msra.mxu0 0
    %175 = vmatprep.subr.bf16.mxu0 0
    %176 = vmatpush1.bf16.msra.mxu0 0
    %177 = vmatprep.subr.bf16.mxu0 0
    %178 = vmatpush1.bf16.msra.mxu0 0
    %179 = vmatprep.subr.bf16.mxu0 0
    %180 = vmatpush1.bf16.msra.mxu0 0
    %181 = vmatprep.subr.bf16.mxu0 0
    %182 = vmatpush1.bf16.msra.mxu0 0
    %183 = vmatprep.subr.bf16.mxu0 0
    %184 = vmatpush1.bf16.msra.mxu0 %v165
    %185 = vmatprep.subr.bf16.mxu0 0
    %186 = vmatpush1.bf16.msra.mxu0 %v164
    %187 = vmatprep.subr.bf16.mxu0 0
    %188 = vmatpush2.bf16.msra.mxu0 0
    %189 = vmatprep.subr.bf16.mxu0 0
    %190 = vmatpush2.bf16.msra.mxu0 0
    %191 = vmatprep.subr.bf16.mxu0 0
    %192 = vmatpush2.bf16.msra.mxu0 0
    %193 = vmatprep.subr.bf16.mxu0 0
    %194 = vmatpush2.bf16.msra.mxu0 0
    %195 = vmatprep.subr.bf16.mxu0 0
    %196 = vmatpush2.bf16.msra.mxu0 0
    %197 = vmatprep.subr.bf16.mxu0 0
    %198 = vmatpush2.bf16.msra.mxu0 0
    %199 = vmatprep.subr.bf16.mxu0 0
    %200 = vmatpush2.bf16.msra.mxu0 0
    %201 = vmatprep.subr.bf16.mxu0 0
    %202 = vmatpush2.bf16.msra.mxu0 0
    %203 = vmatprep.mubr.bf16.mxu0 0
    %204 = vmatmul.mubr.bf16.gmra.mxu0 %v169
    %v205 = vpop.f32.mrf.mxu0
    %v206 = vadd.f32 0.0, %v205
    %v207 = vpop.f32.mrf.mxu0
    %v208 = vpop.f32.mrf.mxu0
    %v209 = vadd.f32 0.0, %v208
    %v210 = vpop.f32.mrf.mxu0
    %211 = vdwg.mxu0
    %v212 = vmul.f32 %v206, 0.35355338
    %v213 = vmul.f32 %v209, 0.35355338
    %216 = vrot.lane.b32.xlu0 %v212, 120
    %v217 = vpop.permute.xlu0 %216
    %218 = vrot.lane.b32.xlu0 %v213, 120
    %v219 = vpop.permute.xlu0 %218
    %222 = vrot.lane.b32.xlu0 %v212, 112
    %v223 = vpop.permute.xlu0 %222
    %224 = vrot.lane.b32.xlu0 %v213, 112
    %v225 = vpop.permute.xlu0 %224
    %228 = vrot.lane.b32.xlu0 %v212, 104
    %v229 = vpop.permute.xlu0 %228
    %230 = vrot.lane.b32.xlu0 %v213, 104
    %v231 = vpop.permute.xlu0 %230
    %v234 = vcombine.low %v212, %v223
    %v235 = vcombine.high %v212, %v223
    %v237 = vunpack.c.l.s4 1983009808
    %v238 = vunpack.c.0.s8 %v237
    %v239 = vlaneseq
    %v240 = vshrl.u32 %v239, 7
    %v241 = vsub.s32 %v238, %v240
    %v242 = vrot.slane %v234, %v241
    %v244 = vunpack.c.l.s4 1983009808
    %v245 = vunpack.c.0.s8 %v244
    %v246 = vlaneseq
    %v247 = vshrl.u32 %v246, 7
    %v248 = vsub.s32 %v245, %v247
    %v249 = vrot.slane %v235, %v248
    %v250 = vcombine.low %v217, %v229
    %v251 = vcombine.high %v217, %v229
    %v253 = vunpack.c.l.s4 1983009808
    %v254 = vunpack.c.0.s8 %v253
    %v255 = vlaneseq
    %v256 = vshrl.u32 %v255, 7
    %v257 = vsub.s32 %v254, %v256
    %v258 = vrot.slane %v250, %v257
    %v260 = vunpack.c.l.s4 1983009808
    %v261 = vunpack.c.0.s8 %v260
    %v262 = vlaneseq
    %v263 = vshrl.u32 %v262, 7
    %v264 = vsub.s32 %v261, %v263
    %v265 = vrot.slane %v251, %v264
    %v266 = vcombine.low %v242, %v258
    %v267 = vcombine.high %v242, %v258
    %v269 = vunpack.c.l.s4 1934713408
    %v270 = vunpack.c.0.s8 %v269
    %v271 = vlaneseq
    %v272 = vshrl.u32 %v271, 7
    %v273 = vsub.s32 %v270, %v272
    %v274 = vrot.slane %v266, %v273
    %v276 = vunpack.c.l.s4 1934713408
    %v277 = vunpack.c.0.s8 %v276
    %v278 = vlaneseq
    %v279 = vshrl.u32 %v278, 7
    %v280 = vsub.s32 %v277, %v279
    %v281 = vrot.slane %v267, %v280
    %v282 = vcombine.low %v249, %v265
    %v283 = vcombine.high %v249, %v265
    %v285 = vunpack.c.l.s4 1934713408
    %v286 = vunpack.c.0.s8 %v285
    %v287 = vlaneseq
    %v288 = vshrl.u32 %v287, 7
    %v289 = vsub.s32 %v286, %v288
    %v290 = vrot.slane %v282, %v289
    %v292 = vunpack.c.l.s4 1934713408
    %v293 = vunpack.c.0.s8 %v292
    %v294 = vlaneseq
    %v295 = vshrl.u32 %v294, 7
    %v296 = vsub.s32 %v293, %v295
    %v297 = vrot.slane %v283, %v296
    %v298 = vcombine.high %v274, 0.0
    %v299 = vcombine.high %v281, 0.0
    %v300 = vcombine.high %v290, 0.0
    %v301 = vcombine.high %v297, 0.0
    %v302 = vcombine.low %v213, %v225
    %v303 = vcombine.high %v213, %v225
    %v305 = vunpack.c.l.s4 1983009808
    %v306 = vunpack.c.0.s8 %v305
    %v307 = vlaneseq
    %v308 = vshrl.u32 %v307, 7
    %v309 = vsub.s32 %v306, %v308
    %v310 = vrot.slane %v302, %v309
    %v312 = vunpack.c.l.s4 1983009808
    %v313 = vunpack.c.0.s8 %v312
    %v314 = vlaneseq
    %v315 = vshrl.u32 %v314, 7
    %v316 = vsub.s32 %v313, %v315
    %v317 = vrot.slane %v303, %v316
    %v318 = vcombine.low %v219, %v231
    %v319 = vcombine.high %v219, %v231
    %v321 = vunpack.c.l.s4 1983009808
    %v322 = vunpack.c.0.s8 %v321
    %v323 = vlaneseq
    %v324 = vshrl.u32 %v323, 7
    %v325 = vsub.s32 %v322, %v324
    %v326 = vrot.slane %v318, %v325
    %v328 = vunpack.c.l.s4 1983009808
    %v329 = vunpack.c.0.s8 %v328
    %v330 = vlaneseq
    %v331 = vshrl.u32 %v330, 7
    %v332 = vsub.s32 %v329, %v331
    %v333 = vrot.slane %v319, %v332
    %v334 = vcombine.low %v310, %v326
    %v335 = vcombine.high %v310, %v326
    %v337 = vunpack.c.l.s4 1934713408
    %v338 = vunpack.c.0.s8 %v337
    %v339 = vlaneseq
    %v340 = vshrl.u32 %v339, 7
    %v341 = vsub.s32 %v338, %v340
    %v342 = vrot.slane %v334, %v341
    %v344 = vunpack.c.l.s4 1934713408
    %v345 = vunpack.c.0.s8 %v344
    %v346 = vlaneseq
    %v347 = vshrl.u32 %v346, 7
    %v348 = vsub.s32 %v345, %v347
    %v349 = vrot.slane %v335, %v348
    %v350 = vcombine.low %v317, %v333
    %v351 = vcombine.high %v317, %v333
    %v353 = vunpack.c.l.s4 1934713408
    %v354 = vunpack.c.0.s8 %v353
    %v355 = vlaneseq
    %v356 = vshrl.u32 %v355, 7
    %v357 = vsub.s32 %v354, %v356
    %v358 = vrot.slane %v350, %v357
    %v360 = vunpack.c.l.s4 1934713408
    %v361 = vunpack.c.0.s8 %v360
    %v362 = vlaneseq
    %v363 = vshrl.u32 %v362, 7
    %v364 = vsub.s32 %v361, %v363
    %v365 = vrot.slane %v351, %v364
    %v366 = vcombine.high %v342, 0.0
    %v367 = vcombine.high %v349, 0.0
    %v368 = vcombine.high %v358, 0.0
    %v369 = vcombine.high %v365, 0.0
    %v370 = vcombine.low %v274, %v281
    %v372 = vunpack.c.l.s4 1983009808
    %v373 = vunpack.c.0.s8 %v372
    %v374 = vlaneseq
    %v375 = vshrl.u32 %v374, 7
    %v376 = vsub.s32 %v373, %v375
    %v377 = vrot.slane %v370, %v376
    %v378 = vcombine.low %v298, %v299
    %v380 = vunpack.c.l.s4 1983009808
    %v381 = vunpack.c.0.s8 %v380
    %v382 = vlaneseq
    %v383 = vshrl.u32 %v382, 7
    %v384 = vsub.s32 %v381, %v383
    %v385 = vrot.slane %v378, %v384
    %v386 = vcombine.low %v290, %v297
    %v388 = vunpack.c.l.s4 1983009808
    %v389 = vunpack.c.0.s8 %v388
    %v390 = vlaneseq
    %v391 = vshrl.u32 %v390, 7
    %v392 = vsub.s32 %v389, %v391
    %v393 = vrot.slane %v386, %v392
    %v394 = vcombine.low %v300, %v301
    %v396 = vunpack.c.l.s4 1983009808
    %v397 = vunpack.c.0.s8 %v396
    %v398 = vlaneseq
    %v399 = vshrl.u32 %v398, 7
    %v400 = vsub.s32 %v397, %v399
    %v401 = vrot.slane %v394, %v400
    %v402 = vcombine.low %v377, %v385
    %v403 = vcombine.high %v377, %v385
    %v405 = vunpack.c.l.s4 1934713408
    %v406 = vunpack.c.0.s8 %v405
    %v407 = vlaneseq
    %v408 = vshrl.u32 %v407, 7
    %v409 = vsub.s32 %v406, %v408
    %v410 = vrot.slane %v402, %v409
    %v412 = vunpack.c.l.s4 1934713408
    %v413 = vunpack.c.0.s8 %v412
    %v414 = vlaneseq
    %v415 = vshrl.u32 %v414, 7
    %v416 = vsub.s32 %v413, %v415
    %v417 = vrot.slane %v403, %v416
    %v418 = vcombine.low %v393, %v401
    %v419 = vcombine.high %v393, %v401
    %v421 = vunpack.c.l.s4 1934713408
    %v422 = vunpack.c.0.s8 %v421
    %v423 = vlaneseq
    %v424 = vshrl.u32 %v423, 7
    %v425 = vsub.s32 %v422, %v424
    %v426 = vrot.slane %v418, %v425
    %v428 = vunpack.c.l.s4 1934713408
    %v429 = vunpack.c.0.s8 %v428
    %v430 = vlaneseq
    %v431 = vshrl.u32 %v430, 7
    %v432 = vsub.s32 %v429, %v431
    %v433 = vrot.slane %v419, %v432
    %v434 = vcombine.low %v410, %v426
    %v435 = vcombine.high %v410, %v426
    %v436 = vcombine.low %v417, %v433
    %v437 = vcombine.high %v417, %v433
    %v438 = vcombine.low %v342, %v349
    %v440 = vunpack.c.l.s4 1983009808
    %v441 = vunpack.c.0.s8 %v440
    %v442 = vlaneseq
    %v443 = vshrl.u32 %v442, 7
    %v444 = vsub.s32 %v441, %v443
    %v445 = vrot.slane %v438, %v444
    %v446 = vcombine.low %v366, %v367
    %v448 = vunpack.c.l.s4 1983009808
    %v449 = vunpack.c.0.s8 %v448
    %v450 = vlaneseq
    %v451 = vshrl.u32 %v450, 7
    %v452 = vsub.s32 %v449, %v451
    %v453 = vrot.slane %v446, %v452
    %v454 = vcombine.low %v358, %v365
    %v456 = vunpack.c.l.s4 1983009808
    %v457 = vunpack.c.0.s8 %v456
    %v458 = vlaneseq
    %v459 = vshrl.u32 %v458, 7
    %v460 = vsub.s32 %v457, %v459
    %v461 = vrot.slane %v454, %v460
    %v462 = vcombine.low %v368, %v369
    %v464 = vunpack.c.l.s4 1983009808
    %v465 = vunpack.c.0.s8 %v464
    %v466 = vlaneseq
    %v467 = vshrl.u32 %v466, 7
    %v468 = vsub.s32 %v465, %v467
    %v469 = vrot.slane %v462, %v468
    %v470 = vcombine.low %v445, %v453
    %v471 = vcombine.high %v445, %v453
    %v473 = vunpack.c.l.s4 1934713408
    %v474 = vunpack.c.0.s8 %v473
    %v475 = vlaneseq
    %v476 = vshrl.u32 %v475, 7
    %v477 = vsub.s32 %v474, %v476
    %v478 = vrot.slane %v470, %v477
    %v480 = vunpack.c.l.s4 1934713408
    %v481 = vunpack.c.0.s8 %v480
    %v482 = vlaneseq
    %v483 = vshrl.u32 %v482, 7
    %v484 = vsub.s32 %v481, %v483
    %v485 = vrot.slane %v471, %v484
    %v486 = vcombine.low %v461, %v469
    %v487 = vcombine.high %v461, %v469
    %v489 = vunpack.c.l.s4 1934713408
    %v490 = vunpack.c.0.s8 %v489
    %v491 = vlaneseq
    %v492 = vshrl.u32 %v491, 7
    %v493 = vsub.s32 %v490, %v492
    %v494 = vrot.slane %v486, %v493
    %v496 = vunpack.c.l.s4 1934713408
    %v497 = vunpack.c.0.s8 %v496
    %v498 = vlaneseq
    %v499 = vshrl.u32 %v498, 7
    %v500 = vsub.s32 %v497, %v499
    %v501 = vrot.slane %v487, %v500
    %v502 = vcombine.low %v478, %v494
    %v503 = vcombine.high %v478, %v494
    %v504 = vcombine.low %v485, %v501
    %v505 = vcombine.high %v485, %v501
    %v506 = vpack.c.bf16 %v434, %v434
    %v507 = vpack.c.bf16 %v435, %v435
    %v508 = vpack.c.bf16 %v436, %v436
    %v509 = vpack.c.bf16 %v437, %v437
    %v510 = vpack.c.bf16 %v502, %v502
    %v511 = vpack.c.bf16 %v503, %v503
    %v512 = vpack.c.bf16 %v504, %v504
    %v513 = vpack.c.bf16 %v505, %v505
    %516 = vrot.lane.b32.xlu0 %v206, 120
    %v517 = vpop.permute.xlu0 %516
    %518 = vrot.lane.b32.xlu0 %v209, 120
    %v519 = vpop.permute.xlu0 %518
    %520 = vrot.lane.b32.xlu0 %v206, 112
    %v521 = vpop.permute.xlu0 %520
    %522 = vrot.lane.b32.xlu0 %v209, 112
    %v523 = vpop.permute.xlu0 %522
    %524 = vrot.lane.b32.xlu0 %v206, 104
    %v525 = vpop.permute.xlu0 %524
    %526 = vrot.lane.b32.xlu0 %v209, 104
    %v527 = vpop.permute.xlu0 %526
    %528 = vrot.lane.b32.xlu0 %v206, 96
    %v529 = vpop.permute.xlu0 %528
    %530 = vrot.lane.b32.xlu0 %v209, 96
    %v531 = vpop.permute.xlu0 %530
    %532 = vrot.lane.b32.xlu0 %v517, 96
    %v533 = vpop.permute.xlu0 %532
    %534 = vrot.lane.b32.xlu0 %v519, 96
    %v535 = vpop.permute.xlu0 %534
    %536 = vrot.lane.b32.xlu0 %v521, 96
    %v537 = vpop.permute.xlu0 %536
    %538 = vrot.lane.b32.xlu0 %v523, 96
    %v539 = vpop.permute.xlu0 %538
    %540 = vrot.lane.b32.xlu0 %v525, 96
    %v541 = vpop.permute.xlu0 %540
    %542 = vrot.lane.b32.xlu0 %v527, 96
    %v543 = vpop.permute.xlu0 %542
    %v552 = vcombine.low %v529, %v537
    %v553 = vcombine.high %v529, %v537
    %v555 = vunpack.c.l.s4 1983009808
    %v556 = vunpack.c.0.s8 %v555
    %v557 = vlaneseq
    %v558 = vshrl.u32 %v557, 7
    %v559 = vsub.s32 %v556, %v558
    %v560 = vrot.slane %v552, %v559
    %v562 = vunpack.c.l.s4 1983009808
    %v563 = vunpack.c.0.s8 %v562
    %v564 = vlaneseq
    %v565 = vshrl.u32 %v564, 7
    %v566 = vsub.s32 %v563, %v565
    %v567 = vrot.slane %v553, %v566
    %v568 = vcombine.low %v533, %v541
    %v569 = vcombine.high %v533, %v541
    %v571 = vunpack.c.l.s4 1983009808
    %v572 = vunpack.c.0.s8 %v571
    %v573 = vlaneseq
    %v574 = vshrl.u32 %v573, 7
    %v575 = vsub.s32 %v572, %v574
    %v576 = vrot.slane %v568, %v575
    %v578 = vunpack.c.l.s4 1983009808
    %v579 = vunpack.c.0.s8 %v578
    %v580 = vlaneseq
    %v581 = vshrl.u32 %v580, 7
    %v582 = vsub.s32 %v579, %v581
    %v583 = vrot.slane %v569, %v582
    %v584 = vcombine.low %v560, %v576
    %v585 = vcombine.high %v560, %v576
    %v587 = vunpack.c.l.s4 1934713408
    %v588 = vunpack.c.0.s8 %v587
    %v589 = vlaneseq
    %v590 = vshrl.u32 %v589, 7
    %v591 = vsub.s32 %v588, %v590
    %v592 = vrot.slane %v584, %v591
    %v594 = vunpack.c.l.s4 1934713408
    %v595 = vunpack.c.0.s8 %v594
    %v596 = vlaneseq
    %v597 = vshrl.u32 %v596, 7
    %v598 = vsub.s32 %v595, %v597
    %v599 = vrot.slane %v585, %v598
    %v600 = vcombine.low %v567, %v583
    %v601 = vcombine.high %v567, %v583
    %v603 = vunpack.c.l.s4 1934713408
    %v604 = vunpack.c.0.s8 %v603
    %v605 = vlaneseq
    %v606 = vshrl.u32 %v605, 7
    %v607 = vsub.s32 %v604, %v606
    %v608 = vrot.slane %v600, %v607
    %v610 = vunpack.c.l.s4 1934713408
    %v611 = vunpack.c.0.s8 %v610
    %v612 = vlaneseq
    %v613 = vshrl.u32 %v612, 7
    %v614 = vsub.s32 %v611, %v613
    %v615 = vrot.slane %v601, %v614
    %v616 = vcombine.high %v592, 0.0
    %v617 = vcombine.high %v599, 0.0
    %v618 = vcombine.high %v608, 0.0
    %v619 = vcombine.high %v615, 0.0
    %v620 = vcombine.low %v531, %v539
    %v621 = vcombine.high %v531, %v539
    %v623 = vunpack.c.l.s4 1983009808
    %v624 = vunpack.c.0.s8 %v623
    %v625 = vlaneseq
    %v626 = vshrl.u32 %v625, 7
    %v627 = vsub.s32 %v624, %v626
    %v628 = vrot.slane %v620, %v627
    %v630 = vunpack.c.l.s4 1983009808
    %v631 = vunpack.c.0.s8 %v630
    %v632 = vlaneseq
    %v633 = vshrl.u32 %v632, 7
    %v634 = vsub.s32 %v631, %v633
    %v635 = vrot.slane %v621, %v634
    %v636 = vcombine.low %v535, %v543
    %v637 = vcombine.high %v535, %v543
    %v639 = vunpack.c.l.s4 1983009808
    %v640 = vunpack.c.0.s8 %v639
    %v641 = vlaneseq
    %v642 = vshrl.u32 %v641, 7
    %v643 = vsub.s32 %v640, %v642
    %v644 = vrot.slane %v636, %v643
    %v646 = vunpack.c.l.s4 1983009808
    %v647 = vunpack.c.0.s8 %v646
    %v648 = vlaneseq
    %v649 = vshrl.u32 %v648, 7
    %v650 = vsub.s32 %v647, %v649
    %v651 = vrot.slane %v637, %v650
    %v652 = vcombine.low %v628, %v644
    %v653 = vcombine.high %v628, %v644
    %v655 = vunpack.c.l.s4 1934713408
    %v656 = vunpack.c.0.s8 %v655
    %v657 = vlaneseq
    %v658 = vshrl.u32 %v657, 7
    %v659 = vsub.s32 %v656, %v658
    %v660 = vrot.slane %v652, %v659
    %v662 = vunpack.c.l.s4 1934713408
    %v663 = vunpack.c.0.s8 %v662
    %v664 = vlaneseq
    %v665 = vshrl.u32 %v664, 7
    %v666 = vsub.s32 %v663, %v665
    %v667 = vrot.slane %v653, %v666
    %v668 = vcombine.low %v635, %v651
    %v669 = vcombine.high %v635, %v651
    %v671 = vunpack.c.l.s4 1934713408
    %v672 = vunpack.c.0.s8 %v671
    %v673 = vlaneseq
    %v674 = vshrl.u32 %v673, 7
    %v675 = vsub.s32 %v672, %v674
    %v676 = vrot.slane %v668, %v675
    %v678 = vunpack.c.l.s4 1934713408
    %v679 = vunpack.c.0.s8 %v678
    %v680 = vlaneseq
    %v681 = vshrl.u32 %v680, 7
    %v682 = vsub.s32 %v679, %v681
    %v683 = vrot.slane %v669, %v682
    %v684 = vcombine.high %v660, 0.0
    %v685 = vcombine.high %v667, 0.0
    %v686 = vcombine.high %v676, 0.0
    %v687 = vcombine.high %v683, 0.0
    %v688 = vcombine.low %v592, %v599
    %v690 = vunpack.c.l.s4 1983009808
    %v691 = vunpack.c.0.s8 %v690
    %v692 = vlaneseq
    %v693 = vshrl.u32 %v692, 7
    %v694 = vsub.s32 %v691, %v693
    %v695 = vrot.slane %v688, %v694
    %v696 = vcombine.low %v616, %v617
    %v698 = vunpack.c.l.s4 1983009808
    %v699 = vunpack.c.0.s8 %v698
    %v700 = vlaneseq
    %v701 = vshrl.u32 %v700, 7
    %v702 = vsub.s32 %v699, %v701
    %v703 = vrot.slane %v696, %v702
    %v704 = vcombine.low %v608, %v615
    %v706 = vunpack.c.l.s4 1983009808
    %v707 = vunpack.c.0.s8 %v706
    %v708 = vlaneseq
    %v709 = vshrl.u32 %v708, 7
    %v710 = vsub.s32 %v707, %v709
    %v711 = vrot.slane %v704, %v710
    %v712 = vcombine.low %v618, %v619
    %v714 = vunpack.c.l.s4 1983009808
    %v715 = vunpack.c.0.s8 %v714
    %v716 = vlaneseq
    %v717 = vshrl.u32 %v716, 7
    %v718 = vsub.s32 %v715, %v717
    %v719 = vrot.slane %v712, %v718
    %v720 = vcombine.low %v695, %v703
    %v721 = vcombine.high %v695, %v703
    %v723 = vunpack.c.l.s4 1934713408
    %v724 = vunpack.c.0.s8 %v723
    %v725 = vlaneseq
    %v726 = vshrl.u32 %v725, 7
    %v727 = vsub.s32 %v724, %v726
    %v728 = vrot.slane %v720, %v727
    %v730 = vunpack.c.l.s4 1934713408
    %v731 = vunpack.c.0.s8 %v730
    %v732 = vlaneseq
    %v733 = vshrl.u32 %v732, 7
    %v734 = vsub.s32 %v731, %v733
    %v735 = vrot.slane %v721, %v734
    %v736 = vcombine.low %v711, %v719
    %v737 = vcombine.high %v711, %v719
    %v739 = vunpack.c.l.s4 1934713408
    %v740 = vunpack.c.0.s8 %v739
    %v741 = vlaneseq
    %v742 = vshrl.u32 %v741, 7
    %v743 = vsub.s32 %v740, %v742
    %v744 = vrot.slane %v736, %v743
    %v746 = vunpack.c.l.s4 1934713408
    %v747 = vunpack.c.0.s8 %v746
    %v748 = vlaneseq
    %v749 = vshrl.u32 %v748, 7
    %v750 = vsub.s32 %v747, %v749
    %v751 = vrot.slane %v737, %v750
    %v752 = vcombine.low %v728, %v744
    %v753 = vcombine.high %v728, %v744
    %v754 = vcombine.low %v735, %v751
    %v755 = vcombine.high %v735, %v751
    %v756 = vcombine.low %v660, %v667
    %v758 = vunpack.c.l.s4 1983009808
    %v759 = vunpack.c.0.s8 %v758
    %v760 = vlaneseq
    %v761 = vshrl.u32 %v760, 7
    %v762 = vsub.s32 %v759, %v761
    %v763 = vrot.slane %v756, %v762
    %v764 = vcombine.low %v684, %v685
    %v766 = vunpack.c.l.s4 1983009808
    %v767 = vunpack.c.0.s8 %v766
    %v768 = vlaneseq
    %v769 = vshrl.u32 %v768, 7
    %v770 = vsub.s32 %v767, %v769
    %v771 = vrot.slane %v764, %v770
    %v772 = vcombine.low %v676, %v683
    %v774 = vunpack.c.l.s4 1983009808
    %v775 = vunpack.c.0.s8 %v774
    %v776 = vlaneseq
    %v777 = vshrl.u32 %v776, 7
    %v778 = vsub.s32 %v775, %v777
    %v779 = vrot.slane %v772, %v778
    %v780 = vcombine.low %v686, %v687
    %v782 = vunpack.c.l.s4 1983009808
    %v783 = vunpack.c.0.s8 %v782
    %v784 = vlaneseq
    %v785 = vshrl.u32 %v784, 7
    %v786 = vsub.s32 %v783, %v785
    %v787 = vrot.slane %v780, %v786
    %v788 = vcombine.low %v763, %v771
    %v789 = vcombine.high %v763, %v771
    %v791 = vunpack.c.l.s4 1934713408
    %v792 = vunpack.c.0.s8 %v791
    %v793 = vlaneseq
    %v794 = vshrl.u32 %v793, 7
    %v795 = vsub.s32 %v792, %v794
    %v796 = vrot.slane %v788, %v795
    %v798 = vunpack.c.l.s4 1934713408
    %v799 = vunpack.c.0.s8 %v798
    %v800 = vlaneseq
    %v801 = vshrl.u32 %v800, 7
    %v802 = vsub.s32 %v799, %v801
    %v803 = vrot.slane %v789, %v802
    %v804 = vcombine.low %v779, %v787
    %v805 = vcombine.high %v779, %v787
    %v807 = vunpack.c.l.s4 1934713408
    %v808 = vunpack.c.0.s8 %v807
    %v809 = vlaneseq
    %v810 = vshrl.u32 %v809, 7
    %v811 = vsub.s32 %v808, %v810
    %v812 = vrot.slane %v804, %v811
    %v814 = vunpack.c.l.s4 1934713408
    %v815 = vunpack.c.0.s8 %v814
    %v816 = vlaneseq
    %v817 = vshrl.u32 %v816, 7
    %v818 = vsub.s32 %v815, %v817
    %v819 = vrot.slane %v805, %v818
    %v820 = vcombine.low %v796, %v812
    %v821 = vcombine.high %v796, %v812
    %v822 = vcombine.low %v803, %v819
    %v823 = vcombine.high %v803, %v819
    %v824 = vpack.c.bf16 %v752, %v752
    %v825 = vpack.c.bf16 %v753, %v753
    %v826 = vpack.c.bf16 %v754, %v754
    %v827 = vpack.c.bf16 %v755, %v755
    %v828 = vpack.c.bf16 %v820, %v820
    %v829 = vpack.c.bf16 %v821, %v821
    %v830 = vpack.c.bf16 %v822, %v822
    %v831 = vpack.c.bf16 %v823, %v823
    %832 = vrot.lane.b32.xlu0 %v206, 64
    %v833 = vpop.permute.xlu0 %832
    %834 = vrot.lane.b32.xlu0 %v209, 64
    %v835 = vpop.permute.xlu0 %834
    %836 = vrot.lane.b32.xlu0 %v517, 64
    %v837 = vpop.permute.xlu0 %836
    %838 = vrot.lane.b32.xlu0 %v519, 64
    %v839 = vpop.permute.xlu0 %838
    %840 = vrot.lane.b32.xlu0 %v521, 64
    %v841 = vpop.permute.xlu0 %840
    %842 = vrot.lane.b32.xlu0 %v523, 64
    %v843 = vpop.permute.xlu0 %842
    %844 = vrot.lane.b32.xlu0 %v525, 64
    %v845 = vpop.permute.xlu0 %844
    %846 = vrot.lane.b32.xlu0 %v527, 64
    %v847 = vpop.permute.xlu0 %846
    %v856 = vcombine.low %v833, %v841
    %v857 = vcombine.high %v833, %v841
    %v859 = vunpack.c.l.s4 1983009808
    %v860 = vunpack.c.0.s8 %v859
    %v861 = vlaneseq
    %v862 = vshrl.u32 %v861, 7
    %v863 = vsub.s32 %v860, %v862
    %v864 = vrot.slane %v856, %v863
    %v866 = vunpack.c.l.s4 1983009808
    %v867 = vunpack.c.0.s8 %v866
    %v868 = vlaneseq
    %v869 = vshrl.u32 %v868, 7
    %v870 = vsub.s32 %v867, %v869
    %v871 = vrot.slane %v857, %v870
    %v872 = vcombine.low %v837, %v845
    %v873 = vcombine.high %v837, %v845
    %v875 = vunpack.c.l.s4 1983009808
    %v876 = vunpack.c.0.s8 %v875
    %v877 = vlaneseq
    %v878 = vshrl.u32 %v877, 7
    %v879 = vsub.s32 %v876, %v878
    %v880 = vrot.slane %v872, %v879
    %v882 = vunpack.c.l.s4 1983009808
    %v883 = vunpack.c.0.s8 %v882
    %v884 = vlaneseq
    %v885 = vshrl.u32 %v884, 7
    %v886 = vsub.s32 %v883, %v885
    %v887 = vrot.slane %v873, %v886
    %v888 = vcombine.low %v864, %v880
    %v889 = vcombine.high %v864, %v880
    %v891 = vunpack.c.l.s4 1934713408
    %v892 = vunpack.c.0.s8 %v891
    %v893 = vlaneseq
    %v894 = vshrl.u32 %v893, 7
    %v895 = vsub.s32 %v892, %v894
    %v896 = vrot.slane %v888, %v895
    %v898 = vunpack.c.l.s4 1934713408
    %v899 = vunpack.c.0.s8 %v898
    %v900 = vlaneseq
    %v901 = vshrl.u32 %v900, 7
    %v902 = vsub.s32 %v899, %v901
    %v903 = vrot.slane %v889, %v902
    %v904 = vcombine.low %v871, %v887
    %v905 = vcombine.high %v871, %v887
    %v907 = vunpack.c.l.s4 1934713408
    %v908 = vunpack.c.0.s8 %v907
    %v909 = vlaneseq
    %v910 = vshrl.u32 %v909, 7
    %v911 = vsub.s32 %v908, %v910
    %v912 = vrot.slane %v904, %v911
    %v914 = vunpack.c.l.s4 1934713408
    %v915 = vunpack.c.0.s8 %v914
    %v916 = vlaneseq
    %v917 = vshrl.u32 %v916, 7
    %v918 = vsub.s32 %v915, %v917
    %v919 = vrot.slane %v905, %v918
    %v920 = vcombine.high %v896, 0.0
    %v921 = vcombine.high %v903, 0.0
    %v922 = vcombine.high %v912, 0.0
    %v923 = vcombine.high %v919, 0.0
    %v924 = vcombine.low %v835, %v843
    %v925 = vcombine.high %v835, %v843
    %v927 = vunpack.c.l.s4 1983009808
    %v928 = vunpack.c.0.s8 %v927
    %v929 = vlaneseq
    %v930 = vshrl.u32 %v929, 7
    %v931 = vsub.s32 %v928, %v930
    %v932 = vrot.slane %v924, %v931
    %v934 = vunpack.c.l.s4 1983009808
    %v935 = vunpack.c.0.s8 %v934
    %v936 = vlaneseq
    %v937 = vshrl.u32 %v936, 7
    %v938 = vsub.s32 %v935, %v937
    %v939 = vrot.slane %v925, %v938
    %v940 = vcombine.low %v839, %v847
    %v941 = vcombine.high %v839, %v847
    %v943 = vunpack.c.l.s4 1983009808
    %v944 = vunpack.c.0.s8 %v943
    %v945 = vlaneseq
    %v946 = vshrl.u32 %v945, 7
    %v947 = vsub.s32 %v944, %v946
    %v948 = vrot.slane %v940, %v947
    %v950 = vunpack.c.l.s4 1983009808
    %v951 = vunpack.c.0.s8 %v950
    %v952 = vlaneseq
    %v953 = vshrl.u32 %v952, 7
    %v954 = vsub.s32 %v951, %v953
    %v955 = vrot.slane %v941, %v954
    %v956 = vcombine.low %v932, %v948
    %v957 = vcombine.high %v932, %v948
    %v959 = vunpack.c.l.s4 1934713408
    %v960 = vunpack.c.0.s8 %v959
    %v961 = vlaneseq
    %v962 = vshrl.u32 %v961, 7
    %v963 = vsub.s32 %v960, %v962
    %v964 = vrot.slane %v956, %v963
    %v966 = vunpack.c.l.s4 1934713408
    %v967 = vunpack.c.0.s8 %v966
    %v968 = vlaneseq
    %v969 = vshrl.u32 %v968, 7
    %v970 = vsub.s32 %v967, %v969
    %v971 = vrot.slane %v957, %v970
    %v972 = vcombine.low %v939, %v955
    %v973 = vcombine.high %v939, %v955
    %v975 = vunpack.c.l.s4 1934713408
    %v976 = vunpack.c.0.s8 %v975
    %v977 = vlaneseq
    %v978 = vshrl.u32 %v977, 7
    %v979 = vsub.s32 %v976, %v978
    %v980 = vrot.slane %v972, %v979
    %v982 = vunpack.c.l.s4 1934713408
    %v983 = vunpack.c.0.s8 %v982
    %v984 = vlaneseq
    %v985 = vshrl.u32 %v984, 7
    %v986 = vsub.s32 %v983, %v985
    %v987 = vrot.slane %v973, %v986
    %v988 = vcombine.high %v964, 0.0
    %v989 = vcombine.high %v971, 0.0
    %v990 = vcombine.high %v980, 0.0
    %v991 = vcombine.high %v987, 0.0
    %v992 = vcombine.low %v896, %v903
    %v994 = vunpack.c.l.s4 1983009808
    %v995 = vunpack.c.0.s8 %v994
    %v996 = vlaneseq
    %v997 = vshrl.u32 %v996, 7
    %v998 = vsub.s32 %v995, %v997
    %v999 = vrot.slane %v992, %v998
    %v1000 = vcombine.low %v920, %v921
    %v1002 = vunpack.c.l.s4 1983009808
    %v1003 = vunpack.c.0.s8 %v1002
    %v1004 = vlaneseq
    %v1005 = vshrl.u32 %v1004, 7
    %v1006 = vsub.s32 %v1003, %v1005
    %v1007 = vrot.slane %v1000, %v1006
    %v1008 = vcombine.low %v912, %v919
    %v1010 = vunpack.c.l.s4 1983009808
    %v1011 = vunpack.c.0.s8 %v1010
    %v1012 = vlaneseq
    %v1013 = vshrl.u32 %v1012, 7
    %v1014 = vsub.s32 %v1011, %v1013
    %v1015 = vrot.slane %v1008, %v1014
    %v1016 = vcombine.low %v922, %v923
    %v1018 = vunpack.c.l.s4 1983009808
    %v1019 = vunpack.c.0.s8 %v1018
    %v1020 = vlaneseq
    %v1021 = vshrl.u32 %v1020, 7
    %v1022 = vsub.s32 %v1019, %v1021
    %v1023 = vrot.slane %v1016, %v1022
    %v1024 = vcombine.low %v999, %v1007
    %v1025 = vcombine.high %v999, %v1007
    %v1027 = vunpack.c.l.s4 1934713408
    %v1028 = vunpack.c.0.s8 %v1027
    %v1029 = vlaneseq
    %v1030 = vshrl.u32 %v1029, 7
    %v1031 = vsub.s32 %v1028, %v1030
    %v1032 = vrot.slane %v1024, %v1031
    %v1034 = vunpack.c.l.s4 1934713408
    %v1035 = vunpack.c.0.s8 %v1034
    %v1036 = vlaneseq
    %v1037 = vshrl.u32 %v1036, 7
    %v1038 = vsub.s32 %v1035, %v1037
    %v1039 = vrot.slane %v1025, %v1038
    %v1040 = vcombine.low %v1015, %v1023
    %v1041 = vcombine.high %v1015, %v1023
    %v1043 = vunpack.c.l.s4 1934713408
    %v1044 = vunpack.c.0.s8 %v1043
    %v1045 = vlaneseq
    %v1046 = vshrl.u32 %v1045, 7
    %v1047 = vsub.s32 %v1044, %v1046
    %v1048 = vrot.slane %v1040, %v1047
    %v1050 = vunpack.c.l.s4 1934713408
    %v1051 = vunpack.c.0.s8 %v1050
    %v1052 = vlaneseq
    %v1053 = vshrl.u32 %v1052, 7
    %v1054 = vsub.s32 %v1051, %v1053
    %v1055 = vrot.slane %v1041, %v1054
    %v1056 = vcombine.low %v1032, %v1048
    %v1057 = vcombine.high %v1032, %v1048
    %v1058 = vcombine.low %v1039, %v1055
    %v1059 = vcombine.high %v1039, %v1055
    %v1060 = vcombine.low %v964, %v971
    %v1062 = vunpack.c.l.s4 1983009808
    %v1063 = vunpack.c.0.s8 %v1062
    %v1064 = vlaneseq
    %v1065 = vshrl.u32 %v1064, 7
    %v1066 = vsub.s32 %v1063, %v1065
    %v1067 = vrot.slane %v1060, %v1066
    %v1068 = vcombine.low %v988, %v989
    %v1070 = vunpack.c.l.s4 1983009808
    %v1071 = vunpack.c.0.s8 %v1070
    %v1072 = vlaneseq
    %v1073 = vshrl.u32 %v1072, 7
    %v1074 = vsub.s32 %v1071, %v1073
    %v1075 = vrot.slane %v1068, %v1074
    %v1076 = vcombine.low %v980, %v987
    %v1078 = vunpack.c.l.s4 1983009808
    %v1079 = vunpack.c.0.s8 %v1078
    %v1080 = vlaneseq
    %v1081 = vshrl.u32 %v1080, 7
    %v1082 = vsub.s32 %v1079, %v1081
    %v1083 = vrot.slane %v1076, %v1082
    %v1084 = vcombine.low %v990, %v991
    %v1086 = vunpack.c.l.s4 1983009808
    %v1087 = vunpack.c.0.s8 %v1086
    %v1088 = vlaneseq
    %v1089 = vshrl.u32 %v1088, 7
    %v1090 = vsub.s32 %v1087, %v1089
    %v1091 = vrot.slane %v1084, %v1090
    %v1092 = vcombine.low %v1067, %v1075
    %v1093 = vcombine.high %v1067, %v1075
    %v1095 = vunpack.c.l.s4 1934713408
    %v1096 = vunpack.c.0.s8 %v1095
    %v1097 = vlaneseq
    %v1098 = vshrl.u32 %v1097, 7
    %v1099 = vsub.s32 %v1096, %v1098
    %v1100 = vrot.slane %v1092, %v1099
    %v1102 = vunpack.c.l.s4 1934713408
    %v1103 = vunpack.c.0.s8 %v1102
    %v1104 = vlaneseq
    %v1105 = vshrl.u32 %v1104, 7
    %v1106 = vsub.s32 %v1103, %v1105
    %v1107 = vrot.slane %v1093, %v1106
    %v1108 = vcombine.low %v1083, %v1091
    %v1109 = vcombine.high %v1083, %v1091
    %v1111 = vunpack.c.l.s4 1934713408
    %v1112 = vunpack.c.0.s8 %v1111
    %v1113 = vlaneseq
    %v1114 = vshrl.u32 %v1113, 7
    %v1115 = vsub.s32 %v1112, %v1114
    %v1116 = vrot.slane %v1108, %v1115
    %v1118 = vunpack.c.l.s4 1934713408
    %v1119 = vunpack.c.0.s8 %v1118
    %v1120 = vlaneseq
    %v1121 = vshrl.u32 %v1120, 7
    %v1122 = vsub.s32 %v1119, %v1121
    %v1123 = vrot.slane %v1109, %v1122
    %v1124 = vcombine.low %v1100, %v1116
    %v1125 = vcombine.high %v1100, %v1116
    %v1126 = vcombine.low %v1107, %v1123
    %v1127 = vcombine.high %v1107, %v1123
    %v1128 = vpack.c.bf16 %v1056, %v1056
    %v1129 = vpack.c.bf16 %v1057, %v1057
    %v1130 = vpack.c.bf16 %v1058, %v1058
    %v1131 = vpack.c.bf16 %v1059, %v1059
    %v1132 = vpack.c.bf16 %v1124, %v1124
    %v1133 = vpack.c.bf16 %v1125, %v1125
    %v1134 = vpack.c.bf16 %v1126, %v1126
    %v1135 = vpack.c.bf16 %v1127, %v1127
    %vm1136 = vcmask 64512
    %v1138 = vsel %vm1136, %v506, 0
    %v1141 = vsel %vm1136, %v824, 0
    %1143 = vmatprep.subr.bf16.mxu0 0
    %1144 = vmatpush1.bf16.xpose.msra.mxu0 0
    %1145 = vmatprep.subr.bf16.mxu0 0
    %1146 = vmatpush1.bf16.xpose.msra.mxu0 0
    %1147 = vmatprep.subr.bf16.mxu0 0
    %1148 = vmatpush1.bf16.xpose.msra.mxu0 0
    %1149 = vmatprep.subr.bf16.mxu0 0
    %1150 = vmatpush1.bf16.xpose.msra.mxu0 0
    %1151 = vmatprep.subr.bf16.mxu0 0
    %1152 = vmatpush1.bf16.xpose.msra.mxu0 0
    %1153 = vmatprep.subr.bf16.mxu0 0
    %1154 = vmatpush1.bf16.xpose.msra.mxu0 0
    %1155 = vmatprep.subr.bf16.mxu0 0
    %1156 = vmatpush1.bf16.xpose.msra.mxu0 0
    %1157 = vmatprep.subr.bf16.mxu0 0
    %1158 = vmatpush1.bf16.xpose.msra.mxu0 %v1141
    %1159 = vmatprep.subr.bf16.mxu0 0
    %1160 = vmatpush2.bf16.xpose.msra.mxu0 0
    %1161 = vmatprep.subr.bf16.mxu0 0
    %1162 = vmatpush2.bf16.xpose.msra.mxu0 0
    %1163 = vmatprep.subr.bf16.mxu0 0
    %1164 = vmatpush2.bf16.xpose.msra.mxu0 0
    %1165 = vmatprep.subr.bf16.mxu0 0
    %1166 = vmatpush2.bf16.xpose.msra.mxu0 0
    %1167 = vmatprep.subr.bf16.mxu0 0
    %1168 = vmatpush2.bf16.xpose.msra.mxu0 0
    %1169 = vmatprep.subr.bf16.mxu0 0
    %1170 = vmatpush2.bf16.xpose.msra.mxu0 0
    %1171 = vmatprep.subr.bf16.mxu0 0
    %1172 = vmatpush2.bf16.xpose.msra.mxu0 0
    %1173 = vmatprep.subr.bf16.mxu0 0
    %1174 = vmatpush2.bf16.xpose.msra.mxu0 0
    %1175 = vmatprep.mubr.bf16.mxu0 0
    %1176 = vmatmul.mubr.bf16.gmra.mxu0 %v1138
    %v1177 = vpop.f32.mrf.mxu0
    %v1178 = vadd.f32 0.0, %v1177
    %v1179 = vpop.f32.mrf.mxu0
    %v1180 = vpop.f32.mrf.mxu0
    %v1181 = vpop.f32.mrf.mxu0
    %1182 = vdwg.mxu0
    %v1184 = vsel %vm1136, %v507, 0
    %v1187 = vsel %vm1136, %v825, 0
    %1189 = vmatprep.subr.bf16.mxu0 0
    %1190 = vmatpush1.bf16.xpose.msra.mxu0 0
    %1191 = vmatprep.subr.bf16.mxu0 0
    %1192 = vmatpush1.bf16.xpose.msra.mxu0 0
    %1193 = vmatprep.subr.bf16.mxu0 0
    %1194 = vmatpush1.bf16.xpose.msra.mxu0 0
    %1195 = vmatprep.subr.bf16.mxu0 0
    %1196 = vmatpush1.bf16.xpose.msra.mxu0 0
    %1197 = vmatprep.subr.bf16.mxu0 0
    %1198 = vmatpush1.bf16.xpose.msra.mxu0 0
    %1199 = vmatprep.subr.bf16.mxu0 0
    %1200 = vmatpush1.bf16.xpose.msra.mxu0 0
    %1201 = vmatprep.subr.bf16.mxu0 0
    %1202 = vmatpush1.bf16.xpose.msra.mxu0 0
    %1203 = vmatprep.subr.bf16.mxu0 0
    %1204 = vmatpush1.bf16.xpose.msra.mxu0 %v1187
    %1205 = vmatprep.subr.bf16.mxu0 0
    %1206 = vmatpush2.bf16.xpose.msra.mxu0 0
    %1207 = vmatprep.subr.bf16.mxu0 0
    %1208 = vmatpush2.bf16.xpose.msra.mxu0 0
    %1209 = vmatprep.subr.bf16.mxu0 0
    %1210 = vmatpush2.bf16.xpose.msra.mxu0 0
    %1211 = vmatprep.subr.bf16.mxu0 0
    %1212 = vmatpush2.bf16.xpose.msra.mxu0 0
    %1213 = vmatprep.subr.bf16.mxu0 0
    %1214 = vmatpush2.bf16.xpose.msra.mxu0 0
    %1215 = vmatprep.subr.bf16.mxu0 0
    %1216 = vmatpush2.bf16.xpose.msra.mxu0 0
    %1217 = vmatprep.subr.bf16.mxu0 0
    %1218 = vmatpush2.bf16.xpose.msra.mxu0 0
    %1219 = vmatprep.subr.bf16.mxu0 0
    %1220 = vmatpush2.bf16.xpose.msra.mxu0 0
    %1221 = vmatprep.mubr.bf16.mxu0 0
    %1222 = vmatmul.mubr.bf16.gmra.mxu0 %v1184
    %v1223 = vpop.f32.mrf.mxu0
    %v1224 = vadd.f32 0.0, %v1223
    %v1225 = vpop.f32.mrf.mxu0
    %v1226 = vpop.f32.mrf.mxu0
    %v1227 = vpop.f32.mrf.mxu0
    %1228 = vdwg.mxu0
    %v1230 = vsel %vm1136, %v508, 0
    %v1233 = vsel %vm1136, %v826, 0
    %1235 = vmatprep.subr.bf16.mxu0 0
    %1236 = vmatpush1.bf16.xpose.msra.mxu0 0
    %1237 = vmatprep.subr.bf16.mxu0 0
    %1238 = vmatpush1.bf16.xpose.msra.mxu0 0
    %1239 = vmatprep.subr.bf16.mxu0 0
    %1240 = vmatpush1.bf16.xpose.msra.mxu0 0
    %1241 = vmatprep.subr.bf16.mxu0 0
    %1242 = vmatpush1.bf16.xpose.msra.mxu0 0
    %1243 = vmatprep.subr.bf16.mxu0 0
    %1244 = vmatpush1.bf16.xpose.msra.mxu0 0
    %1245 = vmatprep.subr.bf16.mxu0 0
    %1246 = vmatpush1.bf16.xpose.msra.mxu0 0
    %1247 = vmatprep.subr.bf16.mxu0 0
    %1248 = vmatpush1.bf16.xpose.msra.mxu0 0
    %1249 = vmatprep.subr.bf16.mxu0 0
    %1250 = vmatpush1.bf16.xpose.msra.mxu0 %v1233
    %1251 = vmatprep.subr.bf16.mxu0 0
    %1252 = vmatpush2.bf16.xpose.msra.mxu0 0
    %1253 = vmatprep.subr.bf16.mxu0 0
    %1254 = vmatpush2.bf16.xpose.msra.mxu0 0
    %1255 = vmatprep.subr.bf16.mxu0 0
    %1256 = vmatpush2.bf16.xpose.msra.mxu0 0
    %1257 = vmatprep.subr.bf16.mxu0 0
    %1258 = vmatpush2.bf16.xpose.msra.mxu0 0
    %1259 = vmatprep.subr.bf16.mxu0 0
    %1260 = vmatpush2.bf16.xpose.msra.mxu0 0
    %1261 = vmatprep.subr.bf16.mxu0 0
    %1262 = vmatpush2.bf16.xpose.msra.mxu0 0
    %1263 = vmatprep.subr.bf16.mxu0 0
    %1264 = vmatpush2.bf16.xpose.msra.mxu0 0
    %1265 = vmatprep.subr.bf16.mxu0 0
    %1266 = vmatpush2.bf16.xpose.msra.mxu0 0
    %1267 = vmatprep.mubr.bf16.mxu0 0
    %1268 = vmatmul.mubr.bf16.gmra.mxu0 %v1230
    %v1269 = vpop.f32.mrf.mxu0
    %v1270 = vadd.f32 0.0, %v1269
    %v1271 = vpop.f32.mrf.mxu0
    %v1272 = vpop.f32.mrf.mxu0
    %v1273 = vpop.f32.mrf.mxu0
    %1274 = vdwg.mxu0
    %v1276 = vsel %vm1136, %v509, 0
    %v1279 = vsel %vm1136, %v827, 0
    %1281 = vmatprep.subr.bf16.mxu0 0
    %1282 = vmatpush1.bf16.xpose.msra.mxu0 0
    %1283 = vmatprep.subr.bf16.mxu0 0
    %1284 = vmatpush1.bf16.xpose.msra.mxu0 0
    %1285 = vmatprep.subr.bf16.mxu0 0
    %1286 = vmatpush1.bf16.xpose.msra.mxu0 0
    %1287 = vmatprep.subr.bf16.mxu0 0
    %1288 = vmatpush1.bf16.xpose.msra.mxu0 0
    %1289 = vmatprep.subr.bf16.mxu0 0
    %1290 = vmatpush1.bf16.xpose.msra.mxu0 0
    %1291 = vmatprep.subr.bf16.mxu0 0
    %1292 = vmatpush1.bf16.xpose.msra.mxu0 0
    %1293 = vmatprep.subr.bf16.mxu0 0
    %1294 = vmatpush1.bf16.xpose.msra.mxu0 0
    %1295 = vmatprep.subr.bf16.mxu0 0
    %1296 = vmatpush1.bf16.xpose.msra.mxu0 %v1279
    %1297 = vmatprep.subr.bf16.mxu0 0
    %1298 = vmatpush2.bf16.xpose.msra.mxu0 0
    %1299 = vmatprep.subr.bf16.mxu0 0
    %1300 = vmatpush2.bf16.xpose.msra.mxu0 0
    %1301 = vmatprep.subr.bf16.mxu0 0
    %1302 = vmatpush2.bf16.xpose.msra.mxu0 0
    %1303 = vmatprep.subr.bf16.mxu0 0
    %1304 = vmatpush2.bf16.xpose.msra.mxu0 0
    %1305 = vmatprep.subr.bf16.mxu0 0
    %1306 = vmatpush2.bf16.xpose.msra.mxu0 0
    %1307 = vmatprep.subr.bf16.mxu0 0
    %1308 = vmatpush2.bf16.xpose.msra.mxu0 0
    %1309 = vmatprep.subr.bf16.mxu0 0
    %1310 = vmatpush2.bf16.xpose.msra.mxu0 0
    %1311 = vmatprep.subr.bf16.mxu0 0
    %1312 = vmatpush2.bf16.xpose.msra.mxu0 0
    %1313 = vmatprep.mubr.bf16.mxu0 0
    %1314 = vmatmul.mubr.bf16.gmra.mxu0 %v1276
    %v1315 = vpop.f32.mrf.mxu0
    %v1316 = vadd.f32 0.0, %v1315
    %v1317 = vpop.f32.mrf.mxu0
    %v1318 = vpop.f32.mrf.mxu0
    %v1319 = vpop.f32.mrf.mxu0
    %1320 = vdwg.mxu0
    %v1322 = vsel %vm1136, %v510, 0
    %v1325 = vsel %vm1136, %v828, 0
    %1327 = vmatprep.subr.bf16.mxu0 0
    %1328 = vmatpush1.bf16.xpose.msra.mxu0 0
    %1329 = vmatprep.subr.bf16.mxu0 0
    %1330 = vmatpush1.bf16.xpose.msra.mxu0 0
    %1331 = vmatprep.subr.bf16.mxu0 0
    %1332 = vmatpush1.bf16.xpose.msra.mxu0 0
    %1333 = vmatprep.subr.bf16.mxu0 0
    %1334 = vmatpush1.bf16.xpose.msra.mxu0 0
    %1335 = vmatprep.subr.bf16.mxu0 0
    %1336 = vmatpush1.bf16.xpose.msra.mxu0 0
    %1337 = vmatprep.subr.bf16.mxu0 0
    %1338 = vmatpush1.bf16.xpose.msra.mxu0 0
    %1339 = vmatprep.subr.bf16.mxu0 0
    %1340 = vmatpush1.bf16.xpose.msra.mxu0 0
    %1341 = vmatprep.subr.bf16.mxu0 0
    %1342 = vmatpush1.bf16.xpose.msra.mxu0 %v1325
    %1343 = vmatprep.subr.bf16.mxu0 0
    %1344 = vmatpush2.bf16.xpose.msra.mxu0 0
    %1345 = vmatprep.subr.bf16.mxu0 0
    %1346 = vmatpush2.bf16.xpose.msra.mxu0 0
    %1347 = vmatprep.subr.bf16.mxu0 0
    %1348 = vmatpush2.bf16.xpose.msra.mxu0 0
    %1349 = vmatprep.subr.bf16.mxu0 0
    %1350 = vmatpush2.bf16.xpose.msra.mxu0 0
    %1351 = vmatprep.subr.bf16.mxu0 0
    %1352 = vmatpush2.bf16.xpose.msra.mxu0 0
    %1353 = vmatprep.subr.bf16.mxu0 0
    %1354 = vmatpush2.bf16.xpose.msra.mxu0 0
    %1355 = vmatprep.subr.bf16.mxu0 0
    %1356 = vmatpush2.bf16.xpose.msra.mxu0 0
    %1357 = vmatprep.subr.bf16.mxu0 0
    %1358 = vmatpush2.bf16.xpose.msra.mxu0 0
    %1359 = vmatprep.mubr.bf16.mxu0 0
    %1360 = vmatmul.mubr.bf16.gmra.mxu0 %v1322
    %v1361 = vpop.f32.mrf.mxu0
    %v1362 = vadd.f32 0.0, %v1361
    %v1363 = vpop.f32.mrf.mxu0
    %v1364 = vpop.f32.mrf.mxu0
    %v1365 = vpop.f32.mrf.mxu0
    %1366 = vdwg.mxu0
    %v1368 = vsel %vm1136, %v511, 0
    %v1371 = vsel %vm1136, %v829, 0
    %1373 = vmatprep.subr.bf16.mxu0 0
    %1374 = vmatpush1.bf16.xpose.msra.mxu0 0
    %1375 = vmatprep.subr.bf16.mxu0 0
    %1376 = vmatpush1.bf16.xpose.msra.mxu0 0
    %1377 = vmatprep.subr.bf16.mxu0 0
    %1378 = vmatpush1.bf16.xpose.msra.mxu0 0
    %1379 = vmatprep.subr.bf16.mxu0 0
    %1380 = vmatpush1.bf16.xpose.msra.mxu0 0
    %1381 = vmatprep.subr.bf16.mxu0 0
    %1382 = vmatpush1.bf16.xpose.msra.mxu0 0
    %1383 = vmatprep.subr.bf16.mxu0 0
    %1384 = vmatpush1.bf16.xpose.msra.mxu0 0
    %1385 = vmatprep.subr.bf16.mxu0 0
    %1386 = vmatpush1.bf16.xpose.msra.mxu0 0
    %1387 = vmatprep.subr.bf16.mxu0 0
    %1388 = vmatpush1.bf16.xpose.msra.mxu0 %v1371
    %1389 = vmatprep.subr.bf16.mxu0 0
    %1390 = vmatpush2.bf16.xpose.msra.mxu0 0
    %1391 = vmatprep.subr.bf16.mxu0 0
    %1392 = vmatpush2.bf16.xpose.msra.mxu0 0
    %1393 = vmatprep.subr.bf16.mxu0 0
    %1394 = vmatpush2.bf16.xpose.msra.mxu0 0
    %1395 = vmatprep.subr.bf16.mxu0 0
    %1396 = vmatpush2.bf16.xpose.msra.mxu0 0
    %1397 = vmatprep.subr.bf16.mxu0 0
    %1398 = vmatpush2.bf16.xpose.msra.mxu0 0
    %1399 = vmatprep.subr.bf16.mxu0 0
    %1400 = vmatpush2.bf16.xpose.msra.mxu0 0
    %1401 = vmatprep.subr.bf16.mxu0 0
    %1402 = vmatpush2.bf16.xpose.msra.mxu0 0
    %1403 = vmatprep.subr.bf16.mxu0 0
    %1404 = vmatpush2.bf16.xpose.msra.mxu0 0
    %1405 = vmatprep.mubr.bf16.mxu0 0
    %1406 = vmatmul.mubr.bf16.gmra.mxu0 %v1368
    %v1407 = vpop.f32.mrf.mxu0
    %v1408 = vadd.f32 0.0, %v1407
    %v1409 = vpop.f32.mrf.mxu0
    %v1410 = vpop.f32.mrf.mxu0
    %v1411 = vpop.f32.mrf.mxu0
    %1412 = vdwg.mxu0
    %v1414 = vsel %vm1136, %v512, 0
    %v1417 = vsel %vm1136, %v830, 0
    %1419 = vmatprep.subr.bf16.mxu0 0
    %1420 = vmatpush1.bf16.xpose.msra.mxu0 0
    %1421 = vmatprep.subr.bf16.mxu0 0
    %1422 = vmatpush1.bf16.xpose.msra.mxu0 0
    %1423 = vmatprep.subr.bf16.mxu0 0
    %1424 = vmatpush1.bf16.xpose.msra.mxu0 0
    %1425 = vmatprep.subr.bf16.mxu0 0
    %1426 = vmatpush1.bf16.xpose.msra.mxu0 0
    %1427 = vmatprep.subr.bf16.mxu0 0
    %1428 = vmatpush1.bf16.xpose.msra.mxu0 0
    %1429 = vmatprep.subr.bf16.mxu0 0
    %1430 = vmatpush1.bf16.xpose.msra.mxu0 0
    %1431 = vmatprep.subr.bf16.mxu0 0
    %1432 = vmatpush1.bf16.xpose.msra.mxu0 0
    %1433 = vmatprep.subr.bf16.mxu0 0
    %1434 = vmatpush1.bf16.xpose.msra.mxu0 %v1417
    %1435 = vmatprep.subr.bf16.mxu0 0
    %1436 = vmatpush2.bf16.xpose.msra.mxu0 0
    %1437 = vmatprep.subr.bf16.mxu0 0
    %1438 = vmatpush2.bf16.xpose.msra.mxu0 0
    %1439 = vmatprep.subr.bf16.mxu0 0
    %1440 = vmatpush2.bf16.xpose.msra.mxu0 0
    %1441 = vmatprep.subr.bf16.mxu0 0
    %1442 = vmatpush2.bf16.xpose.msra.mxu0 0
    %1443 = vmatprep.subr.bf16.mxu0 0
    %1444 = vmatpush2.bf16.xpose.msra.mxu0 0
    %1445 = vmatprep.subr.bf16.mxu0 0
    %1446 = vmatpush2.bf16.xpose.msra.mxu0 0
    %1447 = vmatprep.subr.bf16.mxu0 0
    %1448 = vmatpush2.bf16.xpose.msra.mxu0 0
    %1449 = vmatprep.subr.bf16.mxu0 0
    %1450 = vmatpush2.bf16.xpose.msra.mxu0 0
    %1451 = vmatprep.mubr.bf16.mxu0 0
    %1452 = vmatmul.mubr.bf16.gmra.mxu0 %v1414
    %v1453 = vpop.f32.mrf.mxu0
    %v1454 = vadd.f32 0.0, %v1453
    %v1455 = vpop.f32.mrf.mxu0
    %v1456 = vpop.f32.mrf.mxu0
    %v1457 = vpop.f32.mrf.mxu0
    %1458 = vdwg.mxu0
    %v1460 = vsel %vm1136, %v513, 0
    %v1463 = vsel %vm1136, %v831, 0
    %1465 = vmatprep.subr.bf16.mxu0 0
    %1466 = vmatpush1.bf16.xpose.msra.mxu0 0
    %1467 = vmatprep.subr.bf16.mxu0 0
    %1468 = vmatpush1.bf16.xpose.msra.mxu0 0
    %1469 = vmatprep.subr.bf16.mxu0 0
    %1470 = vmatpush1.bf16.xpose.msra.mxu0 0
    %1471 = vmatprep.subr.bf16.mxu0 0
    %1472 = vmatpush1.bf16.xpose.msra.mxu0 0
    %1473 = vmatprep.subr.bf16.mxu0 0
    %1474 = vmatpush1.bf16.xpose.msra.mxu0 0
    %1475 = vmatprep.subr.bf16.mxu0 0
    %1476 = vmatpush1.bf16.xpose.msra.mxu0 0
    %1477 = vmatprep.subr.bf16.mxu0 0
    %1478 = vmatpush1.bf16.xpose.msra.mxu0 0
    %1479 = vmatprep.subr.bf16.mxu0 0
    %1480 = vmatpush1.bf16.xpose.msra.mxu0 %v1463
    %1481 = vmatprep.subr.bf16.mxu0 0
    %1482 = vmatpush2.bf16.xpose.msra.mxu0 0
    %1483 = vmatprep.subr.bf16.mxu0 0
    %1484 = vmatpush2.bf16.xpose.msra.mxu0 0
    %1485 = vmatprep.subr.bf16.mxu0 0
    %1486 = vmatpush2.bf16.xpose.msra.mxu0 0
    %1487 = vmatprep.subr.bf16.mxu0 0
    %1488 = vmatpush2.bf16.xpose.msra.mxu0 0
    %1489 = vmatprep.subr.bf16.mxu0 0
    %1490 = vmatpush2.bf16.xpose.msra.mxu0 0
    %1491 = vmatprep.subr.bf16.mxu0 0
    %1492 = vmatpush2.bf16.xpose.msra.mxu0 0
    %1493 = vmatprep.subr.bf16.mxu0 0
    %1494 = vmatpush2.bf16.xpose.msra.mxu0 0
    %1495 = vmatprep.subr.bf16.mxu0 0
    %1496 = vmatpush2.bf16.xpose.msra.mxu0 0
    %1497 = vmatprep.mubr.bf16.mxu0 0
    %1498 = vmatmul.mubr.bf16.gmra.mxu0 %v1460
    %v1499 = vpop.f32.mrf.mxu0
    %v1500 = vadd.f32 0.0, %v1499
    %v1501 = vpop.f32.mrf.mxu0
    %v1502 = vpop.f32.mrf.mxu0
    %v1503 = vpop.f32.mrf.mxu0
    %1504 = vdwg.mxu0
    %v1505 = vsel %vm1136, %v1178, -inf
    %1506 = vmax.xlane.f32.xlu0 %v1505
    %v1507 = vpop.xlane.xlu0 %1506
    %v1508 = vsel %vm1136, %v1224, -inf
    %1509 = vmax.xlane.f32.xlu0 %v1508
    %v1510 = vpop.xlane.xlu0 %1509
    %v1511 = vsel %vm1136, %v1270, -inf
    %1512 = vmax.xlane.f32.xlu0 %v1511
    %v1513 = vpop.xlane.xlu0 %1512
    %v1514 = vsel %vm1136, %v1316, -inf
    %1515 = vmax.xlane.f32.xlu0 %v1514
    %v1516 = vpop.xlane.xlu0 %1515
    %v1517 = vsel %vm1136, %v1362, -inf
    %1518 = vmax.xlane.f32.xlu0 %v1517
    %v1519 = vpop.xlane.xlu0 %1518
    %v1520 = vsel %vm1136, %v1408, -inf
    %1521 = vmax.xlane.f32.xlu0 %v1520
    %v1522 = vpop.xlane.xlu0 %1521
    %v1523 = vsel %vm1136, %v1454, -inf
    %1524 = vmax.xlane.f32.xlu0 %v1523
    %v1525 = vpop.xlane.xlu0 %1524
    %v1526 = vsel %vm1136, %v1500, -inf
    %1527 = vmax.xlane.f32.xlu0 %v1526
    %v1528 = vpop.xlane.xlu0 %1527
    %v1529 = vsub.f32 %v1178, %v1507
    %v1530 = vsub.f32 %v1224, %v1510
    %v1531 = vsub.f32 %v1270, %v1513
    %v1532 = vsub.f32 %v1316, %v1516
    %v1533 = vsub.f32 %v1362, %v1519
    %v1534 = vsub.f32 %v1408, %v1522
    %v1535 = vsub.f32 %v1454, %v1525
    %v1536 = vsub.f32 %v1500, %v1528
    %v1537 = vmul.f32 %v1529, 1.442695
    %v1538 = vpow.pop %v1537
    %v1539 = vmul.f32 %v1530, 1.442695
    %v1540 = vpow.pop %v1539
    %v1541 = vmul.f32 %v1531, 1.442695
    %v1542 = vpow.pop %v1541
    %v1543 = vmul.f32 %v1532, 1.442695
    %v1544 = vpow.pop %v1543
    %v1545 = vmul.f32 %v1533, 1.442695
    %v1546 = vpow.pop %v1545
    %v1547 = vmul.f32 %v1534, 1.442695
    %v1548 = vpow.pop %v1547
    %v1549 = vmul.f32 %v1535, 1.442695
    %v1550 = vpow.pop %v1549
    %v1551 = vmul.f32 %v1536, 1.442695
    %v1552 = vpow.pop %v1551
    %v1553 = vsel %vm1136, %v1538, 0.0
    %1554 = vadd.xlane.f32.xlu0 %v1553
    %v1555 = vpop.xlane.xlu0 %1554
    %v1556 = vsel %vm1136, %v1540, 0.0
    %1557 = vadd.xlane.f32.xlu0 %v1556
    %v1558 = vpop.xlane.xlu0 %1557
    %v1559 = vsel %vm1136, %v1542, 0.0
    %1560 = vadd.xlane.f32.xlu0 %v1559
    %v1561 = vpop.xlane.xlu0 %1560
    %v1562 = vsel %vm1136, %v1544, 0.0
    %1563 = vadd.xlane.f32.xlu0 %v1562
    %v1564 = vpop.xlane.xlu0 %1563
    %v1565 = vsel %vm1136, %v1546, 0.0
    %1566 = vadd.xlane.f32.xlu0 %v1565
    %v1567 = vpop.xlane.xlu0 %1566
    %v1568 = vsel %vm1136, %v1548, 0.0
    %1569 = vadd.xlane.f32.xlu0 %v1568
    %v1570 = vpop.xlane.xlu0 %1569
    %v1571 = vsel %vm1136, %v1550, 0.0
    %1572 = vadd.xlane.f32.xlu0 %v1571
    %v1573 = vpop.xlane.xlu0 %1572
    %v1574 = vsel %vm1136, %v1552, 0.0
    %1575 = vadd.xlane.f32.xlu0 %v1574
    %v1576 = vpop.xlane.xlu0 %1575
    %v1577 = vrcp.pop %v1555
    %v1578 = vrcp.pop %v1558
    %v1579 = vrcp.pop %v1561
    %v1580 = vrcp.pop %v1564
    %v1581 = vrcp.pop %v1567
    %v1582 = vrcp.pop %v1570
    %v1583 = vrcp.pop %v1573
    %v1584 = vrcp.pop %v1576
    %v1585 = vmul.f32 %v1538, %v1577
    %v1586 = vmul.f32 %v1540, %v1578
    %v1587 = vmul.f32 %v1542, %v1579
    %v1588 = vmul.f32 %v1544, %v1580
    %v1589 = vmul.f32 %v1546, %v1581
    %v1590 = vmul.f32 %v1548, %v1582
    %v1591 = vmul.f32 %v1550, %v1583
    %v1592 = vmul.f32 %v1552, %v1584
    %v1593 = vpack.c.bf16 %v1585, %v1585
    %v1594 = vpack.c.bf16 %v1586, %v1586
    %v1595 = vpack.c.bf16 %v1587, %v1587
    %v1596 = vpack.c.bf16 %v1588, %v1588
    %v1597 = vpack.c.bf16 %v1589, %v1589
    %v1598 = vpack.c.bf16 %v1590, %v1590
    %v1599 = vpack.c.bf16 %v1591, %v1591
    %v1600 = vpack.c.bf16 %v1592, %v1592
    %v1602 = vsel %vm1136, %v1593, 0
    %vm1604 = vcmask 1043456
    %v1606 = vsel %vm1604, %v1128, 0
    %1608 = vmatprep.subr.bf16.mxu0 0
    %1609 = vmatpush1.bf16.msra.mxu0 0
    %1610 = vmatprep.subr.bf16.mxu0 0
    %1611 = vmatpush1.bf16.msra.mxu0 0
    %1612 = vmatprep.subr.bf16.mxu0 0
    %1613 = vmatpush1.bf16.msra.mxu0 0
    %1614 = vmatprep.subr.bf16.mxu0 0
    %1615 = vmatpush1.bf16.msra.mxu0 0
    %1616 = vmatprep.subr.bf16.mxu0 0
    %1617 = vmatpush1.bf16.msra.mxu0 0
    %1618 = vmatprep.subr.bf16.mxu0 0
    %1619 = vmatpush1.bf16.msra.mxu0 0
    %1620 = vmatprep.subr.bf16.mxu0 0
    %1621 = vmatpush1.bf16.msra.mxu0 0
    %1622 = vmatprep.subr.bf16.mxu0 0
    %1623 = vmatpush1.bf16.msra.mxu0 %v1606
    %1624 = vmatprep.subr.bf16.mxu0 0
    %1625 = vmatpush2.bf16.msra.mxu0 0
    %1626 = vmatprep.subr.bf16.mxu0 0
    %1627 = vmatpush2.bf16.msra.mxu0 0
    %1628 = vmatprep.subr.bf16.mxu0 0
    %1629 = vmatpush2.bf16.msra.mxu0 0
    %1630 = vmatprep.subr.bf16.mxu0 0
    %1631 = vmatpush2.bf16.msra.mxu0 0
    %1632 = vmatprep.subr.bf16.mxu0 0
    %1633 = vmatpush2.bf16.msra.mxu0 0
    %1634 = vmatprep.subr.bf16.mxu0 0
    %1635 = vmatpush2.bf16.msra.mxu0 0
    %1636 = vmatprep.subr.bf16.mxu0 0
    %1637 = vmatpush2.bf16.msra.mxu0 0
    %1638 = vmatprep.subr.bf16.mxu0 0
    %1639 = vmatpush2.bf16.msra.mxu0 0
    %1640 = vmatprep.mubr.bf16.mxu0 0
    %1641 = vmatmul.mubr.bf16.gmra.mxu0 %v1602
    %v1642 = vpop.f32.mrf.mxu0
    %v1643 = vadd.f32 0.0, %v1642
    %v1644 = vpop.f32.mrf.mxu0
    %v1645 = vpop.f32.mrf.mxu0
    %v1646 = vpop.f32.mrf.mxu0
    %1647 = vdwg.mxu0
    %v1649 = vsel %vm1136, %v1594, 0
    %v1652 = vsel %vm1604, %v1129, 0
    %1654 = vmatprep.subr.bf16.mxu0 0
    %1655 = vmatpush1.bf16.msra.mxu0 0
    %1656 = vmatprep.subr.bf16.mxu0 0
    %1657 = vmatpush1.bf16.msra.mxu0 0
    %1658 = vmatprep.subr.bf16.mxu0 0
    %1659 = vmatpush1.bf16.msra.mxu0 0
    %1660 = vmatprep.subr.bf16.mxu0 0
    %1661 = vmatpush1.bf16.msra.mxu0 0
    %1662 = vmatprep.subr.bf16.mxu0 0
    %1663 = vmatpush1.bf16.msra.mxu0 0
    %1664 = vmatprep.subr.bf16.mxu0 0
    %1665 = vmatpush1.bf16.msra.mxu0 0
    %1666 = vmatprep.subr.bf16.mxu0 0
    %1667 = vmatpush1.bf16.msra.mxu0 0
    %1668 = vmatprep.subr.bf16.mxu0 0
    %1669 = vmatpush1.bf16.msra.mxu0 %v1652
    %1670 = vmatprep.subr.bf16.mxu0 0
    %1671 = vmatpush2.bf16.msra.mxu0 0
    %1672 = vmatprep.subr.bf16.mxu0 0
    %1673 = vmatpush2.bf16.msra.mxu0 0
    %1674 = vmatprep.subr.bf16.mxu0 0
    %1675 = vmatpush2.bf16.msra.mxu0 0
    %1676 = vmatprep.subr.bf16.mxu0 0
    %1677 = vmatpush2.bf16.msra.mxu0 0
    %1678 = vmatprep.subr.bf16.mxu0 0
    %1679 = vmatpush2.bf16.msra.mxu0 0
    %1680 = vmatprep.subr.bf16.mxu0 0
    %1681 = vmatpush2.bf16.msra.mxu0 0
    %1682 = vmatprep.subr.bf16.mxu0 0
    %1683 = vmatpush2.bf16.msra.mxu0 0
    %1684 = vmatprep.subr.bf16.mxu0 0
    %1685 = vmatpush2.bf16.msra.mxu0 0
    %1686 = vmatprep.mubr.bf16.mxu0 0
    %1687 = vmatmul.mubr.bf16.gmra.mxu0 %v1649
    %v1688 = vpop.f32.mrf.mxu0
    %v1689 = vadd.f32 0.0, %v1688
    %v1690 = vpop.f32.mrf.mxu0
    %v1691 = vpop.f32.mrf.mxu0
    %v1692 = vpop.f32.mrf.mxu0
    %1693 = vdwg.mxu0
    %v1695 = vsel %vm1136, %v1595, 0
    %v1698 = vsel %vm1604, %v1130, 0
    %1700 = vmatprep.subr.bf16.mxu0 0
    %1701 = vmatpush1.bf16.msra.mxu0 0
    %1702 = vmatprep.subr.bf16.mxu0 0
    %1703 = vmatpush1.bf16.msra.mxu0 0
    %1704 = vmatprep.subr.bf16.mxu0 0
    %1705 = vmatpush1.bf16.msra.mxu0 0
    %1706 = vmatprep.subr.bf16.mxu0 0
    %1707 = vmatpush1.bf16.msra.mxu0 0
    %1708 = vmatprep.subr.bf16.mxu0 0
    %1709 = vmatpush1.bf16.msra.mxu0 0
    %1710 = vmatprep.subr.bf16.mxu0 0
    %1711 = vmatpush1.bf16.msra.mxu0 0
    %1712 = vmatprep.subr.bf16.mxu0 0
    %1713 = vmatpush1.bf16.msra.mxu0 0
    %1714 = vmatprep.subr.bf16.mxu0 0
    %1715 = vmatpush1.bf16.msra.mxu0 %v1698
    %1716 = vmatprep.subr.bf16.mxu0 0
    %1717 = vmatpush2.bf16.msra.mxu0 0
    %1718 = vmatprep.subr.bf16.mxu0 0
    %1719 = vmatpush2.bf16.msra.mxu0 0
    %1720 = vmatprep.subr.bf16.mxu0 0
    %1721 = vmatpush2.bf16.msra.mxu0 0
    %1722 = vmatprep.subr.bf16.mxu0 0
    %1723 = vmatpush2.bf16.msra.mxu0 0
    %1724 = vmatprep.subr.bf16.mxu0 0
    %1725 = vmatpush2.bf16.msra.mxu0 0
    %1726 = vmatprep.subr.bf16.mxu0 0
    %1727 = vmatpush2.bf16.msra.mxu0 0
    %1728 = vmatprep.subr.bf16.mxu0 0
    %1729 = vmatpush2.bf16.msra.mxu0 0
    %1730 = vmatprep.subr.bf16.mxu0 0
    %1731 = vmatpush2.bf16.msra.mxu0 0
    %1732 = vmatprep.mubr.bf16.mxu0 0
    %1733 = vmatmul.mubr.bf16.gmra.mxu0 %v1695
    %v1734 = vpop.f32.mrf.mxu0
    %v1735 = vadd.f32 0.0, %v1734
    %v1736 = vpop.f32.mrf.mxu0
    %v1737 = vpop.f32.mrf.mxu0
    %v1738 = vpop.f32.mrf.mxu0
    %1739 = vdwg.mxu0
    %v1741 = vsel %vm1136, %v1596, 0
    %v1744 = vsel %vm1604, %v1131, 0
    %1746 = vmatprep.subr.bf16.mxu0 0
    %1747 = vmatpush1.bf16.msra.mxu0 0
    %1748 = vmatprep.subr.bf16.mxu0 0
    %1749 = vmatpush1.bf16.msra.mxu0 0
    %1750 = vmatprep.subr.bf16.mxu0 0
    %1751 = vmatpush1.bf16.msra.mxu0 0
    %1752 = vmatprep.subr.bf16.mxu0 0
    %1753 = vmatpush1.bf16.msra.mxu0 0
    %1754 = vmatprep.subr.bf16.mxu0 0
    %1755 = vmatpush1.bf16.msra.mxu0 0
    %1756 = vmatprep.subr.bf16.mxu0 0
    %1757 = vmatpush1.bf16.msra.mxu0 0
    %1758 = vmatprep.subr.bf16.mxu0 0
    %1759 = vmatpush1.bf16.msra.mxu0 0
    %1760 = vmatprep.subr.bf16.mxu0 0
    %1761 = vmatpush1.bf16.msra.mxu0 %v1744
    %1762 = vmatprep.subr.bf16.mxu0 0
    %1763 = vmatpush2.bf16.msra.mxu0 0
    %1764 = vmatprep.subr.bf16.mxu0 0
    %1765 = vmatpush2.bf16.msra.mxu0 0
    %1766 = vmatprep.subr.bf16.mxu0 0
    %1767 = vmatpush2.bf16.msra.mxu0 0
    %1768 = vmatprep.subr.bf16.mxu0 0
    %1769 = vmatpush2.bf16.msra.mxu0 0
    %1770 = vmatprep.subr.bf16.mxu0 0
    %1771 = vmatpush2.bf16.msra.mxu0 0
    %1772 = vmatprep.subr.bf16.mxu0 0
    %1773 = vmatpush2.bf16.msra.mxu0 0
    %1774 = vmatprep.subr.bf16.mxu0 0
    %1775 = vmatpush2.bf16.msra.mxu0 0
    %1776 = vmatprep.subr.bf16.mxu0 0
    %1777 = vmatpush2.bf16.msra.mxu0 0
    %1778 = vmatprep.mubr.bf16.mxu0 0
    %1779 = vmatmul.mubr.bf16.gmra.mxu0 %v1741
    %v1780 = vpop.f32.mrf.mxu0
    %v1781 = vadd.f32 0.0, %v1780
    %v1782 = vpop.f32.mrf.mxu0
    %v1783 = vpop.f32.mrf.mxu0
    %v1784 = vpop.f32.mrf.mxu0
    %1785 = vdwg.mxu0
    %v1787 = vsel %vm1136, %v1597, 0
    %v1790 = vsel %vm1604, %v1132, 0
    %1792 = vmatprep.subr.bf16.mxu0 0
    %1793 = vmatpush1.bf16.msra.mxu0 0
    %1794 = vmatprep.subr.bf16.mxu0 0
    %1795 = vmatpush1.bf16.msra.mxu0 0
    %1796 = vmatprep.subr.bf16.mxu0 0
    %1797 = vmatpush1.bf16.msra.mxu0 0
    %1798 = vmatprep.subr.bf16.mxu0 0
    %1799 = vmatpush1.bf16.msra.mxu0 0
    %1800 = vmatprep.subr.bf16.mxu0 0
    %1801 = vmatpush1.bf16.msra.mxu0 0
    %1802 = vmatprep.subr.bf16.mxu0 0
    %1803 = vmatpush1.bf16.msra.mxu0 0
    %1804 = vmatprep.subr.bf16.mxu0 0
    %1805 = vmatpush1.bf16.msra.mxu0 0
    %1806 = vmatprep.subr.bf16.mxu0 0
    %1807 = vmatpush1.bf16.msra.mxu0 %v1790
    %1808 = vmatprep.subr.bf16.mxu0 0
    %1809 = vmatpush2.bf16.msra.mxu0 0
    %1810 = vmatprep.subr.bf16.mxu0 0
    %1811 = vmatpush2.bf16.msra.mxu0 0
    %1812 = vmatprep.subr.bf16.mxu0 0
    %1813 = vmatpush2.bf16.msra.mxu0 0
    %1814 = vmatprep.subr.bf16.mxu0 0
    %1815 = vmatpush2.bf16.msra.mxu0 0
    %1816 = vmatprep.subr.bf16.mxu0 0
    %1817 = vmatpush2.bf16.msra.mxu0 0
    %1818 = vmatprep.subr.bf16.mxu0 0
    %1819 = vmatpush2.bf16.msra.mxu0 0
    %1820 = vmatprep.subr.bf16.mxu0 0
    %1821 = vmatpush2.bf16.msra.mxu0 0
    %1822 = vmatprep.subr.bf16.mxu0 0
    %1823 = vmatpush2.bf16.msra.mxu0 0
    %1824 = vmatprep.mubr.bf16.mxu0 0
    %1825 = vmatmul.mubr.bf16.gmra.mxu0 %v1787
    %v1826 = vpop.f32.mrf.mxu0
    %v1827 = vadd.f32 0.0, %v1826
    %v1828 = vpop.f32.mrf.mxu0
    %v1829 = vpop.f32.mrf.mxu0
    %v1830 = vpop.f32.mrf.mxu0
    %1831 = vdwg.mxu0
    %v1833 = vsel %vm1136, %v1598, 0
    %v1836 = vsel %vm1604, %v1133, 0
    %1838 = vmatprep.subr.bf16.mxu0 0
    %1839 = vmatpush1.bf16.msra.mxu0 0
    %1840 = vmatprep.subr.bf16.mxu0 0
    %1841 = vmatpush1.bf16.msra.mxu0 0
    %1842 = vmatprep.subr.bf16.mxu0 0
    %1843 = vmatpush1.bf16.msra.mxu0 0
    %1844 = vmatprep.subr.bf16.mxu0 0
    %1845 = vmatpush1.bf16.msra.mxu0 0
    %1846 = vmatprep.subr.bf16.mxu0 0
    %1847 = vmatpush1.bf16.msra.mxu0 0
    %1848 = vmatprep.subr.bf16.mxu0 0
    %1849 = vmatpush1.bf16.msra.mxu0 0
    %1850 = vmatprep.subr.bf16.mxu0 0
    %1851 = vmatpush1.bf16.msra.mxu0 0
    %1852 = vmatprep.subr.bf16.mxu0 0
    %1853 = vmatpush1.bf16.msra.mxu0 %v1836
    %1854 = vmatprep.subr.bf16.mxu0 0
    %1855 = vmatpush2.bf16.msra.mxu0 0
    %1856 = vmatprep.subr.bf16.mxu0 0
    %1857 = vmatpush2.bf16.msra.mxu0 0
    %1858 = vmatprep.subr.bf16.mxu0 0
    %1859 = vmatpush2.bf16.msra.mxu0 0
    %1860 = vmatprep.subr.bf16.mxu0 0
    %1861 = vmatpush2.bf16.msra.mxu0 0
    %1862 = vmatprep.subr.bf16.mxu0 0
    %1863 = vmatpush2.bf16.msra.mxu0 0
    %1864 = vmatprep.subr.bf16.mxu0 0
    %1865 = vmatpush2.bf16.msra.mxu0 0
    %1866 = vmatprep.subr.bf16.mxu0 0
    %1867 = vmatpush2.bf16.msra.mxu0 0
    %1868 = vmatprep.subr.bf16.mxu0 0
    %1869 = vmatpush2.bf16.msra.mxu0 0
    %1870 = vmatprep.mubr.bf16.mxu0 0
    %1871 = vmatmul.mubr.bf16.gmra.mxu0 %v1833
    %v1872 = vpop.f32.mrf.mxu0
    %v1873 = vadd.f32 0.0, %v1872
    %v1874 = vpop.f32.mrf.mxu0
    %v1875 = vpop.f32.mrf.mxu0
    %v1876 = vpop.f32.mrf.mxu0
    %1877 = vdwg.mxu0
    %v1879 = vsel %vm1136, %v1599, 0
    %v1882 = vsel %vm1604, %v1134, 0
    %1884 = vmatprep.subr.bf16.mxu0 0
    %1885 = vmatpush1.bf16.msra.mxu0 0
    %1886 = vmatprep.subr.bf16.mxu0 0
    %1887 = vmatpush1.bf16.msra.mxu0 0
    %1888 = vmatprep.subr.bf16.mxu0 0
    %1889 = vmatpush1.bf16.msra.mxu0 0
    %1890 = vmatprep.subr.bf16.mxu0 0
    %1891 = vmatpush1.bf16.msra.mxu0 0
    %1892 = vmatprep.subr.bf16.mxu0 0
    %1893 = vmatpush1.bf16.msra.mxu0 0
    %1894 = vmatprep.subr.bf16.mxu0 0
    %1895 = vmatpush1.bf16.msra.mxu0 0
    %1896 = vmatprep.subr.bf16.mxu0 0
    %1897 = vmatpush1.bf16.msra.mxu0 0
    %1898 = vmatprep.subr.bf16.mxu0 0
    %1899 = vmatpush1.bf16.msra.mxu0 %v1882
    %1900 = vmatprep.subr.bf16.mxu0 0
    %1901 = vmatpush2.bf16.msra.mxu0 0
    %1902 = vmatprep.subr.bf16.mxu0 0
    %1903 = vmatpush2.bf16.msra.mxu0 0
    %1904 = vmatprep.subr.bf16.mxu0 0
    %1905 = vmatpush2.bf16.msra.mxu0 0
    %1906 = vmatprep.subr.bf16.mxu0 0
    %1907 = vmatpush2.bf16.msra.mxu0 0
    %1908 = vmatprep.subr.bf16.mxu0 0
    %1909 = vmatpush2.bf16.msra.mxu0 0
    %1910 = vmatprep.subr.bf16.mxu0 0
    %1911 = vmatpush2.bf16.msra.mxu0 0
    %1912 = vmatprep.subr.bf16.mxu0 0
    %1913 = vmatpush2.bf16.msra.mxu0 0
    %1914 = vmatprep.subr.bf16.mxu0 0
    %1915 = vmatpush2.bf16.msra.mxu0 0
    %1916 = vmatprep.mubr.bf16.mxu0 0
    %1917 = vmatmul.mubr.bf16.gmra.mxu0 %v1879
    %v1918 = vpop.f32.mrf.mxu0
    %v1919 = vadd.f32 0.0, %v1918
    %v1920 = vpop.f32.mrf.mxu0
    %v1921 = vpop.f32.mrf.mxu0
    %v1922 = vpop.f32.mrf.mxu0
    %1923 = vdwg.mxu0
    %v1925 = vsel %vm1136, %v1600, 0
    %v1928 = vsel %vm1604, %v1135, 0
    %1930 = vmatprep.subr.bf16.mxu0 0
    %1931 = vmatpush1.bf16.msra.mxu0 0
    %1932 = vmatprep.subr.bf16.mxu0 0
    %1933 = vmatpush1.bf16.msra.mxu0 0
    %1934 = vmatprep.subr.bf16.mxu0 0
    %1935 = vmatpush1.bf16.msra.mxu0 0
    %1936 = vmatprep.subr.bf16.mxu0 0
    %1937 = vmatpush1.bf16.msra.mxu0 0
    %1938 = vmatprep.subr.bf16.mxu0 0
    %1939 = vmatpush1.bf16.msra.mxu0 0
    %1940 = vmatprep.subr.bf16.mxu0 0
    %1941 = vmatpush1.bf16.msra.mxu0 0
    %1942 = vmatprep.subr.bf16.mxu0 0
    %1943 = vmatpush1.bf16.msra.mxu0 0
    %1944 = vmatprep.subr.bf16.mxu0 0
    %1945 = vmatpush1.bf16.msra.mxu0 %v1928
    %1946 = vmatprep.subr.bf16.mxu0 0
    %1947 = vmatpush2.bf16.msra.mxu0 0
    %1948 = vmatprep.subr.bf16.mxu0 0
    %1949 = vmatpush2.bf16.msra.mxu0 0
    %1950 = vmatprep.subr.bf16.mxu0 0
    %1951 = vmatpush2.bf16.msra.mxu0 0
    %1952 = vmatprep.subr.bf16.mxu0 0
    %1953 = vmatpush2.bf16.msra.mxu0 0
    %1954 = vmatprep.subr.bf16.mxu0 0
    %1955 = vmatpush2.bf16.msra.mxu0 0
    %1956 = vmatprep.subr.bf16.mxu0 0
    %1957 = vmatpush2.bf16.msra.mxu0 0
    %1958 = vmatprep.subr.bf16.mxu0 0
    %1959 = vmatpush2.bf16.msra.mxu0 0
    %1960 = vmatprep.subr.bf16.mxu0 0
    %1961 = vmatpush2.bf16.msra.mxu0 0
    %1962 = vmatprep.mubr.bf16.mxu0 0
    %1963 = vmatmul.mubr.bf16.gmra.mxu0 %v1925
    %v1964 = vpop.f32.mrf.mxu0
    %v1965 = vadd.f32 0.0, %v1964
    %v1966 = vpop.f32.mrf.mxu0
    %v1967 = vpop.f32.mrf.mxu0
    %v1968 = vpop.f32.mrf.mxu0
    %1969 = vdwg.mxu0
    %v1970 = vcombine.low %v1643, %v1735
    %v1971 = vcombine.high %v1643, %v1735
    %v1973 = vunpack.c.l.s4 1983009808
    %v1974 = vunpack.c.0.s8 %v1973
    %v1975 = vlaneseq
    %v1976 = vshrl.u32 %v1975, 7
    %v1977 = vsub.s32 %v1974, %v1976
    %v1978 = vrot.slane %v1970, %v1977
    %v1980 = vunpack.c.l.s4 1983009808
    %v1981 = vunpack.c.0.s8 %v1980
    %v1982 = vlaneseq
    %v1983 = vshrl.u32 %v1982, 7
    %v1984 = vsub.s32 %v1981, %v1983
    %v1985 = vrot.slane %v1971, %v1984
    %v1986 = vcombine.low %v1689, %v1781
    %v1987 = vcombine.high %v1689, %v1781
    %v1989 = vunpack.c.l.s4 1983009808
    %v1990 = vunpack.c.0.s8 %v1989
    %v1991 = vlaneseq
    %v1992 = vshrl.u32 %v1991, 7
    %v1993 = vsub.s32 %v1990, %v1992
    %v1994 = vrot.slane %v1986, %v1993
    %v1996 = vunpack.c.l.s4 1983009808
    %v1997 = vunpack.c.0.s8 %v1996
    %v1998 = vlaneseq
    %v1999 = vshrl.u32 %v1998, 7
    %v2000 = vsub.s32 %v1997, %v1999
    %v2001 = vrot.slane %v1987, %v2000
    %v2002 = vcombine.low %v1978, %v1994
    %v2003 = vcombine.high %v1978, %v1994
    %v2005 = vunpack.c.l.s4 1934713408
    %v2006 = vunpack.c.0.s8 %v2005
    %v2007 = vlaneseq
    %v2008 = vshrl.u32 %v2007, 7
    %v2009 = vsub.s32 %v2006, %v2008
    %v2010 = vrot.slane %v2002, %v2009
    %v2012 = vunpack.c.l.s4 1934713408
    %v2013 = vunpack.c.0.s8 %v2012
    %v2014 = vlaneseq
    %v2015 = vshrl.u32 %v2014, 7
    %v2016 = vsub.s32 %v2013, %v2015
    %v2017 = vrot.slane %v2003, %v2016
    %v2018 = vcombine.low %v1985, %v2001
    %v2019 = vcombine.high %v1985, %v2001
    %v2021 = vunpack.c.l.s4 1934713408
    %v2022 = vunpack.c.0.s8 %v2021
    %v2023 = vlaneseq
    %v2024 = vshrl.u32 %v2023, 7
    %v2025 = vsub.s32 %v2022, %v2024
    %v2026 = vrot.slane %v2018, %v2025
    %v2028 = vunpack.c.l.s4 1934713408
    %v2029 = vunpack.c.0.s8 %v2028
    %v2030 = vlaneseq
    %v2031 = vshrl.u32 %v2030, 7
    %v2032 = vsub.s32 %v2029, %v2031
    %v2033 = vrot.slane %v2019, %v2032
    %v2034 = vcombine.high %v2010, 0.0
    %v2035 = vcombine.high %v2017, 0.0
    %v2036 = vcombine.high %v2026, 0.0
    %v2037 = vcombine.high %v2033, 0.0
    %v2038 = vcombine.low %v1827, %v1919
    %v2039 = vcombine.high %v1827, %v1919
    %v2041 = vunpack.c.l.s4 1983009808
    %v2042 = vunpack.c.0.s8 %v2041
    %v2043 = vlaneseq
    %v2044 = vshrl.u32 %v2043, 7
    %v2045 = vsub.s32 %v2042, %v2044
    %v2046 = vrot.slane %v2038, %v2045
    %v2048 = vunpack.c.l.s4 1983009808
    %v2049 = vunpack.c.0.s8 %v2048
    %v2050 = vlaneseq
    %v2051 = vshrl.u32 %v2050, 7
    %v2052 = vsub.s32 %v2049, %v2051
    %v2053 = vrot.slane %v2039, %v2052
    %v2054 = vcombine.low %v1873, %v1965
    %v2055 = vcombine.high %v1873, %v1965
    %v2057 = vunpack.c.l.s4 1983009808
    %v2058 = vunpack.c.0.s8 %v2057
    %v2059 = vlaneseq
    %v2060 = vshrl.u32 %v2059, 7
    %v2061 = vsub.s32 %v2058, %v2060
    %v2062 = vrot.slane %v2054, %v2061
    %v2064 = vunpack.c.l.s4 1983009808
    %v2065 = vunpack.c.0.s8 %v2064
    %v2066 = vlaneseq
    %v2067 = vshrl.u32 %v2066, 7
    %v2068 = vsub.s32 %v2065, %v2067
    %v2069 = vrot.slane %v2055, %v2068
    %v2070 = vcombine.low %v2046, %v2062
    %v2071 = vcombine.high %v2046, %v2062
    %v2073 = vunpack.c.l.s4 1934713408
    %v2074 = vunpack.c.0.s8 %v2073
    %v2075 = vlaneseq
    %v2076 = vshrl.u32 %v2075, 7
    %v2077 = vsub.s32 %v2074, %v2076
    %v2078 = vrot.slane %v2070, %v2077
    %v2080 = vunpack.c.l.s4 1934713408
    %v2081 = vunpack.c.0.s8 %v2080
    %v2082 = vlaneseq
    %v2083 = vshrl.u32 %v2082, 7
    %v2084 = vsub.s32 %v2081, %v2083
    %v2085 = vrot.slane %v2071, %v2084
    %v2086 = vcombine.low %v2053, %v2069
    %v2087 = vcombine.high %v2053, %v2069
    %v2089 = vunpack.c.l.s4 1934713408
    %v2090 = vunpack.c.0.s8 %v2089
    %v2091 = vlaneseq
    %v2092 = vshrl.u32 %v2091, 7
    %v2093 = vsub.s32 %v2090, %v2092
    %v2094 = vrot.slane %v2086, %v2093
    %v2096 = vunpack.c.l.s4 1934713408
    %v2097 = vunpack.c.0.s8 %v2096
    %v2098 = vlaneseq
    %v2099 = vshrl.u32 %v2098, 7
    %v2100 = vsub.s32 %v2097, %v2099
    %v2101 = vrot.slane %v2087, %v2100
    %v2102 = vcombine.high %v2078, 0.0
    %v2103 = vcombine.high %v2085, 0.0
    %v2104 = vcombine.high %v2094, 0.0
    %v2105 = vcombine.high %v2101, 0.0
    %v2106 = vcombine.low %v2010, %v2017
    %v2108 = vunpack.c.l.s4 1983009808
    %v2109 = vunpack.c.0.s8 %v2108
    %v2110 = vlaneseq
    %v2111 = vshrl.u32 %v2110, 7
    %v2112 = vsub.s32 %v2109, %v2111
    %v2113 = vrot.slane %v2106, %v2112
    %v2114 = vcombine.low %v2034, %v2035
    %v2116 = vunpack.c.l.s4 1983009808
    %v2117 = vunpack.c.0.s8 %v2116
    %v2118 = vlaneseq
    %v2119 = vshrl.u32 %v2118, 7
    %v2120 = vsub.s32 %v2117, %v2119
    %v2121 = vrot.slane %v2114, %v2120
    %v2122 = vcombine.low %v2026, %v2033
    %v2124 = vunpack.c.l.s4 1983009808
    %v2125 = vunpack.c.0.s8 %v2124
    %v2126 = vlaneseq
    %v2127 = vshrl.u32 %v2126, 7
    %v2128 = vsub.s32 %v2125, %v2127
    %v2129 = vrot.slane %v2122, %v2128
    %v2130 = vcombine.low %v2036, %v2037
    %v2132 = vunpack.c.l.s4 1983009808
    %v2133 = vunpack.c.0.s8 %v2132
    %v2134 = vlaneseq
    %v2135 = vshrl.u32 %v2134, 7
    %v2136 = vsub.s32 %v2133, %v2135
    %v2137 = vrot.slane %v2130, %v2136
    %v2138 = vcombine.low %v2113, %v2121
    %v2139 = vcombine.high %v2113, %v2121
    %v2141 = vunpack.c.l.s4 1934713408
    %v2142 = vunpack.c.0.s8 %v2141
    %v2143 = vlaneseq
    %v2144 = vshrl.u32 %v2143, 7
    %v2145 = vsub.s32 %v2142, %v2144
    %v2146 = vrot.slane %v2138, %v2145
    %v2148 = vunpack.c.l.s4 1934713408
    %v2149 = vunpack.c.0.s8 %v2148
    %v2150 = vlaneseq
    %v2151 = vshrl.u32 %v2150, 7
    %v2152 = vsub.s32 %v2149, %v2151
    %v2153 = vrot.slane %v2139, %v2152
    %v2154 = vcombine.low %v2129, %v2137
    %v2155 = vcombine.high %v2129, %v2137
    %v2157 = vunpack.c.l.s4 1934713408
    %v2158 = vunpack.c.0.s8 %v2157
    %v2159 = vlaneseq
    %v2160 = vshrl.u32 %v2159, 7
    %v2161 = vsub.s32 %v2158, %v2160
    %v2162 = vrot.slane %v2154, %v2161
    %v2164 = vunpack.c.l.s4 1934713408
    %v2165 = vunpack.c.0.s8 %v2164
    %v2166 = vlaneseq
    %v2167 = vshrl.u32 %v2166, 7
    %v2168 = vsub.s32 %v2165, %v2167
    %v2169 = vrot.slane %v2155, %v2168
    %v2170 = vcombine.low %v2146, %v2162
    %v2171 = vcombine.high %v2146, %v2162
    %v2172 = vcombine.low %v2153, %v2169
    %v2173 = vcombine.high %v2153, %v2169
    %v2174 = vcombine.low %v2078, %v2085
    %v2176 = vunpack.c.l.s4 1983009808
    %v2177 = vunpack.c.0.s8 %v2176
    %v2178 = vlaneseq
    %v2179 = vshrl.u32 %v2178, 7
    %v2180 = vsub.s32 %v2177, %v2179
    %v2181 = vrot.slane %v2174, %v2180
    %v2182 = vcombine.low %v2102, %v2103
    %v2184 = vunpack.c.l.s4 1983009808
    %v2185 = vunpack.c.0.s8 %v2184
    %v2186 = vlaneseq
    %v2187 = vshrl.u32 %v2186, 7
    %v2188 = vsub.s32 %v2185, %v2187
    %v2189 = vrot.slane %v2182, %v2188
    %v2190 = vcombine.low %v2094, %v2101
    %v2192 = vunpack.c.l.s4 1983009808
    %v2193 = vunpack.c.0.s8 %v2192
    %v2194 = vlaneseq
    %v2195 = vshrl.u32 %v2194, 7
    %v2196 = vsub.s32 %v2193, %v2195
    %v2197 = vrot.slane %v2190, %v2196
    %v2198 = vcombine.low %v2104, %v2105
    %v2200 = vunpack.c.l.s4 1983009808
    %v2201 = vunpack.c.0.s8 %v2200
    %v2202 = vlaneseq
    %v2203 = vshrl.u32 %v2202, 7
    %v2204 = vsub.s32 %v2201, %v2203
    %v2205 = vrot.slane %v2198, %v2204
    %v2206 = vcombine.low %v2181, %v2189
    %v2207 = vcombine.high %v2181, %v2189
    %v2209 = vunpack.c.l.s4 1934713408
    %v2210 = vunpack.c.0.s8 %v2209
    %v2211 = vlaneseq
    %v2212 = vshrl.u32 %v2211, 7
    %v2213 = vsub.s32 %v2210, %v2212
    %v2214 = vrot.slane %v2206, %v2213
    %v2216 = vunpack.c.l.s4 1934713408
    %v2217 = vunpack.c.0.s8 %v2216
    %v2218 = vlaneseq
    %v2219 = vshrl.u32 %v2218, 7
    %v2220 = vsub.s32 %v2217, %v2219
    %v2221 = vrot.slane %v2207, %v2220
    %v2222 = vcombine.low %v2197, %v2205
    %v2223 = vcombine.high %v2197, %v2205
    %v2225 = vunpack.c.l.s4 1934713408
    %v2226 = vunpack.c.0.s8 %v2225
    %v2227 = vlaneseq
    %v2228 = vshrl.u32 %v2227, 7
    %v2229 = vsub.s32 %v2226, %v2228
    %v2230 = vrot.slane %v2222, %v2229
    %v2232 = vunpack.c.l.s4 1934713408
    %v2233 = vunpack.c.0.s8 %v2232
    %v2234 = vlaneseq
    %v2235 = vshrl.u32 %v2234, 7
    %v2236 = vsub.s32 %v2233, %v2235
    %v2237 = vrot.slane %v2223, %v2236
    %v2238 = vcombine.low %v2214, %v2230
    %v2239 = vcombine.high %v2214, %v2230
    %v2240 = vcombine.low %v2221, %v2237
    %v2241 = vcombine.high %v2221, %v2237
    %2244 = vrot.lane.b32.xlu0 %v2171, 8
    %v2245 = vpop.permute.xlu0 %2244
    %2246 = vrot.lane.b32.xlu0 %v2239, 8
    %v2247 = vpop.permute.xlu0 %2246
    %2252 = vrot.lane.b32.xlu0 %v2172, 16
    %v2253 = vpop.permute.xlu0 %2252
    %2254 = vrot.lane.b32.xlu0 %v2240, 16
    %v2255 = vpop.permute.xlu0 %2254
    %2260 = vrot.lane.b32.xlu0 %v2173, 24
    %v2261 = vpop.permute.xlu0 %2260
    %2262 = vrot.lane.b32.xlu0 %v2241, 24
    %v2263 = vpop.permute.xlu0 %2262
    %v2266 = vsel %vm1136, %v2170, %v2245
    %v2267 = vsel %vm1136, %v2238, %v2247
    %vm2268 = vcmask 130048
    %v2269 = vsel %vm2268, %v2266, %v2253
    %v2270 = vsel %vm2268, %v2267, %v2255
    %vm2271 = vcmask 195584
    %v2272 = vsel %vm2271, %v2269, %v2261
    %v2273 = vsel %vm2271, %v2270, %v2263
    %v2274 = vpack.c.bf16 %v2273, %v2272
    %v2275 = vld [vmem:[%s4] sm:$0xf]
    %v2276 = vld [vmem:[%s4 + $0x4] sm:$0xf]
    %v2277 = vld [vmem:[%s4 + $0x8] sm:$0xf]
    %v2278 = vld [vmem:[%s4 + $0xc] sm:$0xf]
    %v2279 = vld [vmem:[#allocation2] sm:$0x1]
    %v2281 = vlaneseq
    %v2282 = vshrl.u32 %v2281, 7
    %v2283 = vsub.s32 0, %v2282
    %v2284 = vrot.slane %v2279, %v2283
    %v2290 = vunpack.c.l.b16 %v2275
    %v2291 = vunpack.c.l.b16 %v2276
    %v2292 = vunpack.c.l.b16 %v2277
    %v2293 = vunpack.c.l.b16 %v2278
    %v2294 = vpack.c.b16 %v2291, %v2290
    %v2295 = vpack.c.b16 %v2293, %v2292
    %v2299 = vsel %vm107, %v2274, 0
    %2301 = vmatprep.subr.bf16.mxu0 0
    %2302 = vmatpush1.bf16.msra.mxu0 0
    %2303 = vmatprep.subr.bf16.mxu0 0
    %2304 = vmatpush1.bf16.msra.mxu0 0
    %2305 = vmatprep.subr.bf16.mxu0 0
    %2306 = vmatpush1.bf16.msra.mxu0 0
    %2307 = vmatprep.subr.bf16.mxu0 0
    %2308 = vmatpush1.bf16.msra.mxu0 0
    %2309 = vmatprep.subr.bf16.mxu0 0
    %2310 = vmatpush1.bf16.msra.mxu0 0
    %2311 = vmatprep.subr.bf16.mxu0 0
    %2312 = vmatpush1.bf16.msra.mxu0 0
    %2313 = vmatprep.subr.bf16.mxu0 0
    %2314 = vmatpush1.bf16.msra.mxu0 %v2295
    %2315 = vmatprep.subr.bf16.mxu0 0
    %2316 = vmatpush1.bf16.msra.mxu0 %v2294
    %2317 = vmatprep.subr.bf16.mxu0 0
    %2318 = vmatpush2.bf16.msra.mxu0 0
    %2319 = vmatprep.subr.bf16.mxu0 0
    %2320 = vmatpush2.bf16.msra.mxu0 0
    %2321 = vmatprep.subr.bf16.mxu0 0
    %2322 = vmatpush2.bf16.msra.mxu0 0
    %2323 = vmatprep.subr.bf16.mxu0 0
    %2324 = vmatpush2.bf16.msra.mxu0 0
    %2325 = vmatprep.subr.bf16.mxu0 0
    %2326 = vmatpush2.bf16.msra.mxu0 0
    %2327 = vmatprep.subr.bf16.mxu0 0
    %2328 = vmatpush2.bf16.msra.mxu0 0
    %2329 = vmatprep.subr.bf16.mxu0 0
    %2330 = vmatpush2.bf16.msra.mxu0 0
    %2331 = vmatprep.subr.bf16.mxu0 0
    %2332 = vmatpush2.bf16.msra.mxu0 0
    %2333 = vmatprep.mubr.bf16.mxu0 0
    %2334 = vmatmul.mubr.bf16.gmra.mxu0 %v2299
    %v2335 = vpop.f32.mrf.mxu0
    %v2336 = vadd.f32 %v2284, %v2335
    %v2337 = vpop.f32.mrf.mxu0
    %v2338 = vpop.f32.mrf.mxu0
    %v2339 = vadd.f32 %v2284, %v2338
    %v2340 = vpop.f32.mrf.mxu0
    %2341 = vdwg.mxu0
    %v2342 = vadd.f32 %v103, %v2336
    %v2343 = vadd.f32 %v104, %v2339
    %v2344 = vld [vmem:[#allocation5] sm:$0x1]
    %v2345 = vld [vmem:[#allocation7] sm:$0x1]
    %v2346 = vsel %vm107, %v2342, 0.0
    %2347 = vadd.xlane.f32.xlu0 %v2346
    %v2348 = vpop.xlane.xlu0 %2347
    %v2349 = vsel %vm107, %v2343, 0.0
    %2350 = vadd.xlane.f32.xlu0 %v2349
    %v2351 = vpop.xlane.xlu0 %2350
    %v2352 = vmul.f32 %v2348, %v114
    %v2353 = vmul.f32 %v2351, %v114
    %v2354 = vsub.f32 %v2342, %v2352
    %v2355 = vsub.f32 %v2343, %v2353
    %v2356 = vmul.f32 %v2354, %v2354
    %v2357 = vmul.f32 %v2355, %v2355
    %v2358 = vsel %vm107, %v2356, 0.0
    %2359 = vadd.xlane.f32.xlu0 %v2358
    %v2360 = vpop.xlane.xlu0 %2359
    %v2361 = vsel %vm107, %v2357, 0.0
    %2362 = vadd.xlane.f32.xlu0 %v2361
    %v2363 = vpop.xlane.xlu0 %2362
    %v2364 = vmul.f32 %v2360, %v114
    %v2365 = vmul.f32 %v2363, %v114
    %v2366 = vadd.f32 %v2364, 1e-05
    %v2367 = vadd.f32 %v2365, 1e-05
    %v2368 = vrsqrt.pop %v2366
    %v2369 = vrsqrt.pop %v2367
    %v2370 = vmul.f32 %v2354, %v2368
    %v2371 = vmul.f32 %v2355, %v2369
    %v2373 = vlaneseq
    %v2374 = vshrl.u32 %v2373, 7
    %v2375 = vsub.s32 0, %v2374
    %v2376 = vrot.slane %v2344, %v2375
    %v2378 = vmul.f32 %v2370, %v2376
    %v2379 = vmul.f32 %v2371, %v2376
    %v2381 = vlaneseq
    %v2382 = vshrl.u32 %v2381, 7
    %v2383 = vsub.s32 0, %v2382
    %v2384 = vrot.slane %v2345, %v2383
    %v2386 = vadd.f32 %v2378, %v2384
    %v2387 = vadd.f32 %v2379, %v2384
    %v2388 = vpack.c.bf16 %v2387, %v2386
    %v2389 = vld [vmem:[#allocation8] sm:$0xf]
    %v2390 = vld [vmem:[#allocation8 + $0x4] sm:$0xf]
    %v2391 = vld [vmem:[#allocation8 + $0x8] sm:$0xf]
    %v2392 = vld [vmem:[#allocation8 + $0xc] sm:$0xf]
    %v2393 = vld [vmem:[#allocation10] sm:$0x1]
    %v2395 = vlaneseq
    %v2396 = vshrl.u32 %v2395, 7
    %v2397 = vsub.s32 0, %v2396
    %v2398 = vrot.slane %v2393, %v2397
    %v2404 = vunpack.c.l.b16 %v2389
    %v2405 = vunpack.c.l.b16 %v2390
    %v2406 = vunpack.c.l.b16 %v2391
    %v2407 = vunpack.c.l.b16 %v2392
    %v2408 = vpack.c.b16 %v2405, %v2404
    %v2409 = vpack.c.b16 %v2407, %v2406
    %v2413 = vsel %vm107, %v2388, 0
    %2415 = vmatprep.subr.bf16.mxu0 0
    %2416 = vmatpush1.bf16.msra.mxu0 0
    %2417 = vmatprep.subr.bf16.mxu0 0
    %2418 = vmatpush1.bf16.msra.mxu0 0
    %2419 = vmatprep.subr.bf16.mxu0 0
    %2420 = vmatpush1.bf16.msra.mxu0 0
    %2421 = vmatprep.subr.bf16.mxu0 0
    %2422 = vmatpush1.bf16.msra.mxu0 0
    %2423 = vmatprep.subr.bf16.mxu0 0
    %2424 = vmatpush1.bf16.msra.mxu0 0
    %2425 = vmatprep.subr.bf16.mxu0 0
    %2426 = vmatpush1.bf16.msra.mxu0 0
    %2427 = vmatprep.subr.bf16.mxu0 0
    %2428 = vmatpush1.bf16.msra.mxu0 %v2409
    %2429 = vmatprep.subr.bf16.mxu0 0
    %2430 = vmatpush1.bf16.msra.mxu0 %v2408
    %2431 = vmatprep.subr.bf16.mxu0 0
    %2432 = vmatpush2.bf16.msra.mxu0 0
    %2433 = vmatprep.subr.bf16.mxu0 0
    %2434 = vmatpush2.bf16.msra.mxu0 0
    %2435 = vmatprep.subr.bf16.mxu0 0
    %2436 = vmatpush2.bf16.msra.mxu0 0
    %2437 = vmatprep.subr.bf16.mxu0 0
    %2438 = vmatpush2.bf16.msra.mxu0 0
    %2439 = vmatprep.subr.bf16.mxu0 0
    %2440 = vmatpush2.bf16.msra.mxu0 0
    %2441 = vmatprep.subr.bf16.mxu0 0
    %2442 = vmatpush2.bf16.msra.mxu0 0
    %2443 = vmatprep.subr.bf16.mxu0 0
    %2444 = vmatpush2.bf16.msra.mxu0 0
    %2445 = vmatprep.subr.bf16.mxu0 0
    %2446 = vmatpush2.bf16.msra.mxu0 0
    %2447 = vmatprep.mubr.bf16.mxu0 0
    %2448 = vmatmul.mubr.bf16.gmra.mxu0 %v2413
    %v2449 = vpop.f32.mrf.mxu0
    %v2450 = vadd.f32 %v2398, %v2449
    %v2451 = vpop.f32.mrf.mxu0
    %v2452 = vpop.f32.mrf.mxu0
    %v2453 = vadd.f32 %v2398, %v2452
    %v2454 = vpop.f32.mrf.mxu0
    %2455 = vdwg.mxu0
    %v2456 = vmul.f32 %v2450, 0.5
    %v2457 = vmul.f32 %v2453, 0.5
    %v2458 = vmul.f32 %v2450, 0.70710677
    %v2459 = vmul.f32 %v2453, 0.70710677
    %v2460 = verf.f32.pop %v2458
    %v2461 = verf.f32.pop %v2459
    %v2462 = vadd.f32 %v2460, 1.0
    %v2463 = vadd.f32 %v2461, 1.0
    %v2464 = vmul.f32 %v2456, %v2462
    %v2465 = vmul.f32 %v2457, %v2463
    %v2466 = vpack.c.bf16 %v2465, %v2464
    %v2467 = vld [vmem:[%s10] sm:$0xf]
    %v2468 = vld [vmem:[%s10 + $0x4] sm:$0xf]
    %v2469 = vld [vmem:[%s10 + $0x8] sm:$0xf]
    %v2470 = vld [vmem:[%s10 + $0xc] sm:$0xf]
    %v2471 = vld [vmem:[%s10 + $0x10] sm:$0xf]
    %v2472 = vld [vmem:[%s10 + $0x14] sm:$0xf]
    %v2473 = vld [vmem:[%s10 + $0x18] sm:$0xf]
    %v2474 = vld [vmem:[%s10 + $0x1c] sm:$0xf]
    %v2475 = vld [vmem:[%s11] sm:$0x1]
    %v2477 = vlaneseq
    %v2478 = vshrl.u32 %v2477, 7
    %v2479 = vsub.s32 0, %v2478
    %v2480 = vrot.slane %v2475, %v2479
    %v2490 = vunpack.c.l.b16 %v2467
    %v2491 = vunpack.c.l.b16 %v2468
    %v2492 = vunpack.c.l.b16 %v2469
    %v2493 = vunpack.c.l.b16 %v2470
    %v2494 = vunpack.c.l.b16 %v2471
    %v2495 = vunpack.c.l.b16 %v2472
    %v2496 = vunpack.c.l.b16 %v2473
    %v2497 = vunpack.c.l.b16 %v2474
    %v2498 = vpack.c.b16 %v2491, %v2490
    %v2499 = vpack.c.b16 %v2493, %v2492
    %v2500 = vpack.c.b16 %v2495, %v2494
    %v2501 = vpack.c.b16 %v2497, %v2496
    %vm2506 = vcmask 523264
    %v2508 = vsel %vm2506, %v2466, 0
    %2510 = vmatprep.subr.bf16.mxu0 0
    %2511 = vmatpush1.bf16.msra.mxu0 0
    %2512 = vmatprep.subr.bf16.mxu0 0
    %2513 = vmatpush1.bf16.msra.mxu0 0
    %2514 = vmatprep.subr.bf16.mxu0 0
    %2515 = vmatpush1.bf16.msra.mxu0 0
    %2516 = vmatprep.subr.bf16.mxu0 0
    %2517 = vmatpush1.bf16.msra.mxu0 0
    %2518 = vmatprep.subr.bf16.mxu0 0
    %2519 = vmatpush1.bf16.msra.mxu0 %v2501
    %2520 = vmatprep.subr.bf16.mxu0 0
    %2521 = vmatpush1.bf16.msra.mxu0 %v2500
    %2522 = vmatprep.subr.bf16.mxu0 0
    %2523 = vmatpush1.bf16.msra.mxu0 %v2499
    %2524 = vmatprep.subr.bf16.mxu0 0
    %2525 = vmatpush1.bf16.msra.mxu0 %v2498
    %2526 = vmatprep.subr.bf16.mxu0 0
    %2527 = vmatpush2.bf16.msra.mxu0 0
    %2528 = vmatprep.subr.bf16.mxu0 0
    %2529 = vmatpush2.bf16.msra.mxu0 0
    %2530 = vmatprep.subr.bf16.mxu0 0
    %2531 = vmatpush2.bf16.msra.mxu0 0
    %2532 = vmatprep.subr.bf16.mxu0 0
    %2533 = vmatpush2.bf16.msra.mxu0 0
    %2534 = vmatprep.subr.bf16.mxu0 0
    %2535 = vmatpush2.bf16.msra.mxu0 0
    %2536 = vmatprep.subr.bf16.mxu0 0
    %2537 = vmatpush2.bf16.msra.mxu0 0
    %2538 = vmatprep.subr.bf16.mxu0 0
    %2539 = vmatpush2.bf16.msra.mxu0 0
    %2540 = vmatprep.subr.bf16.mxu0 0
    %2541 = vmatpush2.bf16.msra.mxu0 0
    %2542 = vmatprep.mubr.bf16.mxu0 0
    %2543 = vmatmul.mubr.bf16.gmra.mxu0 %v2508
    %v2544 = vpop.f32.mrf.mxu0
    %v2545 = vadd.f32 %v2480, %v2544
    %v2546 = vpop.f32.mrf.mxu0
    %v2547 = vpop.f32.mrf.mxu0
    %v2548 = vadd.f32 %v2480, %v2547
    %v2549 = vpop.f32.mrf.mxu0
    %2550 = vdwg.mxu0
    %v2551 = vadd.f32 %v2342, %v2545
    %v2552 = vadd.f32 %v2343, %v2548
    %2553 = vst.msk [vmem:[#allocation11] sm:$0xff] %vm107, %v2551
    %2554 = vst.msk [vmem:[#allocation11 + $0x8] sm:$0xff] %vm107, %v2552
    // Predicated region
    $region70: #{tpu_custom_call.1} parent=1 // pred_check
      _
    $region71: #{tpu_custom_call.1} parent=1 // pred_check_branch
      %2556 = sbr.rel (0) target = $region73
    $region72: #{tpu_custom_call.1} parent=1 // pred_region
      %s2558 = ssub.s32 256, 256
      %2559 = vsyncadd [#allocation4], %s2558
      %s2560 = sshll.u32 [#allocation11], 4
      %s2561 = int_to_ptr.vmem [resolvable:$true] %s2560
      %2566 = dma.vmem_to_hbm [thread:$0]  %s2561, 256, %s12, [#allocation4], 128, 128, 8
    $region73: #{tpu_custom_call.1} parent=1 // pred_fallthru
      _
    // Predicated region
    $region74: #{tpu_custom_call.1} parent=1 // pred_check
      _
    $region75: #{tpu_custom_call.1} parent=1 // pred_check_branch
      %2568 = sbr.rel (0) target = $region77
    $region76: #{tpu_custom_call.1} parent=1 // pred_region
      %2569 = dma.done [#allocation4], 256
    $region77: #{tpu_custom_call.1} parent=1 // pred_fallthru
      _
    %2570 = vsyncpa [#allocation3], 1
    %2571 = vsyncpa [#allocation6], 1
    %2572 = vsyncpa [#allocation9], 1
    %2573 = vsyncpa [#allocation4], 1

// kernel: tpu_custom_call.1
$region0: #{tpu_custom_call.1}
  #allocation0 [shape = 'u32[]', space=smem, size = 0x4, offset = 0x4, fixed_abs, tag = 'smem constant byte address 0x4 - core index']
  #allocation1 [shape = 'u32[144,128]{1,0:T(1,128)}', space=vmem, size = 0x12000, scoped, tag = 'internal scratch']
  %s0 = inlined_call_operand.vmem [shape: f32[2,8,32], index: 0, kind: input, shape index: {}]
  %s1 = inlined_call_operand.vmem [shape: f32[1,32], index: 1, kind: input, shape index: {}]
  %s2 = inlined_call_operand.vmem [shape: f32[1,32], index: 2, kind: input, shape index: {}]
  %s3 = inlined_call_operand.vmem [shape: bf16[32,96], index: 3, kind: input, shape index: {}]
  %s4 = inlined_call_operand.vmem [shape: bf16[32,32], index: 4, kind: input, shape index: {}]
  %s5 = inlined_call_operand.hbm [shape: f32[1,32], index: 5, kind: input, shape index: {}]
  %s6 = inlined_call_operand.hbm [shape: f32[1,32], index: 6, kind: input, shape index: {}]
  %s7 = inlined_call_operand.hbm [shape: f32[1,32], index: 7, kind: input, shape index: {}]
  %s8 = inlined_call_operand.hbm [shape: bf16[32,64], index: 8, kind: input, shape index: {}]
  %s9 = inlined_call_operand.hbm [shape: f32[1,64], index: 9, kind: input, shape index: {}]
  %s10 = inlined_call_operand.vmem [shape: bf16[64,32], index: 10, kind: input, shape index: {}]
  %s11 = inlined_call_operand.vmem [shape: f32[1,32], index: 11, kind: input, shape index: {}]
  %s12 = inlined_call_operand.hbm [shape: f32[2,8,32], index: 12, kind: output, shape index: {}]
  %s13 = sld [smem:[#allocation0]]
  $region78: #{tpu_custom_call.1} parent=0
    _
  %s15 = ssub.s32 1, %s13
  %s16 = scalar_select 0, %s15, %s13
  $region1: #{tpu_custom_call.1} parent=0
    #allocation2 [shape = 'u8[512]{0}', space=vmem, size = 0x400, scoped, tag = 'input window, operand 5, single buffered']
    #allocation3 [shape = 's32[1]{0}', space=sflag, size = 0x4, scoped, tag = 'scoped memory for tpu_custom_call.1']
    #allocation4 [shape = 's32[1]{0}', space=sflag, size = 0x4, scoped, tag = 'scoped memory for tpu_custom_call.1']
    #allocation5 [shape = 'u8[512]{0}', space=vmem, size = 0x400, scoped, tag = 'input window, operand 6, single buffered']
    #allocation6 [shape = 's32[1]{0}', space=sflag, size = 0x4, scoped, tag = 'scoped memory for tpu_custom_call.1']
    #allocation7 [shape = 'u8[512]{0}', space=vmem, size = 0x400, scoped, tag = 'input window, operand 7, single buffered']
    #allocation8 [shape = 'u8[8192]{0}', space=vmem, size = 0x2000, scoped, tag = 'input window, operand 8, single buffered']
    #allocation9 [shape = 's32[1]{0}', space=sflag, size = 0x4, scoped, tag = 'scoped memory for tpu_custom_call.1']
    #allocation10 [shape = 'u8[512]{0}', space=vmem, size = 0x400, scoped, tag = 'input window, operand 9, single buffered']
    #allocation11 [shape = 'u8[8192]{0}', space=vmem, size = 0x2000, scoped, tag = 'output window, operand 0, single buffered']
    %17 = vsyncpa [#allocation3], 0
    %18 = vsyncpa [#allocation6], 0
    %19 = vsyncpa [#allocation9], 0
    %20 = vsyncpa [#allocation4], 0
    // Predicated region
    $region2: #{tpu_custom_call.1} parent=1 // pred_check
      _
    $region3: #{tpu_custom_call.1} parent=1 // pred_check_branch
      %22 = sbr.rel (0) target = $region5
    $region4: #{tpu_custom_call.1} parent=1 // pred_region
      _
    $region5: #{tpu_custom_call.1} parent=1 // pred_fallthru
      _
    // Predicated region
    $region6: #{tpu_custom_call.1} parent=1 // pred_check
      _
    $region7: #{tpu_custom_call.1} parent=1 // pred_check_branch
      %24 = sbr.rel (0) target = $region9
    $region8: #{tpu_custom_call.1} parent=1 // pred_region
      _
    $region9: #{tpu_custom_call.1} parent=1 // pred_fallthru
      _
    // Predicated region
    $region10: #{tpu_custom_call.1} parent=1 // pred_check
      _
    $region11: #{tpu_custom_call.1} parent=1 // pred_check_branch
      %26 = sbr.rel (0) target = $region13
    $region12: #{tpu_custom_call.1} parent=1 // pred_region
      _
    $region13: #{tpu_custom_call.1} parent=1 // pred_fallthru
      _
    // Predicated region
    $region14: #{tpu_custom_call.1} parent=1 // pred_check
      _
    $region15: #{tpu_custom_call.1} parent=1 // pred_check_branch
      %28 = sbr.rel (0) target = $region17
    $region16: #{tpu_custom_call.1} parent=1 // pred_region
      _
    $region17: #{tpu_custom_call.1} parent=1 // pred_fallthru
      _
    // Predicated region
    $region18: #{tpu_custom_call.1} parent=1 // pred_check
      _
    $region19: #{tpu_custom_call.1} parent=1 // pred_check_branch
      %30 = sbr.rel (0) target = $region21
    $region20: #{tpu_custom_call.1} parent=1 // pred_region
      _
    $region21: #{tpu_custom_call.1} parent=1 // pred_fallthru
      _
    // Predicated region
    $region22: #{tpu_custom_call.1} parent=1 // pred_check
      _
    $region23: #{tpu_custom_call.1} parent=1 // pred_check_branch
      %32 = sbr.rel (0) target = $region25
    $region24: #{tpu_custom_call.1} parent=1 // pred_region
      %s34 = ssub.s32 16, 16
      %35 = vsyncadd [#allocation3], %s34
      %s37 = sshll.u32 [#allocation2], 4
      %s38 = int_to_ptr.vmem [resolvable:$true] %s37
      %40 = dma.hbm_to_vmem [thread:$0]  %s5, 16, %s38, [#allocation3]
    $region25: #{tpu_custom_call.1} parent=1 // pred_fallthru
      _
    // Predicated region
    $region26: #{tpu_custom_call.1} parent=1 // pred_check
      _
    $region27: #{tpu_custom_call.1} parent=1 // pred_check_branch
      %42 = sbr.rel (0) target = $region29
    $region28: #{tpu_custom_call.1} parent=1 // pred_region
      %s44 = ssub.s32 16, 16
      %45 = vsyncadd [#allocation6], %s44
      %s47 = sshll.u32 [#allocation5], 4
      %s48 = int_to_ptr.vmem [resolvable:$true] %s47
      %50 = dma.hbm_to_vmem [thread:$0]  %s6, 16, %s48, [#allocation6]
    $region29: #{tpu_custom_call.1} parent=1 // pred_fallthru
      _
    // Predicated region
    $region30: #{tpu_custom_call.1} parent=1 // pred_check
      _
    $region31: #{tpu_custom_call.1} parent=1 // pred_check_branch
      %52 = sbr.rel (0) target = $region33
    $region32: #{tpu_custom_call.1} parent=1 // pred_region
      %s54 = ssub.s32 16, 16
      %55 = vsyncadd [#allocation6], %s54
      %s57 = sshll.u32 [#allocation7], 4
      %s58 = int_to_ptr.vmem [resolvable:$true] %s57
      %60 = dma.hbm_to_vmem [thread:$0]  %s7, 16, %s58, [#allocation6]
    $region33: #{tpu_custom_call.1} parent=1 // pred_fallthru
      _
    // Predicated region
    $region34: #{tpu_custom_call.1} parent=1 // pred_check
      _
    $region35: #{tpu_custom_call.1} parent=1 // pred_check_branch
      %62 = sbr.rel (0) target = $region37
    $region36: #{tpu_custom_call.1} parent=1 // pred_region
      %s64 = ssub.s32 256, 256
      %65 = vsyncadd [#allocation9], %s64
      %s66 = sshll.u32 [#allocation8], 4
      %s67 = int_to_ptr.vmem [resolvable:$true] %s66
      %72 = dma.hbm_to_vmem [thread:$0]  %s8, 256, %s67, [#allocation9], 64, 64, 4
    $region37: #{tpu_custom_call.1} parent=1 // pred_fallthru
      _
    // Predicated region
    $region38: #{tpu_custom_call.1} parent=1 // pred_check
      _
    $region39: #{tpu_custom_call.1} parent=1 // pred_check_branch
      %74 = sbr.rel (0) target = $region41
    $region40: #{tpu_custom_call.1} parent=1 // pred_region
      %s76 = ssub.s32 16, 16
      %77 = vsyncadd [#allocation9], %s76
      %s79 = sshll.u32 [#allocation10], 4
      %s80 = int_to_ptr.vmem [resolvable:$true] %s79
      %82 = dma.hbm_to_vmem [thread:$0]  %s9, 16, %s80, [#allocation9]
    $region41: #{tpu_custom_call.1} parent=1 // pred_fallthru
      _
    // Predicated region
    $region42: #{tpu_custom_call.1} parent=1 // pred_check
      _
    $region43: #{tpu_custom_call.1} parent=1 // pred_check_branch
      %84 = sbr.rel (0) target = $region45
    $region44: #{tpu_custom_call.1} parent=1 // pred_region
      _
    $region45: #{tpu_custom_call.1} parent=1 // pred_fallthru
      _
    // Predicated region
    $region46: #{tpu_custom_call.1} parent=1 // pred_check
      _
    $region47: #{tpu_custom_call.1} parent=1 // pred_check_branch
      %86 = sbr.rel (0) target = $region49
    $region48: #{tpu_custom_call.1} parent=1 // pred_region
      _
    $region49: #{tpu_custom_call.1} parent=1 // pred_fallthru
      _
    // Predicated region
    $region50: #{tpu_custom_call.1} parent=1 // pred_check
      _
    $region51: #{tpu_custom_call.1} parent=1 // pred_check_branch
      %88 = sbr.rel (0) target = $region53
    $region52: #{tpu_custom_call.1} parent=1 // pred_region
      %89 = dma.done [#allocation3], 16
    $region53: #{tpu_custom_call.1} parent=1 // pred_fallthru
      _
    // Predicated region
    $region54: #{tpu_custom_call.1} parent=1 // pred_check
      _
    $region55: #{tpu_custom_call.1} parent=1 // pred_check_branch
      %91 = sbr.rel (0) target = $region57
    $region56: #{tpu_custom_call.1} parent=1 // pred_region
      %92 = dma.done [#allocation6], 16
    $region57: #{tpu_custom_call.1} parent=1 // pred_fallthru
      _
    // Predicated region
    $region58: #{tpu_custom_call.1} parent=1 // pred_check
      _
    $region59: #{tpu_custom_call.1} parent=1 // pred_check_branch
      %94 = sbr.rel (0) target = $region61
    $region60: #{tpu_custom_call.1} parent=1 // pred_region
      %95 = dma.done [#allocation6], 16
    $region61: #{tpu_custom_call.1} parent=1 // pred_fallthru
      _
    // Predicated region
    $region62: #{tpu_custom_call.1} parent=1 // pred_check
      _
    $region63: #{tpu_custom_call.1} parent=1 // pred_check_branch
      %97 = sbr.rel (0) target = $region65
    $region64: #{tpu_custom_call.1} parent=1 // pred_region
      %98 = dma.done [#allocation9], 256
    $region65: #{tpu_custom_call.1} parent=1 // pred_fallthru
      _
    // Predicated region
    $region66: #{tpu_custom_call.1} parent=1 // pred_check
      _
    $region67: #{tpu_custom_call.1} parent=1 // pred_check_branch
      %100 = sbr.rel (0) target = $region69
    $region68: #{tpu_custom_call.1} parent=1 // pred_region
      %101 = dma.done [#allocation9], 16
    $region69: #{tpu_custom_call.1} parent=1 // pred_fallthru
      _
    %v103 = vld [vmem:[%s0] sm:$0xff]
    %v104 = vld [vmem:[%s0 + $0x8] sm:$0xff]
    %v105 = vld [vmem:[%s1] sm:$0x1]
    %v106 = vld [vmem:[%s2] sm:$0x1]
    %vm107 = vcmask 261120
    %v108 = vsel %vm107, %v103, 0.0
    %109 = vadd.xlane.f32.xlu0 %v108
    %v110 = vpop.xlane.xlu0 %109
    %v111 = vsel %vm107, %v104, 0.0
    %112 = vadd.xlane.f32.xlu0 %v111
    %v113 = vpop.xlane.xlu0 %112
    %v114 = vrcp.pop 32.0
    %v115 = vmul.f32 %v110, %v114
    %v116 = vmul.f32 %v113, %v114
    %v117 = vsub.f32 %v103, %v115
    %v118 = vsub.f32 %v104, %v116
    %v119 = vmul.f32 %v117, %v117
    %v120 = vmul.f32 %v118, %v118
    %v121 = vsel %vm107, %v119, 0.0
    %122 = vadd.xlane.f32.xlu0 %v121
    %v123 = vpop.xlane.xlu0 %122
    %v124 = vsel %vm107, %v120, 0.0
    %125 = vadd.xlane.f32.xlu0 %v124
    %v126 = vpop.xlane.xlu0 %125
    %v127 = vmul.f32 %v123, %v114
    %v128 = vmul.f32 %v126, %v114
    %v129 = vadd.f32 %v127, 1e-05
    %v130 = vadd.f32 %v128, 1e-05
    %v131 = vrsqrt.pop %v129
    %v132 = vrsqrt.pop %v130
    %v133 = vmul.f32 %v117, %v131
    %v134 = vmul.f32 %v118, %v132
    %v136 = vlaneseq
    %v137 = vshrl.u32 %v136, 7
    %v138 = vsub.s32 0, %v137
    %v139 = vrot.slane %v105, %v138
    %v141 = vmul.f32 %v133, %v139
    %v142 = vmul.f32 %v134, %v139
    %v144 = vlaneseq
    %v145 = vshrl.u32 %v144, 7
    %v146 = vsub.s32 0, %v145
    %v147 = vrot.slane %v106, %v146
    %v149 = vadd.f32 %v141, %v147
    %v150 = vadd.f32 %v142, %v147
    %v151 = vpack.c.bf16 %v150, %v149
    %v152 = vld [vmem:[%s3] sm:$0xf]
    %v153 = vld [vmem:[%s3 + $0x4] sm:$0xf]
    %v154 = vld [vmem:[%s3 + $0x8] sm:$0xf]
    %v155 = vld [vmem:[%s3 + $0xc] sm:$0xf]
    %v160 = vunpack.c.l.b16 %v152
    %v161 = vunpack.c.l.b16 %v153
    %v162 = vunpack.c.l.b16 %v154
    %v163 = vunpack.c.l.b16 %v155
    %v164 = vpack.c.b16 %v161, %v160
    %v165 = vpack.c.b16 %v163, %v162
    %v169 = vsel %vm107, %v151, 0
    %171 = vmatprep.subr.bf16.mxu0 0
    %172 = vmatpush1.bf16.msra.mxu0 0
    %173 = vmatprep.subr.bf16.mxu0 0
    %174 = vmatpush1.bf16.msra.mxu0 0
    %175 = vmatprep.subr.bf16.mxu0 0
    %176 = vmatpush1.bf16.msra.mxu0 0
    %177 = vmatprep.subr.bf16.mxu0 0
    %178 = vmatpush1.bf16.msra.mxu0 0
    %179 = vmatprep.subr.bf16.mxu0 0
    %180 = vmatpush1.bf16.msra.mxu0 0
    %181 = vmatprep.subr.bf16.mxu0 0
    %182 = vmatpush1.bf16.msra.mxu0 0
    %183 = vmatprep.subr.bf16.mxu0 0
    %184 = vmatpush1.bf16.msra.mxu0 %v165
    %185 = vmatprep.subr.bf16.mxu0 0
    %186 = vmatpush1.bf16.msra.mxu0 %v164
    %187 = vmatprep.subr.bf16.mxu0 0
    %188 = vmatpush2.bf16.msra.mxu0 0
    %189 = vmatprep.subr.bf16.mxu0 0
    %190 = vmatpush2.bf16.msra.mxu0 0
    %191 = vmatprep.subr.bf16.mxu0 0
    %192 = vmatpush2.bf16.msra.mxu0 0
    %193 = vmatprep.subr.bf16.mxu0 0
    %194 = vmatpush2.bf16.msra.mxu0 0
    %195 = vmatprep.subr.bf16.mxu0 0
    %196 = vmatpush2.bf16.msra.mxu0 0
    %197 = vmatprep.subr.bf16.mxu0 0
    %198 = vmatpush2.bf16.msra.mxu0 0
    %199 = vmatprep.subr.bf16.mxu0 0
    %200 = vmatpush2.bf16.msra.mxu0 0
    %201 = vmatprep.subr.bf16.mxu0 0
    %202 = vmatpush2.bf16.msra.mxu0 0
    %203 = vmatprep.mubr.bf16.mxu0 0
    %204 = vmatmul.mubr.bf16.gmra.mxu0 %v169
    %v205 = vpop.f32.mrf.mxu0
    %v206 = vadd.f32 0.0, %v205
    %v207 = vpop.f32.mrf.mxu0
    %v208 = vpop.f32.mrf.mxu0
    %v209 = vadd.f32 0.0, %v208
    %v210 = vpop.f32.mrf.mxu0
    %211 = vdwg.mxu0
    %v212 = vmul.f32 %v206, 0.35355338
    %v213 = vmul.f32 %v209, 0.35355338
    %216 = vrot.lane.b32.xlu0 %v212, 120
    %v217 = vpop.permute.xlu0 %216
    %218 = vrot.lane.b32.xlu0 %v213, 120
    %v219 = vpop.permute.xlu0 %218
    %222 = vrot.lane.b32.xlu0 %v212, 112
    %v223 = vpop.permute.xlu0 %222
    %224 = vrot.lane.b32.xlu0 %v213, 112
    %v225 = vpop.permute.xlu0 %224
    %228 = vrot.lane.b32.xlu0 %v212, 104
    %v229 = vpop.permute.xlu0 %228
    %230 = vrot.lane.b32.xlu0 %v213, 104
    %v231 = vpop.permute.xlu0 %230
    %v234 = vcombine.low %v212, %v223
    %v235 = vcombine.high %v212, %v223
    %v237 = vunpack.c.l.s4 1983009808
    %v238 = vunpack.c.0.s8 %v237
    %v239 = vlaneseq
    %v240 = vshrl.u32 %v239, 7
    %v241 = vsub.s32 %v238, %v240
    %v242 = vrot.slane %v234, %v241
    %v244 = vunpack.c.l.s4 1983009808
    %v245 = vunpack.c.0.s8 %v244
    %v246 = vlaneseq
    %v247 = vshrl.u32 %v246, 7
    %v248 = vsub.s32 %v245, %v247
    %v249 = vrot.slane %v235, %v248
    %v250 = vcombine.low %v217, %v229
    %v251 = vcombine.high %v217, %v229
    %v253 = vunpack.c.l.s4 1983009808
    %v254 = vunpack.c.0.s8 %v253
    %v255 = vlaneseq
    %v256 = vshrl.u32 %v255, 7
    %v257 = vsub.s32 %v254, %v256
    %v258 = vrot.slane %v250, %v257
    %v260 = vunpack.c.l.s4 1983009808
    %v261 = vunpack.c.0.s8 %v260
    %v262 = vlaneseq
    %v263 = vshrl.u32 %v262, 7
    %v264 = vsub.s32 %v261, %v263
    %v265 = vrot.slane %v251, %v264
    %v266 = vcombine.low %v242, %v258
    %v267 = vcombine.high %v242, %v258
    %v269 = vunpack.c.l.s4 1934713408
    %v270 = vunpack.c.0.s8 %v269
    %v271 = vlaneseq
    %v272 = vshrl.u32 %v271, 7
    %v273 = vsub.s32 %v270, %v272
    %v274 = vrot.slane %v266, %v273
    %v276 = vunpack.c.l.s4 1934713408
    %v277 = vunpack.c.0.s8 %v276
    %v278 = vlaneseq
    %v279 = vshrl.u32 %v278, 7
    %v280 = vsub.s32 %v277, %v279
    %v281 = vrot.slane %v267, %v280
    %v282 = vcombine.low %v249, %v265
    %v283 = vcombine.high %v249, %v265
    %v285 = vunpack.c.l.s4 1934713408
    %v286 = vunpack.c.0.s8 %v285
    %v287 = vlaneseq
    %v288 = vshrl.u32 %v287, 7
    %v289 = vsub.s32 %v286, %v288
    %v290 = vrot.slane %v282, %v289
    %v292 = vunpack.c.l.s4 1934713408
    %v293 = vunpack.c.0.s8 %v292
    %v294 = vlaneseq
    %v295 = vshrl.u32 %v294, 7
    %v296 = vsub.s32 %v293, %v295
    %v297 = vrot.slane %v283, %v296
    %v298 = vcombine.high %v274, 0.0
    %v299 = vcombine.high %v281, 0.0
    %v300 = vcombine.high %v290, 0.0
    %v301 = vcombine.high %v297, 0.0
    %v302 = vcombine.low %v213, %v225
    %v303 = vcombine.high %v213, %v225
    %v305 = vunpack.c.l.s4 1983009808
    %v306 = vunpack.c.0.s8 %v305
    %v307 = vlaneseq
    %v308 = vshrl.u32 %v307, 7
    %v309 = vsub.s32 %v306, %v308
    %v310 = vrot.slane %v302, %v309
    %v312 = vunpack.c.l.s4 1983009808
    %v313 = vunpack.c.0.s8 %v312
    %v314 = vlaneseq
    %v315 = vshrl.u32 %v314, 7
    %v316 = vsub.s32 %v313, %v315
    %v317 = vrot.slane %v303, %v316
    %v318 = vcombine.low %v219, %v231
    %v319 = vcombine.high %v219, %v231
    %v321 = vunpack.c.l.s4 1983009808
    %v322 = vunpack.c.0.s8 %v321
    %v323 = vlaneseq
    %v324 = vshrl.u32 %v323, 7
    %v325 = vsub.s32 %v322, %v324
    %v326 = vrot.slane %v318, %v325
    %v328 = vunpack.c.l.s4 1983009808
    %v329 = vunpack.c.0.s8 %v328
    %v330 = vlaneseq
    %v331 = vshrl.u32 %v330, 7
    %v332 = vsub.s32 %v329, %v331
    %v333 = vrot.slane %v319, %v332
    %v334 = vcombine.low %v310, %v326
    %v335 = vcombine.high %v310, %v326
    %v337 = vunpack.c.l.s4 1934713408
    %v338 = vunpack.c.0.s8 %v337
    %v339 = vlaneseq
    %v340 = vshrl.u32 %v339, 7
    %v341 = vsub.s32 %v338, %v340
    %v342 = vrot.slane %v334, %v341
    %v344 = vunpack.c.l.s4 1934713408
    %v345 = vunpack.c.0.s8 %v344
    %v346 = vlaneseq
    %v347 = vshrl.u32 %v346, 7
    %v348 = vsub.s32 %v345, %v347
    %v349 = vrot.slane %v335, %v348
    %v350 = vcombine.low %v317, %v333
    %v351 = vcombine.high %v317, %v333
    %v353 = vunpack.c.l.s4 1934713408
    %v354 = vunpack.c.0.s8 %v353
    %v355 = vlaneseq
    %v356 = vshrl.u32 %v355, 7
    %v357 = vsub.s32 %v354, %v356
    %v358 = vrot.slane %v350, %v357
    %v360 = vunpack.c.l.s4 1934713408
    %v361 = vunpack.c.0.s8 %v360
    %v362 = vlaneseq
    %v363 = vshrl.u32 %v362, 7
    %v364 = vsub.s32 %v361, %v363
    %v365 = vrot.slane %v351, %v364
    %v366 = vcombine.high %v342, 0.0
    %v367 = vcombine.high %v349, 0.0
    %v368 = vcombine.high %v358, 0.0
    %v369 = vcombine.high %v365, 0.0
    %v370 = vcombine.low %v274, %v281
    %v372 = vunpack.c.l.s4 1983009808
    %v373 = vunpack.c.0.s8 %v372
    %v374 = vlaneseq
    %v375 = vshrl.u32 %v374, 7
    %v376 = vsub.s32 %v373, %v375
    %v377 = vrot.slane %v370, %v376
    %v378 = vcombine.low %v298, %v299
    %v380 = vunpack.c.l.s4 1983009808
    %v381 = vunpack.c.0.s8 %v380
    %v382 = vlaneseq
    %v383 = vshrl.u32 %v382, 7
    %v384 = vsub.s32 %v381, %v383
    %v385 = vrot.slane %v378, %v384
    %v386 = vcombine.low %v290, %v297
    %v388 = vunpack.c.l.s4 1983009808
    %v389 = vunpack.c.0.s8 %v388
    %v390 = vlaneseq
    %v391 = vshrl.u32 %v390, 7
    %v392 = vsub.s32 %v389, %v391
    %v393 = vrot.slane %v386, %v392
    %v394 = vcombine.low %v300, %v301
    %v396 = vunpack.c.l.s4 1983009808
    %v397 = vunpack.c.0.s8 %v396
    %v398 = vlaneseq
    %v399 = vshrl.u32 %v398, 7
    %v400 = vsub.s32 %v397, %v399
    %v401 = vrot.slane %v394, %v400
    %v402 = vcombine.low %v377, %v385
    %v403 = vcombine.high %v377, %v385
    %v405 = vunpack.c.l.s4 1934713408
    %v406 = vunpack.c.0.s8 %v405
    %v407 = vlaneseq
    %v408 = vshrl.u32 %v407, 7
    %v409 = vsub.s32 %v406, %v408
    %v410 = vrot.slane %v402, %v409
    %v412 = vunpack.c.l.s4 1934713408
    %v413 = vunpack.c.0.s8 %v412
    %v414 = vlaneseq
    %v415 = vshrl.u32 %v414, 7
    %v416 = vsub.s32 %v413, %v415
    %v417 = vrot.slane %v403, %v416
    %v418 = vcombine.low %v393, %v401
    %v419 = vcombine.high %v393, %v401
    %v421 = vunpack.c.l.s4 1934713408
    %v422 = vunpack.c.0.s8 %v421
    %v423 = vlaneseq
    %v424 = vshrl.u32 %v423, 7
    %v425 = vsub.s32 %v422, %v424
    %v426 = vrot.slane %v418, %v425
    %v428 = vunpack.c.l.s4 1934713408
    %v429 = vunpack.c.0.s8 %v428
    %v430 = vlaneseq
    %v431 = vshrl.u32 %v430, 7
    %v432 = vsub.s32 %v429, %v431
    %v433 = vrot.slane %v419, %v432
    %v434 = vcombine.low %v410, %v426
    %v435 = vcombine.high %v410, %v426
    %v436 = vcombine.low %v417, %v433
    %v437 = vcombine.high %v417, %v433
    %v438 = vcombine.low %v342, %v349
    %v440 = vunpack.c.l.s4 1983009808
    %v441 = vunpack.c.0.s8 %v440
    %v442 = vlaneseq
    %v443 = vshrl.u32 %v442, 7
    %v444 = vsub.s32 %v441, %v443
    %v445 = vrot.slane %v438, %v444
    %v446 = vcombine.low %v366, %v367
    %v448 = vunpack.c.l.s4 1983009808
    %v449 = vunpack.c.0.s8 %v448
    %v450 = vlaneseq
    %v451 = vshrl.u32 %v450, 7
    %v452 = vsub.s32 %v449, %v451
    %v453 = vrot.slane %v446, %v452
    %v454 = vcombine.low %v358, %v365
    %v456 = vunpack.c.l.s4 1983009808
    %v457 = vunpack.c.0.s8 %v456
    %v458 = vlaneseq
    %v459 = vshrl.u32 %v458, 7
    %v460 = vsub.s32 %v457, %v459
    %v461 = vrot.slane %v454, %v460
    %v462 = vcombine.low %v368, %v369
    %v464 = vunpack.c.l.s4 1983009808
    %v465 = vunpack.c.0.s8 %v464
    %v466 = vlaneseq
    %v467 = vshrl.u32 %v466, 7
    %v468 = vsub.s32 %v465, %v467
    %v469 = vrot.slane %v462, %v468
    %v470 = vcombine.low %v445, %v453
    %v471 = vcombine.high %v445, %v453
    %v473 = vunpack.c.l.s4 1934713408
    %v474 = vunpack.c.0.s8 %v473
    %v475 = vlaneseq
    %v476 = vshrl.u32 %v475, 7
    %v477 = vsub.s32 %v474, %v476
    %v478 = vrot.slane %v470, %v477
    %v480 = vunpack.c.l.s4 1934713408
    %v481 = vunpack.c.0.s8 %v480
    %v482 = vlaneseq
    %v483 = vshrl.u32 %v482, 7
    %v484 = vsub.s32 %v481, %v483
    %v485 = vrot.slane %v471, %v484
    %v486 = vcombine.low %v461, %v469
    %v487 = vcombine.high %v461, %v469
    %v489 = vunpack.c.l.s4 1934713408
    %v490 = vunpack.c.0.s8 %v489
    %v491 = vlaneseq
    %v492 = vshrl.u32 %v491, 7
    %v493 = vsub.s32 %v490, %v492
    %v494 = vrot.slane %v486, %v493
    %v496 = vunpack.c.l.s4 1934713408
    %v497 = vunpack.c.0.s8 %v496
    %v498 = vlaneseq
    %v499 = vshrl.u32 %v498, 7
    %v500 = vsub.s32 %v497, %v499
    %v501 = vrot.slane %v487, %v500
    %v502 = vcombine.low %v478, %v494
    %v503 = vcombine.high %v478, %v494
    %v504 = vcombine.low %v485, %v501
    %v505 = vcombine.high %v485, %v501
    %v506 = vpack.c.bf16 %v434, %v434
    %v507 = vpack.c.bf16 %v435, %v435
    %v508 = vpack.c.bf16 %v436, %v436
    %v509 = vpack.c.bf16 %v437, %v437
    %v510 = vpack.c.bf16 %v502, %v502
    %v511 = vpack.c.bf16 %v503, %v503
    %v512 = vpack.c.bf16 %v504, %v504
    %v513 = vpack.c.bf16 %v505, %v505
    %516 = vrot.lane.b32.xlu0 %v206, 120
    %v517 = vpop.permute.xlu0 %516
    %518 = vrot.lane.b32.xlu0 %v209, 120
    %v519 = vpop.permute.xlu0 %518
    %520 = vrot.lane.b32.xlu0 %v206, 112
    %v521 = vpop.permute.xlu0 %520
    %522 = vrot.lane.b32.xlu0 %v209, 112
    %v523 = vpop.permute.xlu0 %522
    %524 = vrot.lane.b32.xlu0 %v206, 104
    %v525 = vpop.permute.xlu0 %524
    %526 = vrot.lane.b32.xlu0 %v209, 104
    %v527 = vpop.permute.xlu0 %526
    %528 = vrot.lane.b32.xlu0 %v206, 96
    %v529 = vpop.permute.xlu0 %528
    %530 = vrot.lane.b32.xlu0 %v209, 96
    %v531 = vpop.permute.xlu0 %530
    %532 = vrot.lane.b32.xlu0 %v517, 96
    %v533 = vpop.permute.xlu0 %532
    %534 = vrot.lane.b32.xlu0 %v519, 96
    %v535 = vpop.permute.xlu0 %534
    %536 = vrot.lane.b32.xlu0 %v521, 96
    %v537 = vpop.permute.xlu0 %536
    %538 = vrot.lane.b32.xlu0 %v523, 96
    %v539 = vpop.permute.xlu0 %538
    %540 = vrot.lane.b32.xlu0 %v525, 96
    %v541 = vpop.permute.xlu0 %540
    %542 = vrot.lane.b32.xlu0 %v527, 96
    %v543 = vpop.permute.xlu0 %542
    %v552 = vcombine.low %v529, %v537
    %v553 = vcombine.high %v529, %v537
    %v555 = vunpack.c.l.s4 1983009808
    %v556 = vunpack.c.0.s8 %v555
    %v557 = vlaneseq
    %v558 = vshrl.u32 %v557, 7
    %v559 = vsub.s32 %v556, %v558
    %v560 = vrot.slane %v552, %v559
    %v562 = vunpack.c.l.s4 1983009808
    %v563 = vunpack.c.0.s8 %v562
    %v564 = vlaneseq
    %v565 = vshrl.u32 %v564, 7
    %v566 = vsub.s32 %v563, %v565
    %v567 = vrot.slane %v553, %v566
    %v568 = vcombine.low %v533, %v541
    %v569 = vcombine.high %v533, %v541
    %v571 = vunpack.c.l.s4 1983009808
    %v572 = vunpack.c.0.s8 %v571
    %v573 = vlaneseq
    %v574 = vshrl.u32 %v573, 7
    %v575 = vsub.s32 %v572, %v574
    %v576 = vrot.slane %v568, %v575
    %v578 = vunpack.c.l.s4 1983009808
    %v579 = vunpack.c.0.s8 %v578
    %v580 = vlaneseq
    %v581 = vshrl.u32 %v580, 7
    %v582 = vsub.s32 %v579, %v581
    %v583 = vrot.slane %v569, %v582
    %v584 = vcombine.low %v560, %v576
    %v585 = vcombine.high %v560, %v576
    %v587 = vunpack.c.l.s4 1934713408
    %v588 = vunpack.c.0.s8 %v587
    %v589 = vlaneseq
    %v590 = vshrl.u32 %v589, 7
    %v591 = vsub.s32 %v588, %v590
    %v592 = vrot.slane %v584, %v591
    %v594 = vunpack.c.l.s4 1934713408
    %v595 = vunpack.c.0.s8 %v594
    %v596 = vlaneseq
    %v597 = vshrl.u32 %v596, 7
    %v598 = vsub.s32 %v595, %v597
    %v599 = vrot.slane %v585, %v598
    %v600 = vcombine.low %v567, %v583
    %v601 = vcombine.high %v567, %v583
    %v603 = vunpack.c.l.s4 1934713408
    %v604 = vunpack.c.0.s8 %v603
    %v605 = vlaneseq
    %v606 = vshrl.u32 %v605, 7
    %v607 = vsub.s32 %v604, %v606
    %v608 = vrot.slane %v600, %v607
    %v610 = vunpack.c.l.s4 1934713408
    %v611 = vunpack.c.0.s8 %v610
    %v612 = vlaneseq
    %v613 = vshrl.u32 %v612, 7
    %v614 = vsub.s32 %v611, %v613
    %v615 = vrot.slane %v601, %v614
    %v616 = vcombine.high %v592, 0.0
    %v617 = vcombine.high %v599, 0.0
    %v618 = vcombine.high %v608, 0.0
    %v619 = vcombine.high %v615, 0.0
    %v620 = vcombine.low %v531, %v539
    %v621 = vcombine.high %v531, %v539
    %v623 = vunpack.c.l.s4 1983009808
    %v624 = vunpack.c.0.s8 %v623
    %v625 = vlaneseq
    %v626 = vshrl.u32 %v625, 7
    %v627 = vsub.s32 %v624, %v626
    %v628 = vrot.slane %v620, %v627
    %v630 = vunpack.c.l.s4 1983009808
    %v631 = vunpack.c.0.s8 %v630
    %v632 = vlaneseq
    %v633 = vshrl.u32 %v632, 7
    %v634 = vsub.s32 %v631, %v633
    %v635 = vrot.slane %v621, %v634
    %v636 = vcombine.low %v535, %v543
    %v637 = vcombine.high %v535, %v543
    %v639 = vunpack.c.l.s4 1983009808
    %v640 = vunpack.c.0.s8 %v639
    %v641 = vlaneseq
    %v642 = vshrl.u32 %v641, 7
    %v643 = vsub.s32 %v640, %v642
    %v644 = vrot.slane %v636, %v643
    %v646 = vunpack.c.l.s4 1983009808
    %v647 = vunpack.c.0.s8 %v646
    %v648 = vlaneseq
    %v649 = vshrl.u32 %v648, 7
    %v650 = vsub.s32 %v647, %v649
    %v651 = vrot.slane %v637, %v650
    %v652 = vcombine.low %v628, %v644
    %v653 = vcombine.high %v628, %v644
    %v655 = vunpack.c.l.s4 1934713408
    %v656 = vunpack.c.0.s8 %v655
    %v657 = vlaneseq
    %v658 = vshrl.u32 %v657, 7
    %v659 = vsub.s32 %v656, %v658
    %v660 = vrot.slane %v652, %v659
    %v662 = vunpack.c.l.s4 1934713408
    %v663 = vunpack.c.0.s8 %v662
    %v664 = vlaneseq
    %v665 = vshrl.u32 %v664, 7
    %v666 = vsub.s32 %v663, %v665
    %v667 = vrot.slane %v653, %v666
    %v668 = vcombine.low %v635, %v651
    %v669 = vcombine.high %v635, %v651
    %v671 = vunpack.c.l.s4 1934713408
    %v672 = vunpack.c.0.s8 %v671
    %v673 = vlaneseq
    %v674 = vshrl.u32 %v673, 7
    %v675 = vsub.s32 %v672, %v674
    %v676 = vrot.slane %v668, %v675
    %v678 = vunpack.c.l.s4 1934713408
    %v679 = vunpack.c.0.s8 %v678
    %v680 = vlaneseq
    %v681 = vshrl.u32 %v680, 7
    %v682 = vsub.s32 %v679, %v681
    %v683 = vrot.slane %v669, %v682
    %v684 = vcombine.high %v660, 0.0
    %v685 = vcombine.high %v667, 0.0
    %v686 = vcombine.high %v676, 0.0
    %v687 = vcombine.high %v683, 0.0
    %v688 = vcombine.low %v592, %v599
    %v690 = vunpack.c.l.s4 1983009808
    %v691 = vunpack.c.0.s8 %v690
    %v692 = vlaneseq
    %v693 = vshrl.u32 %v692, 7
    %v694 = vsub.s32 %v691, %v693
    %v695 = vrot.slane %v688, %v694
    %v696 = vcombine.low %v616, %v617
    %v698 = vunpack.c.l.s4 1983009808
    %v699 = vunpack.c.0.s8 %v698
    %v700 = vlaneseq
    %v701 = vshrl.u32 %v700, 7
    %v702 = vsub.s32 %v699, %v701
    %v703 = vrot.slane %v696, %v702
    %v704 = vcombine.low %v608, %v615
    %v706 = vunpack.c.l.s4 1983009808
    %v707 = vunpack.c.0.s8 %v706
    %v708 = vlaneseq
    %v709 = vshrl.u32 %v708, 7
    %v710 = vsub.s32 %v707, %v709
    %v711 = vrot.slane %v704, %v710
    %v712 = vcombine.low %v618, %v619
    %v714 = vunpack.c.l.s4 1983009808
    %v715 = vunpack.c.0.s8 %v714
    %v716 = vlaneseq
    %v717 = vshrl.u32 %v716, 7
    %v718 = vsub.s32 %v715, %v717
    %v719 = vrot.slane %v712, %v718
    %v720 = vcombine.low %v695, %v703
    %v721 = vcombine.high %v695, %v703
    %v723 = vunpack.c.l.s4 1934713408
    %v724 = vunpack.c.0.s8 %v723
    %v725 = vlaneseq
    %v726 = vshrl.u32 %v725, 7
    %v727 = vsub.s32 %v724, %v726
    %v728 = vrot.slane %v720, %v727
    %v730 = vunpack.c.l.s4 1934713408
    %v731 = vunpack.c.0.s8 %v730
    %v732 = vlaneseq
    %v733 = vshrl.u32 %v732, 7
    %v734 = vsub.s32 %v731, %v733
    %v735 = vrot.slane %v721, %v734
    %v736 = vcombine.low %v711, %v719
    %v737 = vcombine.high %v711, %v719
    %v739 = vunpack.c.l.s4 1934713408
    %v740 = vunpack.c.0.s8 %v739
    %v741 = vlaneseq
    %v742 = vshrl.u32 %v741, 7
    %v743 = vsub.s32 %v740, %v742
    %v744 = vrot.slane %v736, %v743
    %v746 = vunpack.c.l.s4 1934713408
    %v747 = vunpack.c.0.s8 %v746
    %v748 = vlaneseq
    %v749 = vshrl.u32 %v748, 7
    %v750 = vsub.s32 %v747, %v749
    %v751 = vrot.slane %v737, %v750
    %v752 = vcombine.low %v728, %v744
    %v753 = vcombine.high %v728, %v744
    %v754 = vcombine.low %v735, %v751
    %v755 = vcombine.high %v735, %v751
    %v756 = vcombine.low %v660, %v667
    %v758 = vunpack.c.l.s4 1983009808
    %v759 = vunpack.c.0.s8 %v758
    %v760 = vlaneseq
    %v761 = vshrl.u32 %v760, 7
    %v762 = vsub.s32 %v759, %v761
    %v763 = vrot.slane %v756, %v762
    %v764 = vcombine.low %v684, %v685
    %v766 = vunpack.c.l.s4 1983009808
    %v767 = vunpack.c.0.s8 %v766
    %v768 = vlaneseq
    %v769 = vshrl.u32 %v768, 7
    %v770 = vsub.s32 %v767, %v769
    %v771 = vrot.slane %v764, %v770
    %v772 = vcombine.low %v676, %v683
    %v774 = vunpack.c.l.s4 1983009808
    %v775 = vunpack.c.0.s8 %v774
    %v776 = vlaneseq
    %v777 = vshrl.u32 %v776, 7
    %v778 = vsub.s32 %v775, %v777
    %v779 = vrot.slane %v772, %v778
    %v780 = vcombine.low %v686, %v687
    %v782 = vunpack.c.l.s4 1983009808
    %v783 = vunpack.c.0.s8 %v782
    %v784 = vlaneseq
    %v785 = vshrl.u32 %v784, 7
    %v786 = vsub.s32 %v783, %v785
    %v787 = vrot.slane %v780, %v786
    %v788 = vcombine.low %v763, %v771
    %v789 = vcombine.high %v763, %v771
    %v791 = vunpack.c.l.s4 1934713408
    %v792 = vunpack.c.0.s8 %v791
    %v793 = vlaneseq
    %v794 = vshrl.u32 %v793, 7
    %v795 = vsub.s32 %v792, %v794
    %v796 = vrot.slane %v788, %v795
    %v798 = vunpack.c.l.s4 1934713408
    %v799 = vunpack.c.0.s8 %v798
    %v800 = vlaneseq
    %v801 = vshrl.u32 %v800, 7
    %v802 = vsub.s32 %v799, %v801
    %v803 = vrot.slane %v789, %v802
    %v804 = vcombine.low %v779, %v787
    %v805 = vcombine.high %v779, %v787
    %v807 = vunpack.c.l.s4 1934713408
    %v808 = vunpack.c.0.s8 %v807
    %v809 = vlaneseq
    %v810 = vshrl.u32 %v809, 7
    %v811 = vsub.s32 %v808, %v810
    %v812 = vrot.slane %v804, %v811
    %v814 = vunpack.c.l.s4 1934713408
    %v815 = vunpack.c.0.s8 %v814
    %v816 = vlaneseq
    %v817 = vshrl.u32 %v816, 7
    %v818 = vsub.s32 %v815, %v817
    %v819 = vrot.slane %v805, %v818
    %v820 = vcombine.low %v796, %v812
    %v821 = vcombine.high %v796, %v812
    %v822 = vcombine.low %v803, %v819
    %v823 = vcombine.high %v803, %v819
    %v824 = vpack.c.bf16 %v752, %v752
    %v825 = vpack.c.bf16 %v753, %v753
    %v826 = vpack.c.bf16 %v754, %v754
    %v827 = vpack.c.bf16 %v755, %v755
    %v828 = vpack.c.bf16 %v820, %v820
    %v829 = vpack.c.bf16 %v821, %v821
    %v830 = vpack.c.bf16 %v822, %v822
    %v831 = vpack.c.bf16 %v823, %v823
    %832 = vrot.lane.b32.xlu0 %v206, 64
    %v833 = vpop.permute.xlu0 %832
    %834 = vrot.lane.b32.xlu0 %v209, 64
    %v835 = vpop.permute.xlu0 %834
    %836 = vrot.lane.b32.xlu0 %v517, 64
    %v837 = vpop.permute.xlu0 %836
    %838 = vrot.lane.b32.xlu0 %v519, 64
    %v839 = vpop.permute.xlu0 %838
    %840 = vrot.lane.b32.xlu0 %v521, 64
    %v841 = vpop.permute.xlu0 %840
    %842 = vrot.lane.b32.xlu0 %v523, 64
    %v843 = vpop.permute.xlu0 %842
    %844 = vrot.lane.b32.xlu0 %v525, 64
    %v845 = vpop.permute.xlu0 %844
    %846 = vrot.lane.b32.xlu0 %v527, 64
    %v847 = vpop.permute.xlu0 %846
    %v856 = vcombine.low %v833, %v841
    %v857 = vcombine.high %v833, %v841
    %v859 = vunpack.c.l.s4 1983009808
    %v860 = vunpack.c.0.s8 %v859
    %v861 = vlaneseq
    %v862 = vshrl.u32 %v861, 7
    %v863 = vsub.s32 %v860, %v862
    %v864 = vrot.slane %v856, %v863
    %v866 = vunpack.c.l.s4 1983009808
    %v867 = vunpack.c.0.s8 %v866
    %v868 = vlaneseq
    %v869 = vshrl.u32 %v868, 7
    %v870 = vsub.s32 %v867, %v869
    %v871 = vrot.slane %v857, %v870
    %v872 = vcombine.low %v837, %v845
    %v873 = vcombine.high %v837, %v845
    %v875 = vunpack.c.l.s4 1983009808
    %v876 = vunpack.c.0.s8 %v875
    %v877 = vlaneseq
    %v878 = vshrl.u32 %v877, 7
    %v879 = vsub.s32 %v876, %v878
    %v880 = vrot.slane %v872, %v879
    %v882 = vunpack.c.l.s4 1983009808
    %v883 = vunpack.c.0.s8 %v882
    %v884 = vlaneseq
    %v885 = vshrl.u32 %v884, 7
    %v886 = vsub.s32 %v883, %v885
    %v887 = vrot.slane %v873, %v886
    %v888 = vcombine.low %v864, %v880
    %v889 = vcombine.high %v864, %v880
    %v891 = vunpack.c.l.s4 1934713408
    %v892 = vunpack.c.0.s8 %v891
    %v893 = vlaneseq
    %v894 = vshrl.u32 %v893, 7
    %v895 = vsub.s32 %v892, %v894
    %v896 = vrot.slane %v888, %v895
    %v898 = vunpack.c.l.s4 1934713408
    %v899 = vunpack.c.0.s8 %v898
    %v900 = vlaneseq
    %v901 = vshrl.u32 %v900, 7
    %v902 = vsub.s32 %v899, %v901
    %v903 = vrot.slane %v889, %v902
    %v904 = vcombine.low %v871, %v887
    %v905 = vcombine.high %v871, %v887
    %v907 = vunpack.c.l.s4 1934713408
    %v908 = vunpack.c.0.s8 %v907
    %v909 = vlaneseq
    %v910 = vshrl.u32 %v909, 7
    %v911 = vsub.s32 %v908, %v910
    %v912 = vrot.slane %v904, %v911
    %v914 = vunpack.c.l.s4 1934713408
    %v915 = vunpack.c.0.s8 %v914
    %v916 = vlaneseq
    %v917 = vshrl.u32 %v916, 7
    %v918 = vsub.s32 %v915, %v917
    %v919 = vrot.slane %v905, %v918
    %v920 = vcombine.high %v896, 0.0
    %v921 = vcombine.high %v903, 0.0
    %v922 = vcombine.high %v912, 0.0
    %v923 = vcombine.high %v919, 0.0
    %v924 = vcombine.low %v835, %v843
    %v925 = vcombine.high %v835, %v843
    %v927 = vunpack.c.l.s4 1983009808
    %v928 = vunpack.c.0.s8 %v927
    %v929 = vlaneseq
    %v930 = vshrl.u32 %v929, 7
    %v931 = vsub.s32 %v928, %v930
    %v932 = vrot.slane %v924, %v931
    %v934 = vunpack.c.l.s4 1983009808
    %v935 = vunpack.c.0.s8 %v934
    %v936 = vlaneseq
    %v937 = vshrl.u32 %v936, 7
    %v938 = vsub.s32 %v935, %v937
    %v939 = vrot.slane %v925, %v938
    %v940 = vcombine.low %v839, %v847
    %v941 = vcombine.high %v839, %v847
    %v943 = vunpack.c.l.s4 1983009808
    %v944 = vunpack.c.0.s8 %v943
    %v945 = vlaneseq
    %v946 = vshrl.u32 %v945, 7
    %v947 = vsub.s32 %v944, %v946
    %v948 = vrot.slane %v940, %v947
    %v950 = vunpack.c.l.s4 1983009808
    %v951 = vunpack.c.0.s8 %v950
    %v952 = vlaneseq
    %v953 = vshrl.u32 %v952, 7
    %v954 = vsub.s32 %v951, %v953
    %v955 = vrot.slane %v941, %v954
    %v956 = vcombine.low %v932, %v948
    %v957 = vcombine.high %v932, %v948
    %v959 = vunpack.c.l.s4 1934713408
    %v960 = vunpack.c.0.s8 %v959
    %v961 = vlaneseq
    %v962 = vshrl.u32 %v961, 7
    %v963 = vsub.s32 %v960, %v962
    %v964 = vrot.slane %v956, %v963
    %v966 = vunpack.c.l.s4 1934713408
    %v967 = vunpack.c.0.s8 %v966
    %v968 = vlaneseq
    %v969 = vshrl.u32 %v968, 7
    %v970 = vsub.s32 %v967, %v969
    %v971 = vrot.slane %v957, %v970
    %v972 = vcombine.low %v939, %v955
    %v973 = vcombine.high %v939, %v955
    %v975 = vunpack.c.l.s4 1934713408
    %v976 = vunpack.c.0.s8 %v975
    %v977 = vlaneseq
    %v978 = vshrl.u32 %v977, 7
    %v979 = vsub.s32 %v976, %v978
    %v980 = vrot.slane %v972, %v979
    %v982 = vunpack.c.l.s4 1934713408
    %v983 = vunpack.c.0.s8 %v982
    %v984 = vlaneseq
    %v985 = vshrl.u32 %v984, 7
    %v986 = vsub.s32 %v983, %v985
    %v987 = vrot.slane %v973, %v986
    %v988 = vcombine.high %v964, 0.0
    %v989 = vcombine.high %v971, 0.0
    %v990 = vcombine.high %v980, 0.0
    %v991 = vcombine.high %v987, 0.0
    %v992 = vcombine.low %v896, %v903
    %v994 = vunpack.c.l.s4 1983009808
    %v995 = vunpack.c.0.s8 %v994
    %v996 = vlaneseq
    %v997 = vshrl.u32 %v996, 7
    %v998 = vsub.s32 %v995, %v997
    %v999 = vrot.slane %v992, %v998
    %v1000 = vcombine.low %v920, %v921
    %v1002 = vunpack.c.l.s4 1983009808
    %v1003 = vunpack.c.0.s8 %v1002
    %v1004 = vlaneseq
    %v1005 = vshrl.u32 %v1004, 7
    %v1006 = vsub.s32 %v1003, %v1005
    %v1007 = vrot.slane %v1000, %v1006
    %v1008 = vcombine.low %v912, %v919
    %v1010 = vunpack.c.l.s4 1983009808
    %v1011 = vunpack.c.0.s8 %v1010
    %v1012 = vlaneseq
    %v1013 = vshrl.u32 %v1012, 7
    %v1014 = vsub.s32 %v1011, %v1013
    %v1015 = vrot.slane %v1008, %v1014
    %v1016 = vcombine.low %v922, %v923
    %v1018 = vunpack.c.l.s4 1983009808
    %v1019 = vunpack.c.0.s8 %v1018
    %v1020 = vlaneseq
    %v1021 = vshrl.u32 %v1020, 7
    %v1022 = vsub.s32 %v1019, %v1021
    %v1023 = vrot.slane %v1016, %v1022
    %v1024 = vcombine.low %v999, %v1007
    %v1025 = vcombine.high %v999, %v1007
    %v1027 = vunpack.c.l.s4 1934713408
    %v1028 = vunpack.c.0.s8 %v1027
    %v1029 = vlaneseq
    %v1030 = vshrl.u32 %v1029, 7
    %v1031 = vsub.s32 %v1028, %v1030
    %v1032 = vrot.slane %v1024, %v1031
    %v1034 = vunpack.c.l.s4 1934713408
    %v1035 = vunpack.c.0.s8 %v1034
    %v1036 = vlaneseq
    %v1037 = vshrl.u32 %v1036, 7
    %v1038 = vsub.s32 %v1035, %v1037
    %v1039 = vrot.slane %v1025, %v1038
    %v1040 = vcombine.low %v1015, %v1023
    %v1041 = vcombine.high %v1015, %v1023
    %v1043 = vunpack.c.l.s4 1934713408
    %v1044 = vunpack.c.0.s8 %v1043
    %v1045 = vlaneseq
    %v1046 = vshrl.u32 %v1045, 7
    %v1047 = vsub.s32 %v1044, %v1046
    %v1048 = vrot.slane %v1040, %v1047
    %v1050 = vunpack.c.l.s4 1934713408
    %v1051 = vunpack.c.0.s8 %v1050
    %v1052 = vlaneseq
    %v1053 = vshrl.u32 %v1052, 7
    %v1054 = vsub.s32 %v1051, %v1053
    %v1055 = vrot.slane %v1041, %v1054
    %v1056 = vcombine.low %v1032, %v1048
    %v1057 = vcombine.high %v1032, %v1048
    %v1058 = vcombine.low %v1039, %v1055
    %v1059 = vcombine.high %v1039, %v1055
    %v1060 = vcombine.low %v964, %v971
    %v1062 = vunpack.c.l.s4 1983009808
    %v1063 = vunpack.c.0.s8 %v1062
    %v1064 = vlaneseq
    %v1065 = vshrl.u32 %v1064, 7
    %v1066 = vsub.s32 %v1063, %v1065
    %v1067 = vrot.slane %v1060, %v1066
    %v1068 = vcombine.low %v988, %v989
    %v1070 = vunpack.c.l.s4 1983009808
    %v1071 = vunpack.c.0.s8 %v1070
    %v1072 = vlaneseq
    %v1073 = vshrl.u32 %v1072, 7
    %v1074 = vsub.s32 %v1071, %v1073
    %v1075 = vrot.slane %v1068, %v1074
    %v1076 = vcombine.low %v980, %v987
    %v1078 = vunpack.c.l.s4 1983009808
    %v1079 = vunpack.c.0.s8 %v1078
    %v1080 = vlaneseq
    %v1081 = vshrl.u32 %v1080, 7
    %v1082 = vsub.s32 %v1079, %v1081
    %v1083 = vrot.slane %v1076, %v1082
    %v1084 = vcombine.low %v990, %v991
    %v1086 = vunpack.c.l.s4 1983009808
    %v1087 = vunpack.c.0.s8 %v1086
    %v1088 = vlaneseq
    %v1089 = vshrl.u32 %v1088, 7
    %v1090 = vsub.s32 %v1087, %v1089
    %v1091 = vrot.slane %v1084, %v1090
    %v1092 = vcombine.low %v1067, %v1075
    %v1093 = vcombine.high %v1067, %v1075
    %v1095 = vunpack.c.l.s4 1934713408
    %v1096 = vunpack.c.0.s8 %v1095
    %v1097 = vlaneseq
    %v1098 = vshrl.u32 %v1097, 7
    %v1099 = vsub.s32 %v1096, %v1098
    %v1100 = vrot.slane %v1092, %v1099
    %v1102 = vunpack.c.l.s4 1934713408
    %v1103 = vunpack.c.0.s8 %v1102
    %v1104 = vlaneseq
    %v1105 = vshrl.u32 %v1104, 7
    %v1106 = vsub.s32 %v1103, %v1105
    %v1107 = vrot.slane %v1093, %v1106
    %v1108 = vcombine.low %v1083, %v1091
    %v1109 = vcombine.high %v1083, %v1091
    %v1111 = vunpack.c.l.s4 1934713408
    %v1112 = vunpack.c.0.s8 %v1111
    %v1113 = vlaneseq
    %v1114 = vshrl.u32 %v1113, 7
    %v1115 = vsub.s32 %v1112, %v1114
    %v1116 = vrot.slane %v1108, %v1115
    %v1118 = vunpack.c.l.s4 1934713408
    %v1119 = vunpack.c.0.s8 %v1118
    %v1120 = vlaneseq
    %v1121 = vshrl.u32 %v1120, 7
    %v1122 = vsub.s32 %v1119, %v1121
    %v1123 = vrot.slane %v1109, %v1122
    %v1124 = vcombine.low %v1100, %v1116
    %v1125 = vcombine.high %v1100, %v1116
    %v1126 = vcombine.low %v1107, %v1123
    %v1127 = vcombine.high %v1107, %v1123
    %v1128 = vpack.c.bf16 %v1056, %v1056
    %v1129 = vpack.c.bf16 %v1057, %v1057
    %v1130 = vpack.c.bf16 %v1058, %v1058
    %v1131 = vpack.c.bf16 %v1059, %v1059
    %v1132 = vpack.c.bf16 %v1124, %v1124
    %v1133 = vpack.c.bf16 %v1125, %v1125
    %v1134 = vpack.c.bf16 %v1126, %v1126
    %v1135 = vpack.c.bf16 %v1127, %v1127
    %vm1136 = vcmask 64512
    %v1138 = vsel %vm1136, %v506, 0
    %v1141 = vsel %vm1136, %v824, 0
    %1143 = vmatprep.subr.bf16.mxu0 0
    %1144 = vmatpush1.bf16.xpose.msra.mxu0 0
    %1145 = vmatprep.subr.bf16.mxu0 0
    %1146 = vmatpush1.bf16.xpose.msra.mxu0 0
    %1147 = vmatprep.subr.bf16.mxu0 0
    %1148 = vmatpush1.bf16.xpose.msra.mxu0 0
    %1149 = vmatprep.subr.bf16.mxu0 0
    %1150 = vmatpush1.bf16.xpose.msra.mxu0 0
    %1151 = vmatprep.subr.bf16.mxu0 0
    %1152 = vmatpush1.bf16.xpose.msra.mxu0 0
    %1153 = vmatprep.subr.bf16.mxu0 0
    %1154 = vmatpush1.bf16.xpose.msra.mxu0 0
    %1155 = vmatprep.subr.bf16.mxu0 0
    %1156 = vmatpush1.bf16.xpose.msra.mxu0 0
    %1157 = vmatprep.subr.bf16.mxu0 0
    %1158 = vmatpush1.bf16.xpose.msra.mxu0 %v1141
    %1159 = vmatprep.subr.bf16.mxu0 0
    %1160 = vmatpush2.bf16.xpose.msra.mxu0 0
    %1161 = vmatprep.subr.bf16.mxu0 0
    %1162 = vmatpush2.bf16.xpose.msra.mxu0 0
    %1163 = vmatprep.subr.bf16.mxu0 0
    %1164 = vmatpush2.bf16.xpose.msra.mxu0 0
    %1165 = vmatprep.subr.bf16.mxu0 0
    %1166 = vmatpush2.bf16.xpose.msra.mxu0 0
    %1167 = vmatprep.subr.bf16.mxu0 0
    %1168 = vmatpush2.bf16.xpose.msra.mxu0 0
    %1169 = vmatprep.subr.bf16.mxu0 0
    %1170 = vmatpush2.bf16.xpose.msra.mxu0 0
    %1171 = vmatprep.subr.bf16.mxu0 0
    %1172 = vmatpush2.bf16.xpose.msra.mxu0 0
    %1173 = vmatprep.subr.bf16.mxu0 0
    %1174 = vmatpush2.bf16.xpose.msra.mxu0 0
    %1175 = vmatprep.mubr.bf16.mxu0 0
    %1176 = vmatmul.mubr.bf16.gmra.mxu0 %v1138
    %v1177 = vpop.f32.mrf.mxu0
    %v1178 = vadd.f32 0.0, %v1177
    %v1179 = vpop.f32.mrf.mxu0
    %v1180 = vpop.f32.mrf.mxu0
    %v1181 = vpop.f32.mrf.mxu0
    %1182 = vdwg.mxu0
    %v1184 = vsel %vm1136, %v507, 0
    %v1187 = vsel %vm1136, %v825, 0
    %1189 = vmatprep.subr.bf16.mxu0 0
    %1190 = vmatpush1.bf16.xpose.msra.mxu0 0
    %1191 = vmatprep.subr.bf16.mxu0 0
    %1192 = vmatpush1.bf16.xpose.msra.mxu0 0
    %1193 = vmatprep.subr.bf16.mxu0 0
    %1194 = vmatpush1.bf16.xpose.msra.mxu0 0
    %1195 = vmatprep.subr.bf16.mxu0 0
    %1196 = vmatpush1.bf16.xpose.msra.mxu0 0
    %1197 = vmatprep.subr.bf16.mxu0 0
    %1198 = vmatpush1.bf16.xpose.msra.mxu0 0
    %1199 = vmatprep.subr.bf16.mxu0 0
    %1200 = vmatpush1.bf16.xpose.msra.mxu0 0
    %1201 = vmatprep.subr.bf16.mxu0 0
    %1202 = vmatpush1.bf16.xpose.msra.mxu0 0
    %1203 = vmatprep.subr.bf16.mxu0 0
    %1204 = vmatpush1.bf16.xpose.msra.mxu0 %v1187
    %1205 = vmatprep.subr.bf16.mxu0 0
    %1206 = vmatpush2.bf16.xpose.msra.mxu0 0
    %1207 = vmatprep.subr.bf16.mxu0 0
    %1208 = vmatpush2.bf16.xpose.msra.mxu0 0
    %1209 = vmatprep.subr.bf16.mxu0 0
    %1210 = vmatpush2.bf16.xpose.msra.mxu0 0
    %1211 = vmatprep.subr.bf16.mxu0 0
    %1212 = vmatpush2.bf16.xpose.msra.mxu0 0
    %1213 = vmatprep.subr.bf16.mxu0 0
    %1214 = vmatpush2.bf16.xpose.msra.mxu0 0
    %1215 = vmatprep.subr.bf16.mxu0 0
    %1216 = vmatpush2.bf16.xpose.msra.mxu0 0
    %1217 = vmatprep.subr.bf16.mxu0 0
    %1218 = vmatpush2.bf16.xpose.msra.mxu0 0
    %1219 = vmatprep.subr.bf16.mxu0 0
    %1220 = vmatpush2.bf16.xpose.msra.mxu0 0
    %1221 = vmatprep.mubr.bf16.mxu0 0
    %1222 = vmatmul.mubr.bf16.gmra.mxu0 %v1184
    %v1223 = vpop.f32.mrf.mxu0
    %v1224 = vadd.f32 0.0, %v1223
    %v1225 = vpop.f32.mrf.mxu0
    %v1226 = vpop.f32.mrf.mxu0
    %v1227 = vpop.f32.mrf.mxu0
    %1228 = vdwg.mxu0
    %v1230 = vsel %vm1136, %v508, 0
    %v1233 = vsel %vm1136, %v826, 0
    %1235 = vmatprep.subr.bf16.mxu0 0
    %1236 = vmatpush1.bf16.xpose.msra.mxu0 0
    %1237 = vmatprep.subr.bf16.mxu0 0
    %1238 = vmatpush1.bf16.xpose.msra.mxu0 0
    %1239 = vmatprep.subr.bf16.mxu0 0
    %1240 = vmatpush1.bf16.xpose.msra.mxu0 0
    %1241 = vmatprep.subr.bf16.mxu0 0
    %1242 = vmatpush1.bf16.xpose.msra.mxu0 0
    %1243 = vmatprep.subr.bf16.mxu0 0
    %1244 = vmatpush1.bf16.xpose.msra.mxu0 0
    %1245 = vmatprep.subr.bf16.mxu0 0
    %1246 = vmatpush1.bf16.xpose.msra.mxu0 0
    %1247 = vmatprep.subr.bf16.mxu0 0
    %1248 = vmatpush1.bf16.xpose.msra.mxu0 0
    %1249 = vmatprep.subr.bf16.mxu0 0
    %1250 = vmatpush1.bf16.xpose.msra.mxu0 %v1233
    %1251 = vmatprep.subr.bf16.mxu0 0
    %1252 = vmatpush2.bf16.xpose.msra.mxu0 0
    %1253 = vmatprep.subr.bf16.mxu0 0
    %1254 = vmatpush2.bf16.xpose.msra.mxu0 0
    %1255 = vmatprep.subr.bf16.mxu0 0
    %1256 = vmatpush2.bf16.xpose.msra.mxu0 0
    %1257 = vmatprep.subr.bf16.mxu0 0
    %1258 = vmatpush2.bf16.xpose.msra.mxu0 0
    %1259 = vmatprep.subr.bf16.mxu0 0
    %1260 = vmatpush2.bf16.xpose.msra.mxu0 0
    %1261 = vmatprep.subr.bf16.mxu0 0
    %1262 = vmatpush2.bf16.xpose.msra.mxu0 0
    %1263 = vmatprep.subr.bf16.mxu0 0
    %1264 = vmatpush2.bf16.xpose.msra.mxu0 0
    %1265 = vmatprep.subr.bf16.mxu0 0
    %1266 = vmatpush2.bf16.xpose.msra.mxu0 0
    %1267 = vmatprep.mubr.bf16.mxu0 0
    %1268 = vmatmul.mubr.bf16.gmra.mxu0 %v1230
    %v1269 = vpop.f32.mrf.mxu0
    %v1270 = vadd.f32 0.0, %v1269
    %v1271 = vpop.f32.mrf.mxu0
    %v1272 = vpop.f32.mrf.mxu0
    %v1273 = vpop.f32.mrf.mxu0
    %1274 = vdwg.mxu0
    %v1276 = vsel %vm1136, %v509, 0
    %v1279 = vsel %vm1136, %v827, 0
    %1281 = vmatprep.subr.bf16.mxu0 0
    %1282 = vmatpush1.bf16.xpose.msra.mxu0 0
    %1283 = vmatprep.subr.bf16.mxu0 0
    %1284 = vmatpush1.bf16.xpose.msra.mxu0 0
    %1285 = vmatprep.subr.bf16.mxu0 0
    %1286 = vmatpush1.bf16.xpose.msra.mxu0 0
    %1287 = vmatprep.subr.bf16.mxu0 0
    %1288 = vmatpush1.bf16.xpose.msra.mxu0 0
    %1289 = vmatprep.subr.bf16.mxu0 0
    %1290 = vmatpush1.bf16.xpose.msra.mxu0 0
    %1291 = vmatprep.subr.bf16.mxu0 0
    %1292 = vmatpush1.bf16.xpose.msra.mxu0 0
    %1293 = vmatprep.subr.bf16.mxu0 0
    %1294 = vmatpush1.bf16.xpose.msra.mxu0 0
    %1295 = vmatprep.subr.bf16.mxu0 0
    %1296 = vmatpush1.bf16.xpose.msra.mxu0 %v1279
    %1297 = vmatprep.subr.bf16.mxu0 0
    %1298 = vmatpush2.bf16.xpose.msra.mxu0 0
    %1299 = vmatprep.subr.bf16.mxu0 0
    %1300 = vmatpush2.bf16.xpose.msra.mxu0 0
    %1301 = vmatprep.subr.bf16.mxu0 0
    %1302 = vmatpush2.bf16.xpose.msra.mxu0 0
    %1303 = vmatprep.subr.bf16.mxu0 0
    %1304 = vmatpush2.bf16.xpose.msra.mxu0 0
    %1305 = vmatprep.subr.bf16.mxu0 0
    %1306 = vmatpush2.bf16.xpose.msra.mxu0 0
    %1307 = vmatprep.subr.bf16.mxu0 0
    %1308 = vmatpush2.bf16.xpose.msra.mxu0 0
    %1309 = vmatprep.subr.bf16.mxu0 0
    %1310 = vmatpush2.bf16.xpose.msra.mxu0 0
    %1311 = vmatprep.subr.bf16.mxu0 0
    %1312 = vmatpush2.bf16.xpose.msra.mxu0 0
    %1313 = vmatprep.mubr.bf16.mxu0 0
    %1314 = vmatmul.mubr.bf16.gmra.mxu0 %v1276
    %v1315 = vpop.f32.mrf.mxu0
    %v1316 = vadd.f32 0.0, %v1315
    %v1317 = vpop.f32.mrf.mxu0
    %v1318 = vpop.f32.mrf.mxu0
    %v1319 = vpop.f32.mrf.mxu0
    %1320 = vdwg.mxu0
    %v1322 = vsel %vm1136, %v510, 0
    %v1325 = vsel %vm1136, %v828, 0
    %1327 = vmatprep.subr.bf16.mxu0 0
    %1328 = vmatpush1.bf16.xpose.msra.mxu0 0
    %1329 = vmatprep.subr.bf16.mxu0 0
    %1330 = vmatpush1.bf16.xpose.msra.mxu0 0
    %1331 = vmatprep.subr.bf16.mxu0 0
    %1332 = vmatpush1.bf16.xpose.msra.mxu0 0
    %1333 = vmatprep.subr.bf16.mxu0 0
    %1334 = vmatpush1.bf16.xpose.msra.mxu0 0
    %1335 = vmatprep.subr.bf16.mxu0 0
    %1336 = vmatpush1.bf16.xpose.msra.mxu0 0
    %1337 = vmatprep.subr.bf16.mxu0 0
    %1338 = vmatpush1.bf16.xpose.msra.mxu0 0
    %1339 = vmatprep.subr.bf16.mxu0 0
    %1340 = vmatpush1.bf16.xpose.msra.mxu0 0
    %1341 = vmatprep.subr.bf16.mxu0 0
    %1342 = vmatpush1.bf16.xpose.msra.mxu0 %v1325
    %1343 = vmatprep.subr.bf16.mxu0 0
    %1344 = vmatpush2.bf16.xpose.msra.mxu0 0
    %1345 = vmatprep.subr.bf16.mxu0 0
    %1346 = vmatpush2.bf16.xpose.msra.mxu0 0
    %1347 = vmatprep.subr.bf16.mxu0 0
    %1348 = vmatpush2.bf16.xpose.msra.mxu0 0
    %1349 = vmatprep.subr.bf16.mxu0 0
    %1350 = vmatpush2.bf16.xpose.msra.mxu0 0
    %1351 = vmatprep.subr.bf16.mxu0 0
    %1352 = vmatpush2.bf16.xpose.msra.mxu0 0
    %1353 = vmatprep.subr.bf16.mxu0 0
    %1354 = vmatpush2.bf16.xpose.msra.mxu0 0
    %1355 = vmatprep.subr.bf16.mxu0 0
    %1356 = vmatpush2.bf16.xpose.msra.mxu0 0
    %1357 = vmatprep.subr.bf16.mxu0 0
    %1358 = vmatpush2.bf16.xpose.msra.mxu0 0
    %1359 = vmatprep.mubr.bf16.mxu0 0
    %1360 = vmatmul.mubr.bf16.gmra.mxu0 %v1322
    %v1361 = vpop.f32.mrf.mxu0
    %v1362 = vadd.f32 0.0, %v1361
    %v1363 = vpop.f32.mrf.mxu0
    %v1364 = vpop.f32.mrf.mxu0
    %v1365 = vpop.f32.mrf.mxu0
    %1366 = vdwg.mxu0
    %v1368 = vsel %vm1136, %v511, 0
    %v1371 = vsel %vm1136, %v829, 0
    %1373 = vmatprep.subr.bf16.mxu0 0
    %1374 = vmatpush1.bf16.xpose.msra.mxu0 0
    %1375 = vmatprep.subr.bf16.mxu0 0
    %1376 = vmatpush1.bf16.xpose.msra.mxu0 0
    %1377 = vmatprep.subr.bf16.mxu0 0
    %1378 = vmatpush1.bf16.xpose.msra.mxu0 0
    %1379 = vmatprep.subr.bf16.mxu0 0
    %1380 = vmatpush1.bf16.xpose.msra.mxu0 0
    %1381 = vmatprep.subr.bf16.mxu0 0
    %1382 = vmatpush1.bf16.xpose.msra.mxu0 0
    %1383 = vmatprep.subr.bf16.mxu0 0
    %1384 = vmatpush1.bf16.xpose.msra.mxu0 0
    %1385 = vmatprep.subr.bf16.mxu0 0
    %1386 = vmatpush1.bf16.xpose.msra.mxu0 0
    %1387 = vmatprep.subr.bf16.mxu0 0
    %1388 = vmatpush1.bf16.xpose.msra.mxu0 %v1371
    %1389 = vmatprep.subr.bf16.mxu0 0
    %1390 = vmatpush2.bf16.xpose.msra.mxu0 0
    %1391 = vmatprep.subr.bf16.mxu0 0
    %1392 = vmatpush2.bf16.xpose.msra.mxu0 0
    %1393 = vmatprep.subr.bf16.mxu0 0
    %1394 = vmatpush2.bf16.xpose.msra.mxu0 0
    %1395 = vmatprep.subr.bf16.mxu0 0
    %1396 = vmatpush2.bf16.xpose.msra.mxu0 0
    %1397 = vmatprep.subr.bf16.mxu0 0
    %1398 = vmatpush2.bf16.xpose.msra.mxu0 0
    %1399 = vmatprep.subr.bf16.mxu0 0
    %1400 = vmatpush2.bf16.xpose.msra.mxu0 0
    %1401 = vmatprep.subr.bf16.mxu0 0
    %1402 = vmatpush2.bf16.xpose.msra.mxu0 0
    %1403 = vmatprep.subr.bf16.mxu0 0
    %1404 = vmatpush2.bf16.xpose.msra.mxu0 0
    %1405 = vmatprep.mubr.bf16.mxu0 0
    %1406 = vmatmul.mubr.bf16.gmra.mxu0 %v1368
    %v1407 = vpop.f32.mrf.mxu0
    %v1408 = vadd.f32 0.0, %v1407
    %v1409 = vpop.f32.mrf.mxu0
    %v1410 = vpop.f32.mrf.mxu0
    %v1411 = vpop.f32.mrf.mxu0
    %1412 = vdwg.mxu0
    %v1414 = vsel %vm1136, %v512, 0
    %v1417 = vsel %vm1136, %v830, 0
    %1419 = vmatprep.subr.bf16.mxu0 0
    %1420 = vmatpush1.bf16.xpose.msra.mxu0 0
    %1421 = vmatprep.subr.bf16.mxu0 0
    %1422 = vmatpush1.bf16.xpose.msra.mxu0 0
    %1423 = vmatprep.subr.bf16.mxu0 0
    %1424 = vmatpush1.bf16.xpose.msra.mxu0 0
    %1425 = vmatprep.subr.bf16.mxu0 0
    %1426 = vmatpush1.bf16.xpose.msra.mxu0 0
    %1427 = vmatprep.subr.bf16.mxu0 0
    %1428 = vmatpush1.bf16.xpose.msra.mxu0 0
    %1429 = vmatprep.subr.bf16.mxu0 0
    %1430 = vmatpush1.bf16.xpose.msra.mxu0 0
    %1431 = vmatprep.subr.bf16.mxu0 0
    %1432 = vmatpush1.bf16.xpose.msra.mxu0 0
    %1433 = vmatprep.subr.bf16.mxu0 0
    %1434 = vmatpush1.bf16.xpose.msra.mxu0 %v1417
    %1435 = vmatprep.subr.bf16.mxu0 0
    %1436 = vmatpush2.bf16.xpose.msra.mxu0 0
    %1437 = vmatprep.subr.bf16.mxu0 0
    %1438 = vmatpush2.bf16.xpose.msra.mxu0 0
    %1439 = vmatprep.subr.bf16.mxu0 0
    %1440 = vmatpush2.bf16.xpose.msra.mxu0 0
    %1441 = vmatprep.subr.bf16.mxu0 0
    %1442 = vmatpush2.bf16.xpose.msra.mxu0 0
    %1443 = vmatprep.subr.bf16.mxu0 0
    %1444 = vmatpush2.bf16.xpose.msra.mxu0 0
    %1445 = vmatprep.subr.bf16.mxu0 0
    %1446 = vmatpush2.bf16.xpose.msra.mxu0 0
    %1447 = vmatprep.subr.bf16.mxu0 0
    %1448 = vmatpush2.bf16.xpose.msra.mxu0 0
    %1449 = vmatprep.subr.bf16.mxu0 0
    %1450 = vmatpush2.bf16.xpose.msra.mxu0 0
    %1451 = vmatprep.mubr.bf16.mxu0 0
    %1452 = vmatmul.mubr.bf16.gmra.mxu0 %v1414
    %v1453 = vpop.f32.mrf.mxu0
    %v1454 = vadd.f32 0.0, %v1453
    %v1455 = vpop.f32.mrf.mxu0
    %v1456 = vpop.f32.mrf.mxu0
    %v1457 = vpop.f32.mrf.mxu0
    %1458 = vdwg.mxu0
    %v1460 = vsel %vm1136, %v513, 0
    %v1463 = vsel %vm1136, %v831, 0
    %1465 = vmatprep.subr.bf16.mxu0 0
    %1466 = vmatpush1.bf16.xpose.msra.mxu0 0
    %1467 = vmatprep.subr.bf16.mxu0 0
    %1468 = vmatpush1.bf16.xpose.msra.mxu0 0
    %1469 = vmatprep.subr.bf16.mxu0 0
    %1470 = vmatpush1.bf16.xpose.msra.mxu0 0
    %1471 = vmatprep.subr.bf16.mxu0 0
    %1472 = vmatpush1.bf16.xpose.msra.mxu0 0
    %1473 = vmatprep.subr.bf16.mxu0 0
    %1474 = vmatpush1.bf16.xpose.msra.mxu0 0
    %1475 = vmatprep.subr.bf16.mxu0 0
    %1476 = vmatpush1.bf16.xpose.msra.mxu0 0
    %1477 = vmatprep.subr.bf16.mxu0 0
    %1478 = vmatpush1.bf16.xpose.msra.mxu0 0
    %1479 = vmatprep.subr.bf16.mxu0 0
    %1480 = vmatpush1.bf16.xpose.msra.mxu0 %v1463
    %1481 = vmatprep.subr.bf16.mxu0 0
    %1482 = vmatpush2.bf16.xpose.msra.mxu0 0
    %1483 = vmatprep.subr.bf16.mxu0 0
    %1484 = vmatpush2.bf16.xpose.msra.mxu0 0
    %1485 = vmatprep.subr.bf16.mxu0 0
    %1486 = vmatpush2.bf16.xpose.msra.mxu0 0
    %1487 = vmatprep.subr.bf16.mxu0 0
    %1488 = vmatpush2.bf16.xpose.msra.mxu0 0
    %1489 = vmatprep.subr.bf16.mxu0 0
    %1490 = vmatpush2.bf16.xpose.msra.mxu0 0
    %1491 = vmatprep.subr.bf16.mxu0 0
    %1492 = vmatpush2.bf16.xpose.msra.mxu0 0
    %1493 = vmatprep.subr.bf16.mxu0 0
    %1494 = vmatpush2.bf16.xpose.msra.mxu0 0
    %1495 = vmatprep.subr.bf16.mxu0 0
    %1496 = vmatpush2.bf16.xpose.msra.mxu0 0
    %1497 = vmatprep.mubr.bf16.mxu0 0
    %1498 = vmatmul.mubr.bf16.gmra.mxu0 %v1460
    %v1499 = vpop.f32.mrf.mxu0
    %v1500 = vadd.f32 0.0, %v1499
    %v1501 = vpop.f32.mrf.mxu0
    %v1502 = vpop.f32.mrf.mxu0
    %v1503 = vpop.f32.mrf.mxu0
    %1504 = vdwg.mxu0
    %v1505 = vsel %vm1136, %v1178, -inf
    %1506 = vmax.xlane.f32.xlu0 %v1505
    %v1507 = vpop.xlane.xlu0 %1506
    %v1508 = vsel %vm1136, %v1224, -inf
    %1509 = vmax.xlane.f32.xlu0 %v1508
    %v1510 = vpop.xlane.xlu0 %1509
    %v1511 = vsel %vm1136, %v1270, -inf
    %1512 = vmax.xlane.f32.xlu0 %v1511
    %v1513 = vpop.xlane.xlu0 %1512
    %v1514 = vsel %vm1136, %v1316, -inf
    %1515 = vmax.xlane.f32.xlu0 %v1514
    %v1516 = vpop.xlane.xlu0 %1515
    %v1517 = vsel %vm1136, %v1362, -inf
    %1518 = vmax.xlane.f32.xlu0 %v1517
    %v1519 = vpop.xlane.xlu0 %1518
    %v1520 = vsel %vm1136, %v1408, -inf
    %1521 = vmax.xlane.f32.xlu0 %v1520
    %v1522 = vpop.xlane.xlu0 %1521
    %v1523 = vsel %vm1136, %v1454, -inf
    %1524 = vmax.xlane.f32.xlu0 %v1523
    %v1525 = vpop.xlane.xlu0 %1524
    %v1526 = vsel %vm1136, %v1500, -inf
    %1527 = vmax.xlane.f32.xlu0 %v1526
    %v1528 = vpop.xlane.xlu0 %1527
    %v1529 = vsub.f32 %v1178, %v1507
    %v1530 = vsub.f32 %v1224, %v1510
    %v1531 = vsub.f32 %v1270, %v1513
    %v1532 = vsub.f32 %v1316, %v1516
    %v1533 = vsub.f32 %v1362, %v1519
    %v1534 = vsub.f32 %v1408, %v1522
    %v1535 = vsub.f32 %v1454, %v1525
    %v1536 = vsub.f32 %v1500, %v1528
    %v1537 = vmul.f32 %v1529, 1.442695
    %v1538 = vpow.pop %v1537
    %v1539 = vmul.f32 %v1530, 1.442695
    %v1540 = vpow.pop %v1539
    %v1541 = vmul.f32 %v1531, 1.442695
    %v1542 = vpow.pop %v1541
    %v1543 = vmul.f32 %v1532, 1.442695
    %v1544 = vpow.pop %v1543
    %v1545 = vmul.f32 %v1533, 1.442695
    %v1546 = vpow.pop %v1545
    %v1547 = vmul.f32 %v1534, 1.442695
    %v1548 = vpow.pop %v1547
    %v1549 = vmul.f32 %v1535, 1.442695
    %v1550 = vpow.pop %v1549
    %v1551 = vmul.f32 %v1536, 1.442695
    %v1552 = vpow.pop %v1551
    %v1553 = vsel %vm1136, %v1538, 0.0
    %1554 = vadd.xlane.f32.xlu0 %v1553
    %v1555 = vpop.xlane.xlu0 %1554
    %v1556 = vsel %vm1136, %v1540, 0.0
    %1557 = vadd.xlane.f32.xlu0 %v1556
    %v1558 = vpop.xlane.xlu0 %1557
    %v1559 = vsel %vm1136, %v1542, 0.0
    %1560 = vadd.xlane.f32.xlu0 %v1559
    %v1561 = vpop.xlane.xlu0 %1560
    %v1562 = vsel %vm1136, %v1544, 0.0
    %1563 = vadd.xlane.f32.xlu0 %v1562
    %v1564 = vpop.xlane.xlu0 %1563
    %v1565 = vsel %vm1136, %v1546, 0.0
    %1566 = vadd.xlane.f32.xlu0 %v1565
    %v1567 = vpop.xlane.xlu0 %1566
    %v1568 = vsel %vm1136, %v1548, 0.0
    %1569 = vadd.xlane.f32.xlu0 %v1568
    %v1570 = vpop.xlane.xlu0 %1569
    %v1571 = vsel %vm1136, %v1550, 0.0
    %1572 = vadd.xlane.f32.xlu0 %v1571
    %v1573 = vpop.xlane.xlu0 %1572
    %v1574 = vsel %vm1136, %v1552, 0.0
    %1575 = vadd.xlane.f32.xlu0 %v1574
    %v1576 = vpop.xlane.xlu0 %1575
    %v1577 = vrcp.pop %v1555
    %v1578 = vrcp.pop %v1558
    %v1579 = vrcp.pop %v1561
    %v1580 = vrcp.pop %v1564
    %v1581 = vrcp.pop %v1567
    %v1582 = vrcp.pop %v1570
    %v1583 = vrcp.pop %v1573
    %v1584 = vrcp.pop %v1576
    %v1585 = vmul.f32 %v1538, %v1577
    %v1586 = vmul.f32 %v1540, %v1578
    %v1587 = vmul.f32 %v1542, %v1579
    %v1588 = vmul.f32 %v1544, %v1580
    %v1589 = vmul.f32 %v1546, %v1581
    %v1590 = vmul.f32 %v1548, %v1582
    %v1591 = vmul.f32 %v1550, %v1583
    %v1592 = vmul.f32 %v1552, %v1584
    %v1593 = vpack.c.bf16 %v1585, %v1585
    %v1594 = vpack.c.bf16 %v1586, %v1586
    %v1595 = vpack.c.bf16 %v1587, %v1587
    %v1596 = vpack.c.bf16 %v1588, %v1588
    %v1597 = vpack.c.bf16 %v1589, %v1589
    %v1598 = vpack.c.bf16 %v1590, %v1590
    %v1599 = vpack.c.bf16 %v1591, %v1591
    %v1600 = vpack.c.bf16 %v1592, %v1592
    %v1602 = vsel %vm1136, %v1593, 0
    %vm1604 = vcmask 1043456
    %v1606 = vsel %vm1604, %v1128, 0
    %1608 = vmatprep.subr.bf16.mxu0 0
    %1609 = vmatpush1.bf16.msra.mxu0 0
    %1610 = vmatprep.subr.bf16.mxu0 0
    %1611 = vmatpush1.bf16.msra.mxu0 0
    %1612 = vmatprep.subr.bf16.mxu0 0
    %1613 = vmatpush1.bf16.msra.mxu0 0
    %1614 = vmatprep.subr.bf16.mxu0 0
    %1615 = vmatpush1.bf16.msra.mxu0 0
    %1616 = vmatprep.subr.bf16.mxu0 0
    %1617 = vmatpush1.bf16.msra.mxu0 0
    %1618 = vmatprep.subr.bf16.mxu0 0
    %1619 = vmatpush1.bf16.msra.mxu0 0
    %1620 = vmatprep.subr.bf16.mxu0 0
    %1621 = vmatpush1.bf16.msra.mxu0 0
    %1622 = vmatprep.subr.bf16.mxu0 0
    %1623 = vmatpush1.bf16.msra.mxu0 %v1606
    %1624 = vmatprep.subr.bf16.mxu0 0
    %1625 = vmatpush2.bf16.msra.mxu0 0
    %1626 = vmatprep.subr.bf16.mxu0 0
    %1627 = vmatpush2.bf16.msra.mxu0 0
    %1628 = vmatprep.subr.bf16.mxu0 0
    %1629 = vmatpush2.bf16.msra.mxu0 0
    %1630 = vmatprep.subr.bf16.mxu0 0
    %1631 = vmatpush2.bf16.msra.mxu0 0
    %1632 = vmatprep.subr.bf16.mxu0 0
    %1633 = vmatpush2.bf16.msra.mxu0 0
    %1634 = vmatprep.subr.bf16.mxu0 0
    %1635 = vmatpush2.bf16.msra.mxu0 0
    %1636 = vmatprep.subr.bf16.mxu0 0
    %1637 = vmatpush2.bf16.msra.mxu0 0
    %1638 = vmatprep.subr.bf16.mxu0 0
    %1639 = vmatpush2.bf16.msra.mxu0 0
    %1640 = vmatprep.mubr.bf16.mxu0 0
    %1641 = vmatmul.mubr.bf16.gmra.mxu0 %v1602
    %v1642 = vpop.f32.mrf.mxu0
    %v1643 = vadd.f32 0.0, %v1642
    %v1644 = vpop.f32.mrf.mxu0
    %v1645 = vpop.f32.mrf.mxu0
    %v1646 = vpop.f32.mrf.mxu0
    %1647 = vdwg.mxu0
    %v1649 = vsel %vm1136, %v1594, 0
    %v1652 = vsel %vm1604, %v1129, 0
    %1654 = vmatprep.subr.bf16.mxu0 0
    %1655 = vmatpush1.bf16.msra.mxu0 0
    %1656 = vmatprep.subr.bf16.mxu0 0
    %1657 = vmatpush1.bf16.msra.mxu0 0
    %1658 = vmatprep.subr.bf16.mxu0 0
    %1659 = vmatpush1.bf16.msra.mxu0 0
    %1660 = vmatprep.subr.bf16.mxu0 0
    %1661 = vmatpush1.bf16.msra.mxu0 0
    %1662 = vmatprep.subr.bf16.mxu0 0
    %1663 = vmatpush1.bf16.msra.mxu0 0
    %1664 = vmatprep.subr.bf16.mxu0 0
    %1665 = vmatpush1.bf16.msra.mxu0 0
    %1666 = vmatprep.subr.bf16.mxu0 0
    %1667 = vmatpush1.bf16.msra.mxu0 0
    %1668 = vmatprep.subr.bf16.mxu0 0
    %1669 = vmatpush1.bf16.msra.mxu0 %v1652
    %1670 = vmatprep.subr.bf16.mxu0 0
    %1671 = vmatpush2.bf16.msra.mxu0 0
    %1672 = vmatprep.subr.bf16.mxu0 0
    %1673 = vmatpush2.bf16.msra.mxu0 0
    %1674 = vmatprep.subr.bf16.mxu0 0
    %1675 = vmatpush2.bf16.msra.mxu0 0
    %1676 = vmatprep.subr.bf16.mxu0 0
    %1677 = vmatpush2.bf16.msra.mxu0 0
    %1678 = vmatprep.subr.bf16.mxu0 0
    %1679 = vmatpush2.bf16.msra.mxu0 0
    %1680 = vmatprep.subr.bf16.mxu0 0
    %1681 = vmatpush2.bf16.msra.mxu0 0
    %1682 = vmatprep.subr.bf16.mxu0 0
    %1683 = vmatpush2.bf16.msra.mxu0 0
    %1684 = vmatprep.subr.bf16.mxu0 0
    %1685 = vmatpush2.bf16.msra.mxu0 0
    %1686 = vmatprep.mubr.bf16.mxu0 0
    %1687 = vmatmul.mubr.bf16.gmra.mxu0 %v1649
    %v1688 = vpop.f32.mrf.mxu0
    %v1689 = vadd.f32 0.0, %v1688
    %v1690 = vpop.f32.mrf.mxu0
    %v1691 = vpop.f32.mrf.mxu0
    %v1692 = vpop.f32.mrf.mxu0
    %1693 = vdwg.mxu0
    %v1695 = vsel %vm1136, %v1595, 0
    %v1698 = vsel %vm1604, %v1130, 0
    %1700 = vmatprep.subr.bf16.mxu0 0
    %1701 = vmatpush1.bf16.msra.mxu0 0
    %1702 = vmatprep.subr.bf16.mxu0 0
    %1703 = vmatpush1.bf16.msra.mxu0 0
    %1704 = vmatprep.subr.bf16.mxu0 0
    %1705 = vmatpush1.bf16.msra.mxu0 0
    %1706 = vmatprep.subr.bf16.mxu0 0
    %1707 = vmatpush1.bf16.msra.mxu0 0
    %1708 = vmatprep.subr.bf16.mxu0 0
    %1709 = vmatpush1.bf16.msra.mxu0 0
    %1710 = vmatprep.subr.bf16.mxu0 0
    %1711 = vmatpush1.bf16.msra.mxu0 0
    %1712 = vmatprep.subr.bf16.mxu0 0
    %1713 = vmatpush1.bf16.msra.mxu0 0
    %1714 = vmatprep.subr.bf16.mxu0 0
    %1715 = vmatpush1.bf16.msra.mxu0 %v1698
    %1716 = vmatprep.subr.bf16.mxu0 0
    %1717 = vmatpush2.bf16.msra.mxu0 0
    %1718 = vmatprep.subr.bf16.mxu0 0
    %1719 = vmatpush2.bf16.msra.mxu0 0
    %1720 = vmatprep.subr.bf16.mxu0 0
    %1721 = vmatpush2.bf16.msra.mxu0 0
    %1722 = vmatprep.subr.bf16.mxu0 0
    %1723 = vmatpush2.bf16.msra.mxu0 0
    %1724 = vmatprep.subr.bf16.mxu0 0
    %1725 = vmatpush2.bf16.msra.mxu0 0
    %1726 = vmatprep.subr.bf16.mxu0 0
    %1727 = vmatpush2.bf16.msra.mxu0 0
    %1728 = vmatprep.subr.bf16.mxu0 0
    %1729 = vmatpush2.bf16.msra.mxu0 0
    %1730 = vmatprep.subr.bf16.mxu0 0
    %1731 = vmatpush2.bf16.msra.mxu0 0
    %1732 = vmatprep.mubr.bf16.mxu0 0
    %1733 = vmatmul.mubr.bf16.gmra.mxu0 %v1695
    %v1734 = vpop.f32.mrf.mxu0
    %v1735 = vadd.f32 0.0, %v1734
    %v1736 = vpop.f32.mrf.mxu0
    %v1737 = vpop.f32.mrf.mxu0
    %v1738 = vpop.f32.mrf.mxu0
    %1739 = vdwg.mxu0
    %v1741 = vsel %vm1136, %v1596, 0
    %v1744 = vsel %vm1604, %v1131, 0
    %1746 = vmatprep.subr.bf16.mxu0 0
    %1747 = vmatpush1.bf16.msra.mxu0 0
    %1748 = vmatprep.subr.bf16.mxu0 0
    %1749 = vmatpush1.bf16.msra.mxu0 0
    %1750 = vmatprep.subr.bf16.mxu0 0
    %1751 = vmatpush1.bf16.msra.mxu0 0
    %1752 = vmatprep.subr.bf16.mxu0 0
    %1753 = vmatpush1.bf16.msra.mxu0 0
    %1754 = vmatprep.subr.bf16.mxu0 0
    %1755 = vmatpush1.bf16.msra.mxu0 0
    %1756 = vmatprep.subr.bf16.mxu0 0
    %1757 = vmatpush1.bf16.msra.mxu0 0
    %1758 = vmatprep.subr.bf16.mxu0 0
    %1759 = vmatpush1.bf16.msra.mxu0 0
    %1760 = vmatprep.subr.bf16.mxu0 0
    %1761 = vmatpush1.bf16.msra.mxu0 %v1744
    %1762 = vmatprep.subr.bf16.mxu0 0
    %1763 = vmatpush2.bf16.msra.mxu0 0
    %1764 = vmatprep.subr.bf16.mxu0 0
    %1765 = vmatpush2.bf16.msra.mxu0 0
    %1766 = vmatprep.subr.bf16.mxu0 0
    %1767 = vmatpush2.bf16.msra.mxu0 0
    %1768 = vmatprep.subr.bf16.mxu0 0
    %1769 = vmatpush2.bf16.msra.mxu0 0
    %1770 = vmatprep.subr.bf16.mxu0 0
    %1771 = vmatpush2.bf16.msra.mxu0 0
    %1772 = vmatprep.subr.bf16.mxu0 0
    %1773 = vmatpush2.bf16.msra.mxu0 0
    %1774 = vmatprep.subr.bf16.mxu0 0
    %1775 = vmatpush2.bf16.msra.mxu0 0
    %1776 = vmatprep.subr.bf16.mxu0 0
    %1777 = vmatpush2.bf16.msra.mxu0 0
    %1778 = vmatprep.mubr.bf16.mxu0 0
    %1779 = vmatmul.mubr.bf16.gmra.mxu0 %v1741
    %v1780 = vpop.f32.mrf.mxu0
    %v1781 = vadd.f32 0.0, %v1780
    %v1782 = vpop.f32.mrf.mxu0
    %v1783 = vpop.f32.mrf.mxu0
    %v1784 = vpop.f32.mrf.mxu0
    %1785 = vdwg.mxu0
    %v1787 = vsel %vm1136, %v1597, 0
    %v1790 = vsel %vm1604, %v1132, 0
    %1792 = vmatprep.subr.bf16.mxu0 0
    %1793 = vmatpush1.bf16.msra.mxu0 0
    %1794 = vmatprep.subr.bf16.mxu0 0
    %1795 = vmatpush1.bf16.msra.mxu0 0
    %1796 = vmatprep.subr.bf16.mxu0 0
    %1797 = vmatpush1.bf16.msra.mxu0 0
    %1798 = vmatprep.subr.bf16.mxu0 0
    %1799 = vmatpush1.bf16.msra.mxu0 0
    %1800 = vmatprep.subr.bf16.mxu0 0
    %1801 = vmatpush1.bf16.msra.mxu0 0
    %1802 = vmatprep.subr.bf16.mxu0 0
    %1803 = vmatpush1.bf16.msra.mxu0 0
    %1804 = vmatprep.subr.bf16.mxu0 0
    %1805 = vmatpush1.bf16.msra.mxu0 0
    %1806 = vmatprep.subr.bf16.mxu0 0
    %1807 = vmatpush1.bf16.msra.mxu0 %v1790
    %1808 = vmatprep.subr.bf16.mxu0 0
    %1809 = vmatpush2.bf16.msra.mxu0 0
    %1810 = vmatprep.subr.bf16.mxu0 0
    %1811 = vmatpush2.bf16.msra.mxu0 0
    %1812 = vmatprep.subr.bf16.mxu0 0
    %1813 = vmatpush2.bf16.msra.mxu0 0
    %1814 = vmatprep.subr.bf16.mxu0 0
    %1815 = vmatpush2.bf16.msra.mxu0 0
    %1816 = vmatprep.subr.bf16.mxu0 0
    %1817 = vmatpush2.bf16.msra.mxu0 0
    %1818 = vmatprep.subr.bf16.mxu0 0
    %1819 = vmatpush2.bf16.msra.mxu0 0
    %1820 = vmatprep.subr.bf16.mxu0 0
    %1821 = vmatpush2.bf16.msra.mxu0 0
    %1822 = vmatprep.subr.bf16.mxu0 0
    %1823 = vmatpush2.bf16.msra.mxu0 0
    %1824 = vmatprep.mubr.bf16.mxu0 0
    %1825 = vmatmul.mubr.bf16.gmra.mxu0 %v1787
    %v1826 = vpop.f32.mrf.mxu0
    %v1827 = vadd.f32 0.0, %v1826
    %v1828 = vpop.f32.mrf.mxu0
    %v1829 = vpop.f32.mrf.mxu0
    %v1830 = vpop.f32.mrf.mxu0
    %1831 = vdwg.mxu0
    %v1833 = vsel %vm1136, %v1598, 0
    %v1836 = vsel %vm1604, %v1133, 0
    %1838 = vmatprep.subr.bf16.mxu0 0
    %1839 = vmatpush1.bf16.msra.mxu0 0
    %1840 = vmatprep.subr.bf16.mxu0 0
    %1841 = vmatpush1.bf16.msra.mxu0 0
    %1842 = vmatprep.subr.bf16.mxu0 0
    %1843 = vmatpush1.bf16.msra.mxu0 0
    %1844 = vmatprep.subr.bf16.mxu0 0
    %1845 = vmatpush1.bf16.msra.mxu0 0
    %1846 = vmatprep.subr.bf16.mxu0 0
    %1847 = vmatpush1.bf16.msra.mxu0 0
    %1848 = vmatprep.subr.bf16.mxu0 0
    %1849 = vmatpush1.bf16.msra.mxu0 0
    %1850 = vmatprep.subr.bf16.mxu0 0
    %1851 = vmatpush1.bf16.msra.mxu0 0
    %1852 = vmatprep.subr.bf16.mxu0 0
    %1853 = vmatpush1.bf16.msra.mxu0 %v1836
    %1854 = vmatprep.subr.bf16.mxu0 0
    %1855 = vmatpush2.bf16.msra.mxu0 0
    %1856 = vmatprep.subr.bf16.mxu0 0
    %1857 = vmatpush2.bf16.msra.mxu0 0
    %1858 = vmatprep.subr.bf16.mxu0 0
    %1859 = vmatpush2.bf16.msra.mxu0 0
    %1860 = vmatprep.subr.bf16.mxu0 0
    %1861 = vmatpush2.bf16.msra.mxu0 0
    %1862 = vmatprep.subr.bf16.mxu0 0
    %1863 = vmatpush2.bf16.msra.mxu0 0
    %1864 = vmatprep.subr.bf16.mxu0 0
    %1865 = vmatpush2.bf16.msra.mxu0 0
    %1866 = vmatprep.subr.bf16.mxu0 0
    %1867 = vmatpush2.bf16.msra.mxu0 0
    %1868 = vmatprep.subr.bf16.mxu0 0
    %1869 = vmatpush2.bf16.msra.mxu0 0
    %1870 = vmatprep.mubr.bf16.mxu0 0
    %1871 = vmatmul.mubr.bf16.gmra.mxu0 %v1833
    %v1872 = vpop.f32.mrf.mxu0
    %v1873 = vadd.f32 0.0, %v1872
    %v1874 = vpop.f32.mrf.mxu0
    %v1875 = vpop.f32.mrf.mxu0
    %v1876 = vpop.f32.mrf.mxu0
    %1877 = vdwg.mxu0
    %v1879 = vsel %vm1136, %v1599, 0
    %v1882 = vsel %vm1604, %v1134, 0
    %1884 = vmatprep.subr.bf16.mxu0 0
    %1885 = vmatpush1.bf16.msra.mxu0 0
    %1886 = vmatprep.subr.bf16.mxu0 0
    %1887 = vmatpush1.bf16.msra.mxu0 0
    %1888 = vmatprep.subr.bf16.mxu0 0
    %1889 = vmatpush1.bf16.msra.mxu0 0
    %1890 = vmatprep.subr.bf16.mxu0 0
    %1891 = vmatpush1.bf16.msra.mxu0 0
    %1892 = vmatprep.subr.bf16.mxu0 0
    %1893 = vmatpush1.bf16.msra.mxu0 0
    %1894 = vmatprep.subr.bf16.mxu0 0
    %1895 = vmatpush1.bf16.msra.mxu0 0
    %1896 = vmatprep.subr.bf16.mxu0 0
    %1897 = vmatpush1.bf16.msra.mxu0 0
    %1898 = vmatprep.subr.bf16.mxu0 0
    %1899 = vmatpush1.bf16.msra.mxu0 %v1882
    %1900 = vmatprep.subr.bf16.mxu0 0
    %1901 = vmatpush2.bf16.msra.mxu0 0
    %1902 = vmatprep.subr.bf16.mxu0 0
    %1903 = vmatpush2.bf16.msra.mxu0 0
    %1904 = vmatprep.subr.bf16.mxu0 0
    %1905 = vmatpush2.bf16.msra.mxu0 0
    %1906 = vmatprep.subr.bf16.mxu0 0
    %1907 = vmatpush2.bf16.msra.mxu0 0
    %1908 = vmatprep.subr.bf16.mxu0 0
    %1909 = vmatpush2.bf16.msra.mxu0 0
    %1910 = vmatprep.subr.bf16.mxu0 0
    %1911 = vmatpush2.bf16.msra.mxu0 0
    %1912 = vmatprep.subr.bf16.mxu0 0
    %1913 = vmatpush2.bf16.msra.mxu0 0
    %1914 = vmatprep.subr.bf16.mxu0 0
    %1915 = vmatpush2.bf16.msra.mxu0 0
    %1916 = vmatprep.mubr.bf16.mxu0 0
    %1917 = vmatmul.mubr.bf16.gmra.mxu0 %v1879
    %v1918 = vpop.f32.mrf.mxu0
    %v1919 = vadd.f32 0.0, %v1918
    %v1920 = vpop.f32.mrf.mxu0
    %v1921 = vpop.f32.mrf.mxu0
    %v1922 = vpop.f32.mrf.mxu0
    %1923 = vdwg.mxu0
    %v1925 = vsel %vm1136, %v1600, 0
    %v1928 = vsel %vm1604, %v1135, 0
    %1930 = vmatprep.subr.bf16.mxu0 0
    %1931 = vmatpush1.bf16.msra.mxu0 0
    %1932 = vmatprep.subr.bf16.mxu0 0
    %1933 = vmatpush1.bf16.msra.mxu0 0
    %1934 = vmatprep.subr.bf16.mxu0 0
    %1935 = vmatpush1.bf16.msra.mxu0 0
    %1936 = vmatprep.subr.bf16.mxu0 0
    %1937 = vmatpush1.bf16.msra.mxu0 0
    %1938 = vmatprep.subr.bf16.mxu0 0
    %1939 = vmatpush1.bf16.msra.mxu0 0
    %1940 = vmatprep.subr.bf16.mxu0 0
    %1941 = vmatpush1.bf16.msra.mxu0 0
    %1942 = vmatprep.subr.bf16.mxu0 0
    %1943 = vmatpush1.bf16.msra.mxu0 0
    %1944 = vmatprep.subr.bf16.mxu0 0
    %1945 = vmatpush1.bf16.msra.mxu0 %v1928
    %1946 = vmatprep.subr.bf16.mxu0 0
    %1947 = vmatpush2.bf16.msra.mxu0 0
    %1948 = vmatprep.subr.bf16.mxu0 0
    %1949 = vmatpush2.bf16.msra.mxu0 0
    %1950 = vmatprep.subr.bf16.mxu0 0
    %1951 = vmatpush2.bf16.msra.mxu0 0
    %1952 = vmatprep.subr.bf16.mxu0 0
    %1953 = vmatpush2.bf16.msra.mxu0 0
    %1954 = vmatprep.subr.bf16.mxu0 0
    %1955 = vmatpush2.bf16.msra.mxu0 0
    %1956 = vmatprep.subr.bf16.mxu0 0
    %1957 = vmatpush2.bf16.msra.mxu0 0
    %1958 = vmatprep.subr.bf16.mxu0 0
    %1959 = vmatpush2.bf16.msra.mxu0 0
    %1960 = vmatprep.subr.bf16.mxu0 0
    %1961 = vmatpush2.bf16.msra.mxu0 0
    %1962 = vmatprep.mubr.bf16.mxu0 0
    %1963 = vmatmul.mubr.bf16.gmra.mxu0 %v1925
    %v1964 = vpop.f32.mrf.mxu0
    %v1965 = vadd.f32 0.0, %v1964
    %v1966 = vpop.f32.mrf.mxu0
    %v1967 = vpop.f32.mrf.mxu0
    %v1968 = vpop.f32.mrf.mxu0
    %1969 = vdwg.mxu0
    %v1970 = vcombine.low %v1643, %v1735
    %v1971 = vcombine.high %v1643, %v1735
    %v1973 = vunpack.c.l.s4 1983009808
    %v1974 = vunpack.c.0.s8 %v1973
    %v1975 = vlaneseq
    %v1976 = vshrl.u32 %v1975, 7
    %v1977 = vsub.s32 %v1974, %v1976
    %v1978 = vrot.slane %v1970, %v1977
    %v1980 = vunpack.c.l.s4 1983009808
    %v1981 = vunpack.c.0.s8 %v1980
    %v1982 = vlaneseq
    %v1983 = vshrl.u32 %v1982, 7
    %v1984 = vsub.s32 %v1981, %v1983
    %v1985 = vrot.slane %v1971, %v1984
    %v1986 = vcombine.low %v1689, %v1781
    %v1987 = vcombine.high %v1689, %v1781
    %v1989 = vunpack.c.l.s4 1983009808
    %v1990 = vunpack.c.0.s8 %v1989
    %v1991 = vlaneseq
    %v1992 = vshrl.u32 %v1991, 7
    %v1993 = vsub.s32 %v1990, %v1992
    %v1994 = vrot.slane %v1986, %v1993
    %v1996 = vunpack.c.l.s4 1983009808
    %v1997 = vunpack.c.0.s8 %v1996
    %v1998 = vlaneseq
    %v1999 = vshrl.u32 %v1998, 7
    %v2000 = vsub.s32 %v1997, %v1999
    %v2001 = vrot.slane %v1987, %v2000
    %v2002 = vcombine.low %v1978, %v1994
    %v2003 = vcombine.high %v1978, %v1994
    %v2005 = vunpack.c.l.s4 1934713408
    %v2006 = vunpack.c.0.s8 %v2005
    %v2007 = vlaneseq
    %v2008 = vshrl.u32 %v2007, 7
    %v2009 = vsub.s32 %v2006, %v2008
    %v2010 = vrot.slane %v2002, %v2009
    %v2012 = vunpack.c.l.s4 1934713408
    %v2013 = vunpack.c.0.s8 %v2012
    %v2014 = vlaneseq
    %v2015 = vshrl.u32 %v2014, 7
    %v2016 = vsub.s32 %v2013, %v2015
    %v2017 = vrot.slane %v2003, %v2016
    %v2018 = vcombine.low %v1985, %v2001
    %v2019 = vcombine.high %v1985, %v2001
    %v2021 = vunpack.c.l.s4 1934713408
    %v2022 = vunpack.c.0.s8 %v2021
    %v2023 = vlaneseq
    %v2024 = vshrl.u32 %v2023, 7
    %v2025 = vsub.s32 %v2022, %v2024
    %v2026 = vrot.slane %v2018, %v2025
    %v2028 = vunpack.c.l.s4 1934713408
    %v2029 = vunpack.c.0.s8 %v2028
    %v2030 = vlaneseq
    %v2031 = vshrl.u32 %v2030, 7
    %v2032 = vsub.s32 %v2029, %v2031
    %v2033 = vrot.slane %v2019, %v2032
    %v2034 = vcombine.high %v2010, 0.0
    %v2035 = vcombine.high %v2017, 0.0
    %v2036 = vcombine.high %v2026, 0.0
    %v2037 = vcombine.high %v2033, 0.0
    %v2038 = vcombine.low %v1827, %v1919
    %v2039 = vcombine.high %v1827, %v1919
    %v2041 = vunpack.c.l.s4 1983009808
    %v2042 = vunpack.c.0.s8 %v2041
    %v2043 = vlaneseq
    %v2044 = vshrl.u32 %v2043, 7
    %v2045 = vsub.s32 %v2042, %v2044
    %v2046 = vrot.slane %v2038, %v2045
    %v2048 = vunpack.c.l.s4 1983009808
    %v2049 = vunpack.c.0.s8 %v2048
    %v2050 = vlaneseq
    %v2051 = vshrl.u32 %v2050, 7
    %v2052 = vsub.s32 %v2049, %v2051
    %v2053 = vrot.slane %v2039, %v2052
    %v2054 = vcombine.low %v1873, %v1965
    %v2055 = vcombine.high %v1873, %v1965
    %v2057 = vunpack.c.l.s4 1983009808
    %v2058 = vunpack.c.0.s8 %v2057
    %v2059 = vlaneseq
    %v2060 = vshrl.u32 %v2059, 7
    %v2061 = vsub.s32 %v2058, %v2060
    %v2062 = vrot.slane %v2054, %v2061
    %v2064 = vunpack.c.l.s4 1983009808
    %v2065 = vunpack.c.0.s8 %v2064
    %v2066 = vlaneseq
    %v2067 = vshrl.u32 %v2066, 7
    %v2068 = vsub.s32 %v2065, %v2067
    %v2069 = vrot.slane %v2055, %v2068
    %v2070 = vcombine.low %v2046, %v2062
    %v2071 = vcombine.high %v2046, %v2062
    %v2073 = vunpack.c.l.s4 1934713408
    %v2074 = vunpack.c.0.s8 %v2073
    %v2075 = vlaneseq
    %v2076 = vshrl.u32 %v2075, 7
    %v2077 = vsub.s32 %v2074, %v2076
    %v2078 = vrot.slane %v2070, %v2077
    %v2080 = vunpack.c.l.s4 1934713408
    %v2081 = vunpack.c.0.s8 %v2080
    %v2082 = vlaneseq
    %v2083 = vshrl.u32 %v2082, 7
    %v2084 = vsub.s32 %v2081, %v2083
    %v2085 = vrot.slane %v2071, %v2084
    %v2086 = vcombine.low %v2053, %v2069
    %v2087 = vcombine.high %v2053, %v2069
    %v2089 = vunpack.c.l.s4 1934713408
    %v2090 = vunpack.c.0.s8 %v2089
    %v2091 = vlaneseq
    %v2092 = vshrl.u32 %v2091, 7
    %v2093 = vsub.s32 %v2090, %v2092
    %v2094 = vrot.slane %v2086, %v2093
    %v2096 = vunpack.c.l.s4 1934713408
    %v2097 = vunpack.c.0.s8 %v2096
    %v2098 = vlaneseq
    %v2099 = vshrl.u32 %v2098, 7
    %v2100 = vsub.s32 %v2097, %v2099
    %v2101 = vrot.slane %v2087, %v2100
    %v2102 = vcombine.high %v2078, 0.0
    %v2103 = vcombine.high %v2085, 0.0
    %v2104 = vcombine.high %v2094, 0.0
    %v2105 = vcombine.high %v2101, 0.0
    %v2106 = vcombine.low %v2010, %v2017
    %v2108 = vunpack.c.l.s4 1983009808
    %v2109 = vunpack.c.0.s8 %v2108
    %v2110 = vlaneseq
    %v2111 = vshrl.u32 %v2110, 7
    %v2112 = vsub.s32 %v2109, %v2111
    %v2113 = vrot.slane %v2106, %v2112
    %v2114 = vcombine.low %v2034, %v2035
    %v2116 = vunpack.c.l.s4 1983009808
    %v2117 = vunpack.c.0.s8 %v2116
    %v2118 = vlaneseq
    %v2119 = vshrl.u32 %v2118, 7
    %v2120 = vsub.s32 %v2117, %v2119
    %v2121 = vrot.slane %v2114, %v2120
    %v2122 = vcombine.low %v2026, %v2033
    %v2124 = vunpack.c.l.s4 1983009808
    %v2125 = vunpack.c.0.s8 %v2124
    %v2126 = vlaneseq
    %v2127 = vshrl.u32 %v2126, 7
    %v2128 = vsub.s32 %v2125, %v2127
    %v2129 = vrot.slane %v2122, %v2128
    %v2130 = vcombine.low %v2036, %v2037
    %v2132 = vunpack.c.l.s4 1983009808
    %v2133 = vunpack.c.0.s8 %v2132
    %v2134 = vlaneseq
    %v2135 = vshrl.u32 %v2134, 7
    %v2136 = vsub.s32 %v2133, %v2135
    %v2137 = vrot.slane %v2130, %v2136
    %v2138 = vcombine.low %v2113, %v2121
    %v2139 = vcombine.high %v2113, %v2121
    %v2141 = vunpack.c.l.s4 1934713408
    %v2142 = vunpack.c.0.s8 %v2141
    %v2143 = vlaneseq
    %v2144 = vshrl.u32 %v2143, 7
    %v2145 = vsub.s32 %v2142, %v2144
    %v2146 = vrot.slane %v2138, %v2145
    %v2148 = vunpack.c.l.s4 1934713408
    %v2149 = vunpack.c.0.s8 %v2148
    %v2150 = vlaneseq
    %v2151 = vshrl.u32 %v2150, 7
    %v2152 = vsub.s32 %v2149, %v2151
    %v2153 = vrot.slane %v2139, %v2152
    %v2154 = vcombine.low %v2129, %v2137
    %v2155 = vcombine.high %v2129, %v2137
    %v2157 = vunpack.c.l.s4 1934713408
    %v2158 = vunpack.c.0.s8 %v2157
    %v2159 = vlaneseq
    %v2160 = vshrl.u32 %v2159, 7
    %v2161 = vsub.s32 %v2158, %v2160
    %v2162 = vrot.slane %v2154, %v2161
    %v2164 = vunpack.c.l.s4 1934713408
    %v2165 = vunpack.c.0.s8 %v2164
    %v2166 = vlaneseq
    %v2167 = vshrl.u32 %v2166, 7
    %v2168 = vsub.s32 %v2165, %v2167
    %v2169 = vrot.slane %v2155, %v2168
    %v2170 = vcombine.low %v2146, %v2162
    %v2171 = vcombine.high %v2146, %v2162
    %v2172 = vcombine.low %v2153, %v2169
    %v2173 = vcombine.high %v2153, %v2169
    %v2174 = vcombine.low %v2078, %v2085
    %v2176 = vunpack.c.l.s4 1983009808
    %v2177 = vunpack.c.0.s8 %v2176
    %v2178 = vlaneseq
    %v2179 = vshrl.u32 %v2178, 7
    %v2180 = vsub.s32 %v2177, %v2179
    %v2181 = vrot.slane %v2174, %v2180
    %v2182 = vcombine.low %v2102, %v2103
    %v2184 = vunpack.c.l.s4 1983009808
    %v2185 = vunpack.c.0.s8 %v2184
    %v2186 = vlaneseq
    %v2187 = vshrl.u32 %v2186, 7
    %v2188 = vsub.s32 %v2185, %v2187
    %v2189 = vrot.slane %v2182, %v2188
    %v2190 = vcombine.low %v2094, %v2101
    %v2192 = vunpack.c.l.s4 1983009808
    %v2193 = vunpack.c.0.s8 %v2192
    %v2194 = vlaneseq
    %v2195 = vshrl.u32 %v2194, 7
    %v2196 = vsub.s32 %v2193, %v2195
    %v2197 = vrot.slane %v2190, %v2196
    %v2198 = vcombine.low %v2104, %v2105
    %v2200 = vunpack.c.l.s4 1983009808
    %v2201 = vunpack.c.0.s8 %v2200
    %v2202 = vlaneseq
    %v2203 = vshrl.u32 %v2202, 7
    %v2204 = vsub.s32 %v2201, %v2203
    %v2205 = vrot.slane %v2198, %v2204
    %v2206 = vcombine.low %v2181, %v2189
    %v2207 = vcombine.high %v2181, %v2189
    %v2209 = vunpack.c.l.s4 1934713408
    %v2210 = vunpack.c.0.s8 %v2209
    %v2211 = vlaneseq
    %v2212 = vshrl.u32 %v2211, 7
    %v2213 = vsub.s32 %v2210, %v2212
    %v2214 = vrot.slane %v2206, %v2213
    %v2216 = vunpack.c.l.s4 1934713408
    %v2217 = vunpack.c.0.s8 %v2216
    %v2218 = vlaneseq
    %v2219 = vshrl.u32 %v2218, 7
    %v2220 = vsub.s32 %v2217, %v2219
    %v2221 = vrot.slane %v2207, %v2220
    %v2222 = vcombine.low %v2197, %v2205
    %v2223 = vcombine.high %v2197, %v2205
    %v2225 = vunpack.c.l.s4 1934713408
    %v2226 = vunpack.c.0.s8 %v2225
    %v2227 = vlaneseq
    %v2228 = vshrl.u32 %v2227, 7
    %v2229 = vsub.s32 %v2226, %v2228
    %v2230 = vrot.slane %v2222, %v2229
    %v2232 = vunpack.c.l.s4 1934713408
    %v2233 = vunpack.c.0.s8 %v2232
    %v2234 = vlaneseq
    %v2235 = vshrl.u32 %v2234, 7
    %v2236 = vsub.s32 %v2233, %v2235
    %v2237 = vrot.slane %v2223, %v2236
    %v2238 = vcombine.low %v2214, %v2230
    %v2239 = vcombine.high %v2214, %v2230
    %v2240 = vcombine.low %v2221, %v2237
    %v2241 = vcombine.high %v2221, %v2237
    %2244 = vrot.lane.b32.xlu0 %v2171, 8
    %v2245 = vpop.permute.xlu0 %2244
    %2246 = vrot.lane.b32.xlu0 %v2239, 8
    %v2247 = vpop.permute.xlu0 %2246
    %2252 = vrot.lane.b32.xlu0 %v2172, 16
    %v2253 = vpop.permute.xlu0 %2252
    %2254 = vrot.lane.b32.xlu0 %v2240, 16
    %v2255 = vpop.permute.xlu0 %2254
    %2260 = vrot.lane.b32.xlu0 %v2173, 24
    %v2261 = vpop.permute.xlu0 %2260
    %2262 = vrot.lane.b32.xlu0 %v2241, 24
    %v2263 = vpop.permute.xlu0 %2262
    %v2266 = vsel %vm1136, %v2170, %v2245
    %v2267 = vsel %vm1136, %v2238, %v2247
    %vm2268 = vcmask 130048
    %v2269 = vsel %vm2268, %v2266, %v2253
    %v2270 = vsel %vm2268, %v2267, %v2255
    %vm2271 = vcmask 195584
    %v2272 = vsel %vm2271, %v2269, %v2261
    %v2273 = vsel %vm2271, %v2270, %v2263
    %v2274 = vpack.c.bf16 %v2273, %v2272
    %v2275 = vld [vmem:[%s4] sm:$0xf]
    %v2276 = vld [vmem:[%s4 + $0x4] sm:$0xf]
    %v2277 = vld [vmem:[%s4 + $0x8] sm:$0xf]
    %v2278 = vld [vmem:[%s4 + $0xc] sm:$0xf]
    %v2279 = vld [vmem:[#allocation2] sm:$0x1]
    %v2281 = vlaneseq
    %v2282 = vshrl.u32 %v2281, 7
    %v2283 = vsub.s32 0, %v2282
    %v2284 = vrot.slane %v2279, %v2283
    %v2290 = vunpack.c.l.b16 %v2275
    %v2291 = vunpack.c.l.b16 %v2276
    %v2292 = vunpack.c.l.b16 %v2277
    %v2293 = vunpack.c.l.b16 %v2278
    %v2294 = vpack.c.b16 %v2291, %v2290
    %v2295 = vpack.c.b16 %v2293, %v2292
    %v2299 = vsel %vm107, %v2274, 0
    %2301 = vmatprep.subr.bf16.mxu0 0
    %2302 = vmatpush1.bf16.msra.mxu0 0
    %2303 = vmatprep.subr.bf16.mxu0 0
    %2304 = vmatpush1.bf16.msra.mxu0 0
    %2305 = vmatprep.subr.bf16.mxu0 0
    %2306 = vmatpush1.bf16.msra.mxu0 0
    %2307 = vmatprep.subr.bf16.mxu0 0
    %2308 = vmatpush1.bf16.msra.mxu0 0
    %2309 = vmatprep.subr.bf16.mxu0 0
    %2310 = vmatpush1.bf16.msra.mxu0 0
    %2311 = vmatprep.subr.bf16.mxu0 0
    %2312 = vmatpush1.bf16.msra.mxu0 0
    %2313 = vmatprep.subr.bf16.mxu0 0
    %2314 = vmatpush1.bf16.msra.mxu0 %v2295
    %2315 = vmatprep.subr.bf16.mxu0 0
    %2316 = vmatpush1.bf16.msra.mxu0 %v2294
    %2317 = vmatprep.subr.bf16.mxu0 0
    %2318 = vmatpush2.bf16.msra.mxu0 0
    %2319 = vmatprep.subr.bf16.mxu0 0
    %2320 = vmatpush2.bf16.msra.mxu0 0
    %2321 = vmatprep.subr.bf16.mxu0 0
    %2322 = vmatpush2.bf16.msra.mxu0 0
    %2323 = vmatprep.subr.bf16.mxu0 0
    %2324 = vmatpush2.bf16.msra.mxu0 0
    %2325 = vmatprep.subr.bf16.mxu0 0
    %2326 = vmatpush2.bf16.msra.mxu0 0
    %2327 = vmatprep.subr.bf16.mxu0 0
    %2328 = vmatpush2.bf16.msra.mxu0 0
    %2329 = vmatprep.subr.bf16.mxu0 0
    %2330 = vmatpush2.bf16.msra.mxu0 0
    %2331 = vmatprep.subr.bf16.mxu0 0
    %2332 = vmatpush2.bf16.msra.mxu0 0
    %2333 = vmatprep.mubr.bf16.mxu0 0
    %2334 = vmatmul.mubr.bf16.gmra.mxu0 %v2299
    %v2335 = vpop.f32.mrf.mxu0
    %v2336 = vadd.f32 %v2284, %v2335
    %v2337 = vpop.f32.mrf.mxu0
    %v2338 = vpop.f32.mrf.mxu0
    %v2339 = vadd.f32 %v2284, %v2338
    %v2340 = vpop.f32.mrf.mxu0
    %2341 = vdwg.mxu0
    %v2342 = vadd.f32 %v103, %v2336
    %v2343 = vadd.f32 %v104, %v2339
    %v2344 = vld [vmem:[#allocation5] sm:$0x1]
    %v2345 = vld [vmem:[#allocation7] sm:$0x1]
    %v2346 = vsel %vm107, %v2342, 0.0
    %2347 = vadd.xlane.f32.xlu0 %v2346
    %v2348 = vpop.xlane.xlu0 %2347
    %v2349 = vsel %vm107, %v2343, 0.0
    %2350 = vadd.xlane.f32.xlu0 %v2349
    %v2351 = vpop.xlane.xlu0 %2350
    %v2352 = vmul.f32 %v2348, %v114
    %v2353 = vmul.f32 %v2351, %v114
    %v2354 = vsub.f32 %v2342, %v2352
    %v2355 = vsub.f32 %v2343, %v2353
    %v2356 = vmul.f32 %v2354, %v2354
    %v2357 = vmul.f32 %v2355, %v2355
    %v2358 = vsel %vm107, %v2356, 0.0
    %2359 = vadd.xlane.f32.xlu0 %v2358
    %v2360 = vpop.xlane.xlu0 %2359
    %v2361 = vsel %vm107, %v2357, 0.0
    %2362 = vadd.xlane.f32.xlu0 %v2361
    %v2363 = vpop.xlane.xlu0 %2362
    %v2364 = vmul.f32 %v2360, %v114
    %v2365 = vmul.f32 %v2363, %v114
    %v2366 = vadd.f32 %v2364, 1e-05
    %v2367 = vadd.f32 %v2365, 1e-05
    %v2368 = vrsqrt.pop %v2366
    %v2369 = vrsqrt.pop %v2367
    %v2370 = vmul.f32 %v2354, %v2368
    %v2371 = vmul.f32 %v2355, %v2369
    %v2373 = vlaneseq
    %v2374 = vshrl.u32 %v2373, 7
    %v2375 = vsub.s32 0, %v2374
    %v2376 = vrot.slane %v2344, %v2375
    %v2378 = vmul.f32 %v2370, %v2376
    %v2379 = vmul.f32 %v2371, %v2376
    %v2381 = vlaneseq
    %v2382 = vshrl.u32 %v2381, 7
    %v2383 = vsub.s32 0, %v2382
    %v2384 = vrot.slane %v2345, %v2383
    %v2386 = vadd.f32 %v2378, %v2384
    %v2387 = vadd.f32 %v2379, %v2384
    %v2388 = vpack.c.bf16 %v2387, %v2386
    %v2389 = vld [vmem:[#allocation8] sm:$0xf]
    %v2390 = vld [vmem:[#allocation8 + $0x4] sm:$0xf]
    %v2391 = vld [vmem:[#allocation8 + $0x8] sm:$0xf]
    %v2392 = vld [vmem:[#allocation8 + $0xc] sm:$0xf]
    %v2393 = vld [vmem:[#allocation10] sm:$0x1]
    %v2395 = vlaneseq
    %v2396 = vshrl.u32 %v2395, 7
    %v2397 = vsub.s32 0, %v2396
    %v2398 = vrot.slane %v2393, %v2397
    %v2404 = vunpack.c.l.b16 %v2389
    %v2405 = vunpack.c.l.b16 %v2390
    %v2406 = vunpack.c.l.b16 %v2391
    %v2407 = vunpack.c.l.b16 %v2392
    %v2408 = vpack.c.b16 %v2405, %v2404
    %v2409 = vpack.c.b16 %v2407, %v2406
    %v2413 = vsel %vm107, %v2388, 0
    %2415 = vmatprep.subr.bf16.mxu0 0
    %2416 = vmatpush1.bf16.msra.mxu0 0
    %2417 = vmatprep.subr.bf16.mxu0 0
    %2418 = vmatpush1.bf16.msra.mxu0 0
    %2419 = vmatprep.subr.bf16.mxu0 0
    %2420 = vmatpush1.bf16.msra.mxu0 0
    %2421 = vmatprep.subr.bf16.mxu0 0
    %2422 = vmatpush1.bf16.msra.mxu0 0
    %2423 = vmatprep.subr.bf16.mxu0 0
    %2424 = vmatpush1.bf16.msra.mxu0 0
    %2425 = vmatprep.subr.bf16.mxu0 0
    %2426 = vmatpush1.bf16.msra.mxu0 0
    %2427 = vmatprep.subr.bf16.mxu0 0
    %2428 = vmatpush1.bf16.msra.mxu0 %v2409
    %2429 = vmatprep.subr.bf16.mxu0 0
    %2430 = vmatpush1.bf16.msra.mxu0 %v2408
    %2431 = vmatprep.subr.bf16.mxu0 0
    %2432 = vmatpush2.bf16.msra.mxu0 0
    %2433 = vmatprep.subr.bf16.mxu0 0
    %2434 = vmatpush2.bf16.msra.mxu0 0
    %2435 = vmatprep.subr.bf16.mxu0 0
    %2436 = vmatpush2.bf16.msra.mxu0 0
    %2437 = vmatprep.subr.bf16.mxu0 0
    %2438 = vmatpush2.bf16.msra.mxu0 0
    %2439 = vmatprep.subr.bf16.mxu0 0
    %2440 = vmatpush2.bf16.msra.mxu0 0
    %2441 = vmatprep.subr.bf16.mxu0 0
    %2442 = vmatpush2.bf16.msra.mxu0 0
    %2443 = vmatprep.subr.bf16.mxu0 0
    %2444 = vmatpush2.bf16.msra.mxu0 0
    %2445 = vmatprep.subr.bf16.mxu0 0
    %2446 = vmatpush2.bf16.msra.mxu0 0
    %2447 = vmatprep.mubr.bf16.mxu0 0
    %2448 = vmatmul.mubr.bf16.gmra.mxu0 %v2413
    %v2449 = vpop.f32.mrf.mxu0
    %v2450 = vadd.f32 %v2398, %v2449
    %v2451 = vpop.f32.mrf.mxu0
    %v2452 = vpop.f32.mrf.mxu0
    %v2453 = vadd.f32 %v2398, %v2452
    %v2454 = vpop.f32.mrf.mxu0
    %2455 = vdwg.mxu0
    %v2456 = vmul.f32 %v2450, 0.5
    %v2457 = vmul.f32 %v2453, 0.5
    %v2458 = vmul.f32 %v2450, 0.70710677
    %v2459 = vmul.f32 %v2453, 0.70710677
    %v2460 = verf.f32.pop %v2458
    %v2461 = verf.f32.pop %v2459
    %v2462 = vadd.f32 %v2460, 1.0
    %v2463 = vadd.f32 %v2461, 1.0
    %v2464 = vmul.f32 %v2456, %v2462
    %v2465 = vmul.f32 %v2457, %v2463
    %v2466 = vpack.c.bf16 %v2465, %v2464
    %v2467 = vld [vmem:[%s10] sm:$0xf]
    %v2468 = vld [vmem:[%s10 + $0x4] sm:$0xf]
    %v2469 = vld [vmem:[%s10 + $0x8] sm:$0xf]
    %v2470 = vld [vmem:[%s10 + $0xc] sm:$0xf]
    %v2471 = vld [vmem:[%s10 + $0x10] sm:$0xf]
    %v2472 = vld [vmem:[%s10 + $0x14] sm:$0xf]
    %v2473 = vld [vmem:[%s10 + $0x18] sm:$0xf]
    %v2474 = vld [vmem:[%s10 + $0x1c] sm:$0xf]
    %v2475 = vld [vmem:[%s11] sm:$0x1]
    %v2477 = vlaneseq
    %v2478 = vshrl.u32 %v2477, 7
    %v2479 = vsub.s32 0, %v2478
    %v2480 = vrot.slane %v2475, %v2479
    %v2490 = vunpack.c.l.b16 %v2467
    %v2491 = vunpack.c.l.b16 %v2468
    %v2492 = vunpack.c.l.b16 %v2469
    %v2493 = vunpack.c.l.b16 %v2470
    %v2494 = vunpack.c.l.b16 %v2471
    %v2495 = vunpack.c.l.b16 %v2472
    %v2496 = vunpack.c.l.b16 %v2473
    %v2497 = vunpack.c.l.b16 %v2474
    %v2498 = vpack.c.b16 %v2491, %v2490
    %v2499 = vpack.c.b16 %v2493, %v2492
    %v2500 = vpack.c.b16 %v2495, %v2494
    %v2501 = vpack.c.b16 %v2497, %v2496
    %vm2506 = vcmask 523264
    %v2508 = vsel %vm2506, %v2466, 0
    %2510 = vmatprep.subr.bf16.mxu0 0
    %2511 = vmatpush1.bf16.msra.mxu0 0
    %2512 = vmatprep.subr.bf16.mxu0 0
    %2513 = vmatpush1.bf16.msra.mxu0 0
    %2514 = vmatprep.subr.bf16.mxu0 0
    %2515 = vmatpush1.bf16.msra.mxu0 0
    %2516 = vmatprep.subr.bf16.mxu0 0
    %2517 = vmatpush1.bf16.msra.mxu0 0
    %2518 = vmatprep.subr.bf16.mxu0 0
    %2519 = vmatpush1.bf16.msra.mxu0 %v2501
    %2520 = vmatprep.subr.bf16.mxu0 0
    %2521 = vmatpush1.bf16.msra.mxu0 %v2500
    %2522 = vmatprep.subr.bf16.mxu0 0
    %2523 = vmatpush1.bf16.msra.mxu0 %v2499
    %2524 = vmatprep.subr.bf16.mxu0 0
    %2525 = vmatpush1.bf16.msra.mxu0 %v2498
    %2526 = vmatprep.subr.bf16.mxu0 0
    %2527 = vmatpush2.bf16.msra.mxu0 0
    %2528 = vmatprep.subr.bf16.mxu0 0
    %2529 = vmatpush2.bf16.msra.mxu0 0
    %2530 = vmatprep.subr.bf16.mxu0 0
    %2531 = vmatpush2.bf16.msra.mxu0 0
    %2532 = vmatprep.subr.bf16.mxu0 0
    %2533 = vmatpush2.bf16.msra.mxu0 0
    %2534 = vmatprep.subr.bf16.mxu0 0
    %2535 = vmatpush2.bf16.msra.mxu0 0
    %2536 = vmatprep.subr.bf16.mxu0 0
    %2537 = vmatpush2.bf16.msra.mxu0 0
    %2538 = vmatprep.subr.bf16.mxu0 0
    %2539 = vmatpush2.bf16.msra.mxu0 0
    %2540 = vmatprep.subr.bf16.mxu0 0
    %2541 = vmatpush2.bf16.msra.mxu0 0
    %2542 = vmatprep.mubr.bf16.mxu0 0
    %2543 = vmatmul.mubr.bf16.gmra.mxu0 %v2508
    %v2544 = vpop.f32.mrf.mxu0
    %v2545 = vadd.f32 %v2480, %v2544
    %v2546 = vpop.f32.mrf.mxu0
    %v2547 = vpop.f32.mrf.mxu0
    %v2548 = vadd.f32 %v2480, %v2547
    %v2549 = vpop.f32.mrf.mxu0
    %2550 = vdwg.mxu0
    %v2551 = vadd.f32 %v2342, %v2545
    %v2552 = vadd.f32 %v2343, %v2548
    %2553 = vst.msk [vmem:[#allocation11] sm:$0xff] %vm107, %v2551
    %2554 = vst.msk [vmem:[#allocation11 + $0x8] sm:$0xff] %vm107, %v2552
    // Predicated region
    $region70: #{tpu_custom_call.1} parent=1 // pred_check
      _
    $region71: #{tpu_custom_call.1} parent=1 // pred_check_branch
      %2556 = sbr.rel (0) target = $region73
    $region72: #{tpu_custom_call.1} parent=1 // pred_region
      %s2558 = ssub.s32 256, 256
      %2559 = vsyncadd [#allocation4], %s2558
      %s2560 = sshll.u32 [#allocation11], 4
      %s2561 = int_to_ptr.vmem [resolvable:$true] %s2560
      %2566 = dma.vmem_to_hbm [thread:$0]  %s2561, 256, %s12, [#allocation4], 128, 128, 8
    $region73: #{tpu_custom_call.1} parent=1 // pred_fallthru
      _
    // Predicated region
    $region74: #{tpu_custom_call.1} parent=1 // pred_check
      _
    $region75: #{tpu_custom_call.1} parent=1 // pred_check_branch
      %2568 = sbr.rel (0) target = $region77
    $region76: #{tpu_custom_call.1} parent=1 // pred_region
      %2569 = dma.done [#allocation4], 256
    $region77: #{tpu_custom_call.1} parent=1 // pred_fallthru
      _
    %2570 = vsyncpa [#allocation3], 1
    %2571 = vsyncpa [#allocation6], 1
    %2572 = vsyncpa [#allocation9], 1
    %2573 = vsyncpa [#allocation4], 1

</llo_original>
